<compile_context>
chip_gen: v7x
topology: tpu7x:2x2x1
jax: 0.10.0
libtpu: 0.0.40
codegen_flags: <defaults>
</compile_context>

<pallas_src>
import functools

import jax
import jax.numpy as jnp
from jax import lax
from jax.experimental import pallas as pl
from jax.experimental.pallas import tpu as pltpu

EPS = 1e-5


# ---------------------------------------------------------------------------
# in-kernel helpers / kernels
# ---------------------------------------------------------------------------
def _tile_stats(y2d):
    """Per-channel [sum, sum_sq] of a (rows, C) f32 block -> (2, C)."""
    s = jnp.sum(y2d, axis=0, keepdims=True)
    ss = jnp.sum(y2d * y2d, axis=0, keepdims=True)
    return jnp.concatenate([s, ss], axis=0)


def _conv1_stats_kernel(x_ref, w1_ref, y1_ref, stats_ref, *, mxu_dtype):
    _, TH, W, Cin = x_ref.shape
    P = w1_ref.shape[1]
    xb = x_ref[...].reshape(TH * W, Cin).astype(mxu_dtype)
    y1 = jnp.dot(xb, w1_ref[...], preferred_element_type=jnp.float32)
    y1_ref[...] = y1.reshape(1, TH, W, P).astype(y1_ref.dtype)
    stats_ref[...] = _tile_stats(y1).reshape(1, 1, 2, P)


def _conv2_stats_kernel(y1c_ref, y1t_ref, y1b_ref, sc1_ref, bi1_ref, w2_ref,
                        y2_ref, stats_ref, *, dilation, mxu_dtype):
    """Folded BN1+ReLU -> dilated 3x3 conv (three K=3P MXU matmuls) + BN2 stats."""
    d = dilation
    _, TH, W, P = y1c_ref.shape
    t = pl.program_id(1)
    nt = pl.num_programs(1)
    scale = sc1_ref[...]          # (1, P) f32
    bias = bi1_ref[...]           # (1, P) f32

    def bn_relu(blk):             # (1, rows, W, P) -> (rows, W, P) in mxu_dtype
        rows = blk.shape[1]
        y = blk.reshape(rows * W, P).astype(jnp.float32)
        h = jnp.maximum(y * scale + bias, 0.0)
        return h.astype(mxu_dtype).reshape(rows, W, P)

    hc = bn_relu(y1c_ref[...])                     # interior rows of this tile
    ht = bn_relu(y1t_ref[...])                     # d rows above (clamped fetch)
    hb = bn_relu(y1b_ref[...])                     # d rows below (clamped fetch)
    # Halo rows outside the image are the conv's zero padding.
    ht = jnp.where(t == 0, jnp.zeros_like(ht), ht)
    hb = jnp.where(t == nt - 1, jnp.zeros_like(hb), hb)

    # (TH + 2d, W + 2d, P) zero-padded tile, assembled functionally (no scratch,
    # no cross-iteration ordering assumptions).
    xpad = jnp.pad(jnp.concatenate([ht, hc, hb], axis=0), ((0, 0), (d, d), (0, 0)))

    # 3x3 dilated conv as three chunked (TH*W, 3P) x (3P, P) MXU matmuls (one per
    # ky), accumulated in f32 -- caps the live im2col temporary at 1/3.
    acc = jnp.zeros((TH * W, P), jnp.float32)
    for ky in range(3):
        rows = xpad[ky * d:ky * d + TH]            # (TH, W + 2d, P)
        taps = jnp.concatenate(
            [rows[:, kx * d:kx * d + W, :] for kx in range(3)], axis=-1)
        acc = acc + jnp.dot(taps.reshape(TH * W, 3 * P), w2_ref[ky],
                            preferred_element_type=jnp.float32)

    y2_ref[...] = acc.reshape(1, TH, W, P).astype(y2_ref.dtype)
    stats_ref[...] = _tile_stats(acc).reshape(1, 1, 2, P)


def _conv3_stats_kernel(y2_ref, sc2_ref, bi2_ref, w3_ref, y3_ref, stats_ref,
                        *, mxu_dtype):
    _, TH, W, P = y2_ref.shape
    C4 = w3_ref.shape[1]
    y2 = y2_ref[...].reshape(TH * W, P).astype(jnp.float32)
    h2 = jnp.maximum(y2 * sc2_ref[...] + bi2_ref[...], 0.0).astype(mxu_dtype)
    y3 = jnp.dot(h2, w3_ref[...], preferred_element_type=jnp.float32)
    y3_ref[...] = y3.reshape(1, TH, W, C4)
    stats_ref[...] = _tile_stats(y3).reshape(1, 1, 2, C4)


def _bn3_residual_kernel(y3_ref, x_ref, sc3_ref, bi3_ref, out_ref):
    _, TH, W, C4 = y3_ref.shape
    y3 = y3_ref[...].reshape(TH * W, C4)
    xr = x_ref[...].reshape(TH * W, C4).astype(jnp.float32)   # residual re-read
    out = jnp.maximum(y3 * sc3_ref[...] + bi3_ref[...] + xr, 0.0)
    out_ref[...] = out.reshape(1, TH, W, C4)


# ---------------------------------------------------------------------------
# host-side helpers
# ---------------------------------------------------------------------------
def _vmem_limit_bytes():
    """Generation-aware VMEM limit: ~3/4 of reported capacity, 48 MiB fallback
    (safe on v7x's 64 MiB per TensorCore)."""
    cap = None
    get_info = getattr(pltpu, "get_tpu_info", None)
    if get_info is not None:
        try:
            cap = getattr(get_info(), "vmem_capacity_bytes", None)
        except Exception:   # not on TPU / interpret mode
            cap = None
    if not cap:
        cap = 64 * 1024 * 1024
    return int(min(cap * 3 // 4, 96 * 1024 * 1024))


def _pick_rows_per_tile(H, W, C, d, budget_bytes):
    """Largest TH with d | TH, TH | H and an f32 (TH, W, C) tile under budget
    (budget keeps the worst pass, incl. double-buffering, inside the VMEM limit)."""
    cands = [th for th in range(d, H + 1, d) if H % th == 0]
    if not cands:
        raise ValueError("H must have a divisor that is a multiple of dilation")
    fitting = [th for th in cands if th * W * C * 4 <= budget_bytes]
    return max(fitting) if fitting else min(cands)


def _fold_bn(stats, gamma, beta, count):
    """stats (2, C) = [sum, sum_sq] -> (scale, bias) so bn(x) = x*scale + bias."""
    mean = stats[0] / count
    var = jnp.maximum(stats[1] / count - mean * mean, 0.0)   # biased (training BN)
    inv = lax.rsqrt(var + EPS)
    g = gamma.reshape(-1)
    scale = (g * inv).reshape(1, -1)
    bias = (beta.reshape(-1) - mean * g * inv).reshape(1, -1)
    return scale.astype(jnp.float32), bias.astype(jnp.float32)


def _batch_stats(y):
    return jnp.stack([jnp.sum(y, axis=(0, 1, 2)), jnp.sum(y * y, axis=(0, 1, 2))], 0)


# ---------------------------------------------------------------------------
# forward pass
# ---------------------------------------------------------------------------
def bottleneck_forward_nhwc(x, params, *, dilation=1, rows_per_tile=None,
                            mxu_dtype=jnp.bfloat16):
    """x: (N, H, W, 4*planes) f32 NHWC.  Returns (N, H, W, 4*planes) f32."""
    N, H, W, C4 = x.shape
    P = params["w1"].shape[1]
    if C4 != 4 * P:
        raise ValueError("residual add requires inplanes == 4*planes (downsample=None)")
    d = dilation

    vmem_limit = _vmem_limit_bytes()
    tile_budget = max(1 << 20, vmem_limit // 24)
    TH = (_pick_rows_per_tile(H, W, C4, d, tile_budget)
          if rows_per_tile is None else rows_per_tile)
    if H % TH != 0 or TH % d != 0:
        raise ValueError("rows_per_tile must divide H and be a multiple of dilation")
    nt = H // TH
    thd = TH // d
    grid = (N, nt)
    count = N * H * W
    isz = jnp.dtype(mxu_dtype).itemsize
    f32 = jnp.float32

    # MXU weights; 3x3 taps packed (ky, kx*P + cin, cout) -> (3, 3P, P).
    w1 = params["w1"].astype(mxu_dtype)
    w2p = params["w2"].reshape(3, 3 * P, P).astype(mxu_dtype)
    w3 = params["w3"].astype(mxu_dtype)

    def row_spec(C):
        return pl.BlockSpec((1, TH, W, C), lambda n, t: (n, t, 0, 0))

    def full_spec(shape):
        return pl.BlockSpec(shape, lambda n, t, _r=len(shape): (0,) * _r)

    def stats_spec(C):
        return pl.BlockSpec((1, 1, 2, C), lambda n, t: (n, t, 0, 0))

    def stats_shape(C):
        return jax.ShapeDtypeStruct((N, nt, 2, C), f32)

    cp = pltpu.CompilerParams(dimension_semantics=("parallel", "parallel"),
                              vmem_limit_bytes=vmem_limit)

    # -- pass 1: conv1 (1x1) + per-tile BN1 stats ----------------------------
    y1, st1 = pl.pallas_call(
        functools.partial(_conv1_stats_kernel, mxu_dtype=mxu_dtype),
        grid=grid,
        in_specs=[row_spec(C4), full_spec((C4, P))],
        out_specs=(row_spec(P), stats_spec(P)),
        out_shape=(jax.ShapeDtypeStruct((N, H, W, P), mxu_dtype), stats_shape(P)),
        compiler_params=cp,
        cost_estimate=pl.CostEstimate(
            flops=2 * count * C4 * P, transcendentals=0,
            bytes_accessed=count * (C4 * 4 + P * isz) + C4 * P * isz),
    )(x, w1)
    sc1, bi1 = _fold_bn(jnp.sum(st1, axis=(0, 1)), params["g1"], params["b1"], count)

    # -- pass 2: folded BN1+ReLU -> dilated 3x3 conv + per-tile BN2 stats ----
    y2, st2 = pl.pallas_call(
        functools.partial(_conv2_stats_kernel, dilation=d, mxu_dtype=mxu_dtype),
        grid=grid,
        in_specs=[row_spec(P),
                  # d halo rows above / below the tile (clamped at the image edge;
                  # the kernel zeroes them there, matching the conv's zero padding)
                  pl.BlockSpec((1, d, W, P),
                               lambda n, t: (n, jnp.maximum(t * thd - 1, 0), 0, 0)),
                  pl.BlockSpec((1, d, W, P),
                               lambda n, t: (n, jnp.minimum((t + 1) * thd, H // d - 1), 0, 0)),
                  full_spec((1, P)), full_spec((1, P)),
                  full_spec((3, 3 * P, P))],
        out_specs=(row_spec(P), stats_spec(P)),
        out_shape=(jax.ShapeDtypeStruct((N, H, W, P), mxu_dtype), stats_shape(P)),
        compiler_params=cp,
        cost_estimate=pl.CostEstimate(
            flops=2 * count * 9 * P * P, transcendentals=0,
            bytes_accessed=count * 2 * P * isz + 9 * P * P * isz),
    )(y1, y1, y1, sc1, bi1, w2p)
    sc2, bi2 = _fold_bn(jnp.sum(st2, axis=(0, 1)), params["g2"], params["b2"], count)

    # -- pass 3: folded BN2+ReLU -> conv3 (1x1, 4x) + per-tile BN3 stats -----
    y3, st3 = pl.pallas_call(
        functools.partial(_conv3_stats_kernel, mxu_dtype=mxu_dtype),
        grid=grid,
        in_specs=[row_spec(P), full_spec((1, P)), full_spec((1, P)),
                  full_spec((P, C4))],
        out_specs=(row_spec(C4), stats_spec(C4)),
        out_shape=(jax.ShapeDtypeStruct((N, H, W, C4), f32), stats_shape(C4)),
        compiler_params=cp,
        cost_estimate=pl.CostEstimate(
            flops=2 * count * P * C4, transcendentals=0,
            bytes_accessed=count * (P * isz + C4 * 4) + P * C4 * isz),
    )(y2, sc2, bi2, w3)
    sc3, bi3 = _fold_bn(jnp.sum(st3, axis=(0, 1)), params["g3"], params["b3"], count)

    # -- pass 4: folded BN3 + residual + ReLU --------------------------------
    # TODO(synk): input_output_aliases={0: 0} (y3 -> out) once verified; saves one
    #             (N, H, W, 4P) f32 HBM allocation.
    out = pl.pallas_call(
        _bn3_residual_kernel,
        grid=grid,
        in_specs=[row_spec(C4), row_spec(C4), full_spec((1, C4)), full_spec((1, C4))],
        out_specs=row_spec(C4),
        out_shape=jax.ShapeDtypeStruct((N, H, W, C4), f32),
        compiler_params=cp,
        cost_estimate=pl.CostEstimate(
            flops=3 * count * C4, transcendentals=0,
            bytes_accessed=3 * count * C4 * 4),
    )(y3, x, sc3, bi3)
    return out


def bottleneck_forward(x_nchw, params, *, dilation=1, rows_per_tile=None,
                       mxu_dtype=jnp.bfloat16):
    """NCHW drop-in wrapper (layout parity with the PyTorch module).  Prefer the
    NHWC entry point: each transpose is a full HBM round trip."""
    x = jnp.transpose(x_nchw, (0, 2, 3, 1))
    out = bottleneck_forward_nhwc(x, params, dilation=dilation,
                                  rows_per_tile=rows_per_tile, mxu_dtype=mxu_dtype)
    return jnp.transpose(out, (0, 3, 1, 2))


# ---------------------------------------------------------------------------
# references (verification only)
# ---------------------------------------------------------------------------
def mirror_reference(x, params, dilation=1, mxu_dtype=jnp.bfloat16):
    """Pure-JAX reference mirroring the kernels' mixed precision exactly
    (MXU inputs and y1/y2 HBM storage in `mxu_dtype`, f32 accumulation and BN)."""
    d = dilation
    N, H, W, C4 = x.shape
    P = params["w1"].shape[1]
    count = N * H * W
    w1 = params["w1"].astype(mxu_dtype)
    w2 = params["w2"].astype(mxu_dtype)
    w3 = params["w3"].astype(mxu_dtype)

    y1 = jnp.dot(x.reshape(-1, C4).astype(mxu_dtype), w1,
                 preferred_element_type=jnp.float32).reshape(N, H, W, P)
    sc1, bi1 = _fold_bn(_batch_stats(y1), params["g1"], params["b1"], count)
    y1 = y1.astype(mxu_dtype).astype(jnp.float32)           # HBM storage round trip
    h1 = jnp.maximum(y1 * sc1 + bi1, 0.0).astype(mxu_dtype)

    hp = jnp.pad(h1, ((0, 0), (d, d), (d, d), (0, 0)))
    y2 = jnp.zeros((N, H, W, P), jnp.float32)
    for ky in range(3):
        for kx in range(3):
            patch = hp[:, ky * d:ky * d + H, kx * d:kx * d + W, :]
            y2 = y2 + jnp.dot(patch.reshape(-1, P), w2[ky * 3 + kx],
                              preferred_element_type=jnp.float32).reshape(N, H, W, P)
    sc2, bi2 = _fold_bn(_batch_stats(y2), params["g2"], params["b2"], count)
    y2 = y2.astype(mxu_dtype).astype(jnp.float32)
    h2 = jnp.maximum(y2 * sc2 + bi2, 0.0).astype(mxu_dtype)

    y3 = jnp.dot(h2.reshape(-1, P), w3,
                 preferred_element_type=jnp.float32).reshape(N, H, W, C4)
    sc3, bi3 = _fold_bn(_batch_stats(y3), params["g3"], params["b3"], count)
    return jnp.maximum(y3 * sc3 + bi3 + x, 0.0)


def reference_forward_f32(x, params, dilation=1):
    """Full-f32 module semantics (independent construction via lax.conv)."""
    d = dilation
    P = params["w1"].shape[1]

    def bn(h, g, b):
        mean = jnp.mean(h, axis=(0, 1, 2), keepdims=True)
        var = jnp.mean((h - mean) ** 2, axis=(0, 1, 2), keepdims=True)
        return ((h - mean) / jnp.sqrt(var + EPS) * g.reshape(1, 1, 1, -1)
                + b.reshape(1, 1, 1, -1))

    h = jax.nn.relu(bn(jnp.einsum("nhwc,cd->nhwd", x, params["w1"]),
                       params["g1"], params["b1"]))
    w2_hwio = params["w2"].reshape(3, 3, P, P)
    h = lax.conv_general_dilated(h, w2_hwio, (1, 1), [(d, d), (d, d)],
                                 rhs_dilation=(d, d),
                                 dimension_numbers=("NHWC", "HWIO", "NHWC"))
    h = jax.nn.relu(bn(h, params["g2"], params["b2"]))
    h = bn(jnp.einsum("nhwc,cd->nhwd", h, params["w3"]), params["g3"], params["b3"])
    return jax.nn.relu(h + x)


if __name__ == "__main__":
    # Small config consistent with the module: inplanes = planes * expansion (4).
    inplanes, planes = 16, 4
    N, H, W = 2, 16, 16

    key = jax.random.PRNGKey(0)
    ks = jax.random.split(key, 10)
    params = {
        "w1": 0.1 * jax.random.normal(ks[0], (inplanes, planes), jnp.float32),
        "g1": 1.0 + 0.1 * jax.random.normal(ks[1], (planes,), jnp.float32),
        "b1": 0.1 * jax.random.normal(ks[2], (planes,), jnp.float32),
        "w2": 0.1 * jax.random.normal(ks[3], (9, planes, planes), jnp.float32),
        "g2": 1.0 + 0.1 * jax.random.normal(ks[4], (planes,), jnp.float32),
        "b2": 0.1 * jax.random.normal(ks[5], (planes,), jnp.float32),
        "w3": 0.1 * jax.random.normal(ks[6], (planes, 4 * planes), jnp.float32),
        "g3": 1.0 + 0.1 * jax.random.normal(ks[7], (4 * planes,), jnp.float32),
        "b3": 0.1 * jax.random.normal(ks[8], (4 * planes,), jnp.float32),
    }
    x = jax.random.normal(ks[9], (N, H, W, inplanes), jnp.float32)   # NHWC

    for d in (1, 2):   # dilation=2 exercises the dilated-halo path (DeepLab blocks)
        # f32 MXU path: validates tiling / halos / stats exactly vs lax.conv.
        fwd32 = jax.jit(functools.partial(bottleneck_forward_nhwc, dilation=d,
                                          rows_per_tile=8, mxu_dtype=jnp.float32))
        out32 = jax.block_until_ready(fwd32(x, params))
        assert out32.shape == (N, H, W, inplanes)
        ref32 = reference_forward_f32(x, params, dilation=d)
        if not jnp.allclose(out32, ref32, atol=1e-3, rtol=1e-3):
            raise AssertionError(
                f"d={d}: f32 kernel vs f32 reference, "
                f"max abs err={float(jnp.max(jnp.abs(out32 - ref32)))}")

        # bf16 path (default perf mode) vs a precision-mirroring reference.
        # Loose tolerance: bf16 rounding (~4e-3 relative) gets amplified by the
        # BN rsqrt(var) folds in this tiny-channel toy config, so pure
        # accumulation-order differences show up at the ~1e-2 level.
        fwdbf = jax.jit(functools.partial(bottleneck_forward_nhwc, dilation=d,
                                          rows_per_tile=8, mxu_dtype=jnp.bfloat16))
        outbf = jax.block_until_ready(fwdbf(x, params))
        assert outbf.shape == (N, H, W, inplanes)
        refbf = mirror_reference(x, params, dilation=d, mxu_dtype=jnp.bfloat16)
        if not jnp.allclose(outbf, refbf, atol=1e-1, rtol=1e-1):
            raise AssertionError(
                f"d={d}: bf16 kernel vs mixed-precision reference, "
                f"max abs err={float(jnp.max(jnp.abs(outbf - refbf)))}")

    # NCHW wrapper parity (same computation, transposes only).
    x_nchw = jnp.transpose(x, (0, 3, 1, 2))
    out_nchw = jax.block_until_ready(
        jax.jit(functools.partial(bottleneck_forward, dilation=1, rows_per_tile=8,
                                  mxu_dtype=jnp.float32))(x_nchw, params))
    assert out_nchw.shape == (N, inplanes, H, W)

    print("KERNEL_OK")
</pallas_src>

<mosaic_0001>
module attributes {stable_mosaic.version = 11 : i64} {
  func.func @_conv1_stats_kernel(%arg0: i32, %arg1: i32, %arg2: memref<1x8x16x16xf32, #tpu.memory_space<vmem>>, %arg3: memref<16x4xf32, #tpu.memory_space<vmem>>, %arg4: memref<1x8x16x4xf32, #tpu.memory_space<vmem>>, %arg5: memref<1x1x2x4xf32, #tpu.memory_space<vmem>>) attributes {dimension_semantics = [#tpu.dimension_semantics<parallel>, #tpu.dimension_semantics<parallel>], iteration_bounds = array<i64: 2, 2>, scalar_prefetch = 0 : i64, scratch_operands = 0 : i64, tpu.core_type = #tpu.core_type<tc>, window_params = [{transform_indices = @transform_0, window_bounds = array<i64: 1, 8, 16, 16>}, {pipeline_mode = #tpu.pipeline_mode<synchronous>, transform_indices = @transform_1, window_bounds = array<i64: 16, 4>}, {transform_indices = @transform_2, window_bounds = array<i64: 1, 8, 16, 4>}, {transform_indices = @transform_3, window_bounds = array<i64: 1, 1, 2, 4>}]} {
    %c0 = arith.constant 0 : index
    %c0_0 = arith.constant 0 : index
    %c0_1 = arith.constant 0 : index
    %c0_2 = arith.constant 0 : index
    %0 = vector.load %arg2[%c0, %c0_0, %c0_1, %c0_2] : memref<1x8x16x16xf32, #tpu.memory_space<vmem>>, vector<1x8x16x16xf32>
    %1 = vector.shape_cast %0 : vector<1x8x16x16xf32> to vector<128x16xf32>
    %c0_3 = arith.constant 0 : index
    %c0_4 = arith.constant 0 : index
    %2 = vector.load %arg3[%c0_3, %c0_4] : memref<16x4xf32, #tpu.memory_space<vmem>>, vector<16x4xf32>
    %cst = arith.constant dense<0.000000e+00> : vector<128x4xf32>
    %3 = tpu.matmul %1, %2, %cst {dimension_numbers = #tpu.dot_dimension_numbers<[1], [0], [0], [1], [0, 0, 1, 1], [], []>} : vector<128x16xf32>, vector<16x4xf32>, vector<128x4xf32> -> vector<128x4xf32>
    %4 = vector.shape_cast %3 : vector<128x4xf32> to vector<1x8x16x4xf32>
    %c0_5 = arith.constant 0 : index
    %c0_6 = arith.constant 0 : index
    %c0_7 = arith.constant 0 : index
    %c0_8 = arith.constant 0 : index
    %5 = vector.load %arg4[%c0_5, %c0_6, %c0_7, %c0_8] : memref<1x8x16x4xf32, #tpu.memory_space<vmem>>, vector<1x8x16x4xf32>
    tpu.vector_store %arg4[%c0_5, %c0_6, %c0_7, %c0_8], %4 {strides = array<i32>} : memref<1x8x16x4xf32, #tpu.memory_space<vmem>>, vector<1x8x16x4xf32>,
    %cst_9 = arith.constant dense<0.000000e+00> : vector<4xf32>
    %6 = vector.multi_reduction <add>, %3, %cst_9 [0] : vector<128x4xf32> to vector<4xf32>
    %7 = vector.shape_cast %6 : vector<4xf32> to vector<1x4xf32>
    %8 = arith.mulf %3, %3 : vector<128x4xf32>
    %cst_10 = arith.constant dense<0.000000e+00> : vector<4xf32>
    %9 = vector.multi_reduction <add>, %8, %cst_10 [0] : vector<128x4xf32> to vector<4xf32>
    %10 = vector.shape_cast %9 : vector<4xf32> to vector<1x4xf32>
    %11 = tpu.concatenate %7, %10 in 0 : vector<1x4xf32>, vector<1x4xf32> -> vector<2x4xf32>
    %12 = vector.shape_cast %11 : vector<2x4xf32> to vector<1x1x2x4xf32>
    %c0_11 = arith.constant 0 : index
    %c0_12 = arith.constant 0 : index
    %c0_13 = arith.constant 0 : index
    %c0_14 = arith.constant 0 : index
    %13 = vector.load %arg5[%c0_11, %c0_12, %c0_13, %c0_14] : memref<1x1x2x4xf32, #tpu.memory_space<vmem>>, vector<1x1x2x4xf32>
    tpu.vector_store %arg5[%c0_11, %c0_12, %c0_13, %c0_14], %12 {strides = array<i32>} : memref<1x1x2x4xf32, #tpu.memory_space<vmem>>, vector<1x1x2x4xf32>,
    return
  }
  func.func @transform_0(%arg0: i32, %arg1: i32) -> (i32, i32, i32, i32) {
    %c0_i32 = arith.constant 0 : i32
    %c0_i32_0 = arith.constant 0 : i32
    %c0_i32_1 = arith.constant 0 : i32
    return %arg0, %arg1, %c0_i32, %c0_i32_0 : i32, i32, i32, i32
  }
  func.func @transform_1(%arg0: i32, %arg1: i32) -> (i32, i32) {
    %c0_i32 = arith.constant 0 : i32
    %c0_i32_0 = arith.constant 0 : i32
    %c0_i32_1 = arith.constant 0 : i32
    return %c0_i32, %c0_i32_0 : i32, i32
  }
  func.func @transform_2(%arg0: i32, %arg1: i32) -> (i32, i32, i32, i32) {
    %c0_i32 = arith.constant 0 : i32
    %c0_i32_0 = arith.constant 0 : i32
    %c0_i32_1 = arith.constant 0 : i32
    return %arg0, %arg1, %c0_i32, %c0_i32_0 : i32, i32, i32, i32
  }
  func.func @transform_3(%arg0: i32, %arg1: i32) -> (i32, i32, i32, i32) {
    %c0_i32 = arith.constant 0 : i32
    %c0_i32_0 = arith.constant 0 : i32
    %c0_i32_1 = arith.constant 0 : i32
    return %arg0, %arg1, %c0_i32, %c0_i32_0 : i32, i32, i32, i32
  }
}

module attributes {stable_mosaic.version = 11 : i64} {
  func.func @_conv3_stats_kernel(%arg0: i32, %arg1: i32, %arg2: memref<1x8x16x4xf32, #tpu.memory_space<vmem>>, %arg3: memref<1x4xf32, #tpu.memory_space<vmem>>, %arg4: memref<1x4xf32, #tpu.memory_space<vmem>>, %arg5: memref<4x16xf32, #tpu.memory_space<vmem>>, %arg6: memref<1x8x16x16xf32, #tpu.memory_space<vmem>>, %arg7: memref<1x1x2x16xf32, #tpu.memory_space<vmem>>) attributes {dimension_semantics = [#tpu.dimension_semantics<parallel>, #tpu.dimension_semantics<parallel>], iteration_bounds = array<i64: 2, 2>, scalar_prefetch = 0 : i64, scratch_operands = 0 : i64, tpu.core_type = #tpu.core_type<tc>, window_params = [{transform_indices = @transform_0, window_bounds = array<i64: 1, 8, 16, 4>}, {pipeline_mode = #tpu.pipeline_mode<synchronous>, transform_indices = @transform_1, window_bounds = array<i64: 1, 4>}, {pipeline_mode = #tpu.pipeline_mode<synchronous>, transform_indices = @transform_2, window_bounds = array<i64: 1, 4>}, {pipeline_mode = #tpu.pipeline_mode<synchronous>, transform_indices = @transform_3, window_bounds = array<i64: 4, 16>}, {transform_indices = @transform_4, window_bounds = array<i64: 1, 8, 16, 16>}, {transform_indices = @transform_5, window_bounds = array<i64: 1, 1, 2, 16>}]} {
    %c0 = arith.constant 0 : index
    %c0_0 = arith.constant 0 : index
    %c0_1 = arith.constant 0 : index
    %c0_2 = arith.constant 0 : index
    %0 = vector.load %arg2[%c0, %c0_0, %c0_1, %c0_2] : memref<1x8x16x4xf32, #tpu.memory_space<vmem>>, vector<1x8x16x4xf32>
    %1 = vector.shape_cast %0 : vector<1x8x16x4xf32> to vector<128x4xf32>
    %c0_3 = arith.constant 0 : index
    %c0_4 = arith.constant 0 : index
    %2 = vector.load %arg3[%c0_3, %c0_4] : memref<1x4xf32, #tpu.memory_space<vmem>>, vector<1x4xf32>
    %3 = vector.broadcast %2 : vector<1x4xf32> to vector<128x4xf32>
    %4 = arith.mulf %1, %3 : vector<128x4xf32>
    %c0_5 = arith.constant 0 : index
    %c0_6 = arith.constant 0 : index
    %5 = vector.load %arg4[%c0_5, %c0_6] : memref<1x4xf32, #tpu.memory_space<vmem>>, vector<1x4xf32>
    %6 = vector.broadcast %5 : vector<1x4xf32> to vector<128x4xf32>
    %7 = arith.addf %4, %6 : vector<128x4xf32>
    %cst = arith.constant 0.000000e+00 : f32
    %8 = vector.broadcast %cst : f32 to vector<128x4xf32>
    %9 = arith.maximumf %7, %8 : vector<128x4xf32>
    %c0_7 = arith.constant 0 : index
    %c0_8 = arith.constant 0 : index
    %10 = vector.load %arg5[%c0_7, %c0_8] : memref<4x16xf32, #tpu.memory_space<vmem>>, vector<4x16xf32>
    %cst_9 = arith.constant dense<0.000000e+00> : vector<128x16xf32>
    %11 = tpu.matmul %9, %10, %cst_9 {dimension_numbers = #tpu.dot_dimension_numbers<[1], [0], [0], [1], [0, 0, 1, 1], [], []>} : vector<128x4xf32>, vector<4x16xf32>, vector<128x16xf32> -> vector<128x16xf32>
    %12 = vector.shape_cast %11 : vector<128x16xf32> to vector<1x8x16x16xf32>
    %c0_10 = arith.constant 0 : index
    %c0_11 = arith.constant 0 : index
    %c0_12 = arith.constant 0 : index
    %c0_13 = arith.constant 0 : index
    %13 = vector.load %arg6[%c0_10, %c0_11, %c0_12, %c0_13] : memref<1x8x16x16xf32, #tpu.memory_space<vmem>>, vector<1x8x16x16xf32>
    tpu.vector_store %arg6[%c0_10, %c0_11, %c0_12, %c0_13], %12 {strides = array<i32>} : memref<1x8x16x16xf32, #tpu.memory_space<vmem>>, vector<1x8x16x16xf32>,
    %cst_14 = arith.constant dense<0.000000e+00> : vector<16xf32>
    %14 = vector.multi_reduction <add>, %11, %cst_14 [0] : vector<128x16xf32> to vector<16xf32>
    %15 = vector.shape_cast %14 : vector<16xf32> to vector<1x16xf32>
    %16 = arith.mulf %11, %11 : vector<128x16xf32>
    %cst_15 = arith.constant dense<0.000000e+00> : vector<16xf32>
    %17 = vector.multi_reduction <add>, %16, %cst_15 [0] : vector<128x16xf32> to vector<16xf32>
    %18 = vector.shape_cast %17 : vector<16xf32> to vector<1x16xf32>
    %19 = tpu.concatenate %15, %18 in 0 : vector<1x16xf32>, vector<1x16xf32> -> vector<2x16xf32>
    %20 = vector.shape_cast %19 : vector<2x16xf32> to vector<1x1x2x16xf32>
    %c0_16 = arith.constant 0 : index
    %c0_17 = arith.constant 0 : index
    %c0_18 = arith.constant 0 : index
    %c0_19 = arith.constant 0 : index
    %21 = vector.load %arg7[%c0_16, %c0_17, %c0_18, %c0_19] : memref<1x1x2x16xf32, #tpu.memory_space<vmem>>, vector<1x1x2x16xf32>
    tpu.vector_store %arg7[%c0_16, %c0_17, %c0_18, %c0_19], %20 {strides = array<i32>} : memref<1x1x2x16xf32, #tpu.memory_space<vmem>>, vector<1x1x2x16xf32>,
    return
  }
  func.func @transform_0(%arg0: i32, %arg1: i32) -> (i32, i32, i32, i32) {
    %c0_i32 = arith.constant 0 : i32
    %c0_i32_0 = arith.constant 0 : i32
    %c0_i32_1 = arith.constant 0 : i32
    return %arg0, %arg1, %c0_i32, %c0_i32_0 : i32, i32, i32, i32
  }
  func.func @transform_1(%arg0: i32, %arg1: i32) -> (i32, i32) {
    %c0_i32 = arith.constant 0 : i32
    %c0_i32_0 = arith.constant 0 : i32
    %c0_i32_1 = arith.constant 0 : i32
    return %c0_i32, %c0_i32_0 : i32, i32
  }
  func.func @transform_2(%arg0: i32, %arg1: i32) -> (i32, i32) {
    %c0_i32 = arith.constant 0 : i32
    %c0_i32_0 = arith.constant 0 : i32
    %c0_i32_1 = arith.constant 0 : i32
    return %c0_i32, %c0_i32_0 : i32, i32
  }
  func.func @transform_3(%arg0: i32, %arg1: i32) -> (i32, i32) {
    %c0_i32 = arith.constant 0 : i32
    %c0_i32_0 = arith.constant 0 : i32
    %c0_i32_1 = arith.constant 0 : i32
    return %c0_i32, %c0_i32_0 : i32, i32
  }
  func.func @transform_4(%arg0: i32, %arg1: i32) -> (i32, i32, i32, i32) {
    %c0_i32 = arith.constant 0 : i32
    %c0_i32_0 = arith.constant 0 : i32
    %c0_i32_1 = arith.constant 0 : i32
    return %arg0, %arg1, %c0_i32, %c0_i32_0 : i32, i32, i32, i32
  }
  func.func @transform_5(%arg0: i32, %arg1: i32) -> (i32, i32, i32, i32) {
    %c0_i32 = arith.constant 0 : i32
    %c0_i32_0 = arith.constant 0 : i32
    %c0_i32_1 = arith.constant 0 : i32
    return %arg0, %arg1, %c0_i32, %c0_i32_0 : i32, i32, i32, i32
  }
}

module attributes {stable_mosaic.version = 11 : i64} {
  func.func @_conv2_stats_kernel(%arg0: i32, %arg1: i32, %arg2: memref<1x8x16x4xf32, #tpu.memory_space<vmem>>, %arg3: memref<1x1x16x4xf32, #tpu.memory_space<vmem>>, %arg4: memref<1x1x16x4xf32, #tpu.memory_space<vmem>>, %arg5: memref<1x4xf32, #tpu.memory_space<vmem>>, %arg6: memref<1x4xf32, #tpu.memory_space<vmem>>, %arg7: memref<3x12x4xf32, #tpu.memory_space<vmem>>, %arg8: memref<1x8x16x4xf32, #tpu.memory_space<vmem>>, %arg9: memref<1x1x2x4xf32, #tpu.memory_space<vmem>>) attributes {dimension_semantics = [#tpu.dimension_semantics<parallel>, #tpu.dimension_semantics<parallel>], iteration_bounds = array<i64: 2, 2>, scalar_prefetch = 0 : i64, scratch_operands = 0 : i64, tpu.core_type = #tpu.core_type<tc>, window_params = [{transform_indices = @transform_0, window_bounds = array<i64: 1, 8, 16, 4>}, {transform_indices = @transform_1, window_bounds = array<i64: 1, 1, 16, 4>}, {transform_indices = @transform_2, window_bounds = array<i64: 1, 1, 16, 4>}, {pipeline_mode = #tpu.pipeline_mode<synchronous>, transform_indices = @transform_3, window_bounds = array<i64: 1, 4>}, {pipeline_mode = #tpu.pipeline_mode<synchronous>, transform_indices = @transform_4, window_bounds = array<i64: 1, 4>}, {pipeline_mode = #tpu.pipeline_mode<synchronous>, transform_indices = @transform_5, window_bounds = array<i64: 3, 12, 4>}, {transform_indices = @transform_6, window_bounds = array<i64: 1, 8, 16, 4>}, {transform_indices = @transform_7, window_bounds = array<i64: 1, 1, 2, 4>}]} {
    %c0 = arith.constant 0 : index
    %c0_0 = arith.constant 0 : index
    %0 = vector.load %arg5[%c0, %c0_0] : memref<1x4xf32, #tpu.memory_space<vmem>>, vector<1x4xf32>
    %c0_1 = arith.constant 0 : index
    %c0_2 = arith.constant 0 : index
    %1 = vector.load %arg6[%c0_1, %c0_2] : memref<1x4xf32, #tpu.memory_space<vmem>>, vector<1x4xf32>
    %c0_3 = arith.constant 0 : index
    %c0_4 = arith.constant 0 : index
    %c0_5 = arith.constant 0 : index
    %c0_6 = arith.constant 0 : index
    %2 = vector.load %arg2[%c0_3, %c0_4, %c0_5, %c0_6] : memref<1x8x16x4xf32, #tpu.memory_space<vmem>>, vector<1x8x16x4xf32>
    %3 = vector.shape_cast %2 : vector<1x8x16x4xf32> to vector<128x4xf32>
    %4 = vector.broadcast %0 : vector<1x4xf32> to vector<128x4xf32>
    %5 = arith.mulf %3, %4 : vector<128x4xf32>
    %6 = vector.broadcast %1 : vector<1x4xf32> to vector<128x4xf32>
    %7 = arith.addf %5, %6 : vector<128x4xf32>
    %cst = arith.constant 0.000000e+00 : f32
    %8 = vector.broadcast %cst : f32 to vector<128x4xf32>
    %9 = arith.maximumf %7, %8 : vector<128x4xf32>
    %10 = vector.shape_cast %9 : vector<128x4xf32> to vector<8x16x4xf32>
    %c0_7 = arith.constant 0 : index
    %c0_8 = arith.constant 0 : index
    %c0_9 = arith.constant 0 : index
    %c0_10 = arith.constant 0 : index
    %11 = vector.load %arg3[%c0_7, %c0_8, %c0_9, %c0_10] : memref<1x1x16x4xf32, #tpu.memory_space<vmem>>, vector<1x1x16x4xf32>
    %12 = vector.shape_cast %11 : vector<1x1x16x4xf32> to vector<16x4xf32>
    %13 = vector.broadcast %0 : vector<1x4xf32> to vector<16x4xf32>
    %14 = arith.mulf %12, %13 : vector<16x4xf32>
    %15 = vector.broadcast %1 : vector<1x4xf32> to vector<16x4xf32>
    %16 = arith.addf %14, %15 : vector<16x4xf32>
    %cst_11 = arith.constant 0.000000e+00 : f32
    %17 = vector.broadcast %cst_11 : f32 to vector<16x4xf32>
    %18 = arith.maximumf %16, %17 : vector<16x4xf32>
    %19 = vector.shape_cast %18 : vector<16x4xf32> to vector<1x16x4xf32>
    %c0_12 = arith.constant 0 : index
    %c0_13 = arith.constant 0 : index
    %c0_14 = arith.constant 0 : index
    %c0_15 = arith.constant 0 : index
    %20 = vector.load %arg4[%c0_12, %c0_13, %c0_14, %c0_15] : memref<1x1x16x4xf32, #tpu.memory_space<vmem>>, vector<1x1x16x4xf32>
    %21 = vector.shape_cast %20 : vector<1x1x16x4xf32> to vector<16x4xf32>
    %22 = vector.broadcast %0 : vector<1x4xf32> to vector<16x4xf32>
    %23 = arith.mulf %21, %22 : vector<16x4xf32>
    %24 = vector.broadcast %1 : vector<1x4xf32> to vector<16x4xf32>
    %25 = arith.addf %23, %24 : vector<16x4xf32>
    %cst_16 = arith.constant 0.000000e+00 : f32
    %26 = vector.broadcast %cst_16 : f32 to vector<16x4xf32>
    %27 = arith.maximumf %25, %26 : vector<16x4xf32>
    %28 = vector.shape_cast %27 : vector<16x4xf32> to vector<1x16x4xf32>
    %c0_i32 = arith.constant 0 : i32
    %29 = arith.cmpi eq, %arg1, %c0_i32 : i32
    %cst_17 = arith.constant 0.000000e+00 : f32
    %30 = vector.broadcast %cst_17 : f32 to vector<1x16x4xf32>
    %31 = arith.select %29, %30, %19 : vector<1x16x4xf32>
    %c1_i32 = arith.constant 1 : i32
    %32 = arith.cmpi eq, %arg1, %c1_i32 : i32
    %cst_18 = arith.constant 0.000000e+00 : f32
    %33 = vector.broadcast %cst_18 : f32 to vector<1x16x4xf32>
    %34 = arith.select %32, %33, %28 : vector<1x16x4xf32>
    %35 = tpu.concatenate %31, %10, %34 in 0 : vector<1x16x4xf32>, vector<8x16x4xf32>, vector<1x16x4xf32> -> vector<10x16x4xf32>
    %c0_i32_19 = arith.constant 0 : i32
    %36 = arith.sitofp %c0_i32_19 : i32 to f32
    %37 = vector.broadcast %36 : f32 to vector<10x1x4xf32>
    %38 = tpu.concatenate %37, %35 in 1 : vector<10x1x4xf32>, vector<10x16x4xf32> -> vector<10x17x4xf32>
    %39 = vector.broadcast %36 : f32 to vector<10x1x4xf32>
    %40 = tpu.concatenate %38, %39 in 1 : vector<10x17x4xf32>, vector<10x1x4xf32> -> vector<10x18x4xf32>
    %cst_20 = arith.constant 0.000000e+00 : f32
    %41 = vector.broadcast %cst_20 : f32 to vector<128x4xf32>
    %42 = vector.extract_strided_slice %40 {offsets = [0, 0, 0], sizes = [8, 18, 4], strides = [1, 1, 1]} : vector<10x18x4xf32> to vector<8x18x4xf32>
    %43 = vector.extract_strided_slice %42 {offsets = [0, 0, 0], sizes = [8, 16, 4], strides = [1, 1, 1]} : vector<8x18x4xf32> to vector<8x16x4xf32>
    %44 = vector.extract_strided_slice %42 {offsets = [0, 1, 0], sizes = [8, 16, 4], strides = [1, 1, 1]} : vector<8x18x4xf32> to vector<8x16x4xf32>
    %45 = vector.extract_strided_slice %42 {offsets = [0, 2, 0], sizes = [8, 16, 4], strides = [1, 1, 1]} : vector<8x18x4xf32> to vector<8x16x4xf32>
    %46 = tpu.concatenate %43, %44, %45 in 2 : vector<8x16x4xf32>, vector<8x16x4xf32>, vector<8x16x4xf32> -> vector<8x16x12xf32>
    %47 = vector.shape_cast %46 : vector<8x16x12xf32> to vector<128x12xf32>
    %c0_21 = arith.constant 0 : index
    %c0_22 = arith.constant 0 : index
    %c0_23 = arith.constant 0 : index
    %48 = vector.load %arg7[%c0_21, %c0_22, %c0_23] : memref<3x12x4xf32, #tpu.memory_space<vmem>>, vector<1x12x4xf32>
    %49 = vector.shape_cast %48 : vector<1x12x4xf32> to vector<12x4xf32>
    %cst_24 = arith.constant dense<0.000000e+00> : vector<128x4xf32>
    %50 = tpu.matmul %47, %49, %cst_24 {dimension_numbers = #tpu.dot_dimension_numbers<[1], [0], [0], [1], [0, 0, 1, 1], [], []>} : vector<128x12xf32>, vector<12x4xf32>, vector<128x4xf32> -> vector<128x4xf32>
    %51 = arith.addf %41, %50 : vector<128x4xf32>
    %52 = vector.extract_strided_slice %40 {offsets = [1, 0, 0], sizes = [8, 18, 4], strides = [1, 1, 1]} : vector<10x18x4xf32> to vector<8x18x4xf32>
    %53 = vector.extract_strided_slice %52 {offsets = [0, 0, 0], sizes = [8, 16, 4], strides = [1, 1, 1]} : vector<8x18x4xf32> to vector<8x16x4xf32>
    %54 = vector.extract_strided_slice %52 {offsets = [0, 1, 0], sizes = [8, 16, 4], strides = [1, 1, 1]} : vector<8x18x4xf32> to vector<8x16x4xf32>
    %55 = vector.extract_strided_slice %52 {offsets = [0, 2, 0], sizes = [8, 16, 4], strides = [1, 1, 1]} : vector<8x18x4xf32> to vector<8x16x4xf32>
    %56 = tpu.concatenate %53, %54, %55 in 2 : vector<8x16x4xf32>, vector<8x16x4xf32>, vector<8x16x4xf32> -> vector<8x16x12xf32>
    %57 = vector.shape_cast %56 : vector<8x16x12xf32> to vector<128x12xf32>
    %c1 = arith.constant 1 : index
    %c0_25 = arith.constant 0 : index
    %c0_26 = arith.constant 0 : index
    %58 = vector.load %arg7[%c1, %c0_25, %c0_26] : memref<3x12x4xf32, #tpu.memory_space<vmem>>, vector<1x12x4xf32>
    %59 = vector.shape_cast %58 : vector<1x12x4xf32> to vector<12x4xf32>
    %cst_27 = arith.constant dense<0.000000e+00> : vector<128x4xf32>
    %60 = tpu.matmul %57, %59, %cst_27 {dimension_numbers = #tpu.dot_dimension_numbers<[1], [0], [0], [1], [0, 0, 1, 1], [], []>} : vector<128x12xf32>, vector<12x4xf32>, vector<128x4xf32> -> vector<128x4xf32>
    %61 = arith.addf %51, %60 : vector<128x4xf32>
    %62 = vector.extract_strided_slice %40 {offsets = [2, 0, 0], sizes = [8, 18, 4], strides = [1, 1, 1]} : vector<10x18x4xf32> to vector<8x18x4xf32>
    %63 = vector.extract_strided_slice %62 {offsets = [0, 0, 0], sizes = [8, 16, 4], strides = [1, 1, 1]} : vector<8x18x4xf32> to vector<8x16x4xf32>
    %64 = vector.extract_strided_slice %62 {offsets = [0, 1, 0], sizes = [8, 16, 4], strides = [1, 1, 1]} : vector<8x18x4xf32> to vector<8x16x4xf32>
    %65 = vector.extract_strided_slice %62 {offsets = [0, 2, 0], sizes = [8, 16, 4], strides = [1, 1, 1]} : vector<8x18x4xf32> to vector<8x16x4xf32>
    %66 = tpu.concatenate %63, %64, %65 in 2 : vector<8x16x4xf32>, vector<8x16x4xf32>, vector<8x16x4xf32> -> vector<8x16x12xf32>
    %67 = vector.shape_cast %66 : vector<8x16x12xf32> to vector<128x12xf32>
    %c2 = arith.constant 2 : index
    %c0_28 = arith.constant 0 : index
    %c0_29 = arith.constant 0 : index
    %68 = vector.load %arg7[%c2, %c0_28, %c0_29] : memref<3x12x4xf32, #tpu.memory_space<vmem>>, vector<1x12x4xf32>
    %69 = vector.shape_cast %68 : vector<1x12x4xf32> to vector<12x4xf32>
    %cst_30 = arith.constant dense<0.000000e+00> : vector<128x4xf32>
    %70 = tpu.matmul %67, %69, %cst_30 {dimension_numbers = #tpu.dot_dimension_numbers<[1], [0], [0], [1], [0, 0, 1, 1], [], []>} : vector<128x12xf32>, vector<12x4xf32>, vector<128x4xf32> -> vector<128x4xf32>
    %71 = arith.addf %61, %70 : vector<128x4xf32>
    %72 = vector.shape_cast %71 : vector<128x4xf32> to vector<1x8x16x4xf32>
    %c0_31 = arith.constant 0 : index
    %c0_32 = arith.constant 0 : index
    %c0_33 = arith.constant 0 : index
    %c0_34 = arith.constant 0 : index
    %73 = vector.load %arg8[%c0_31, %c0_32, %c0_33, %c0_34] : memref<1x8x16x4xf32, #tpu.memory_space<vmem>>, vector<1x8x16x4xf32>
    tpu.vector_store %arg8[%c0_31, %c0_32, %c0_33, %c0_34], %72 {strides = array<i32>} : memref<1x8x16x4xf32, #tpu.memory_space<vmem>>, vector<1x8x16x4xf32>,
    %cst_35 = arith.constant dense<0.000000e+00> : vector<4xf32>
    %74 = vector.multi_reduction <add>, %71, %cst_35 [0] : vector<128x4xf32> to vector<4xf32>
    %75 = vector.shape_cast %74 : vector<4xf32> to vector<1x4xf32>
    %76 = arith.mulf %71, %71 : vector<128x4xf32>
    %cst_36 = arith.constant dense<0.000000e+00> : vector<4xf32>
    %77 = vector.multi_reduction <add>, %76, %cst_36 [0] : vector<128x4xf32> to vector<4xf32>
    %78 = vector.shape_cast %77 : vector<4xf32> to vector<1x4xf32>
    %79 = tpu.concatenate %75, %78 in 0 : vector<1x4xf32>, vector<1x4xf32> -> vector<2x4xf32>
    %80 = vector.shape_cast %79 : vector<2x4xf32> to vector<1x1x2x4xf32>
    %c0_37 = arith.constant 0 : index
    %c0_38 = arith.constant 0 : index
    %c0_39 = arith.constant 0 : index
    %c0_40 = arith.constant 0 : index
    %81 = vector.load %arg9[%c0_37, %c0_38, %c0_39, %c0_40] : memref<1x1x2x4xf32, #tpu.memory_space<vmem>>, vector<1x1x2x4xf32>
    tpu.vector_store %arg9[%c0_37, %c0_38, %c0_39, %c0_40], %80 {strides = array<i32>} : memref<1x1x2x4xf32, #tpu.memory_space<vmem>>, vector<1x1x2x4xf32>,
    return
  }
  func.func @transform_0(%arg0: i32, %arg1: i32) -> (i32, i32, i32, i32) {
    %c0_i32 = arith.constant 0 : i32
    %c0_i32_0 = arith.constant 0 : i32
    %c0_i32_1 = arith.constant 0 : i32
    return %arg0, %arg1, %c0_i32, %c0_i32_0 : i32, i32, i32, i32
  }
  func.func @transform_1(%arg0: i32, %arg1: i32) -> (i32, i32, i32, i32) {
    %c8_i32 = arith.constant 8 : i32
    %0 = arith.muli %arg1, %c8_i32 : i32
    %c1_i32 = arith.constant 1 : i32
    %1 = arith.subi %0, %c1_i32 : i32
    %c0_i32 = arith.constant 0 : i32
    %2 = arith.maxsi %1, %c0_i32 : i32
    %c0_i32_0 = arith.constant 0 : i32
    %c0_i32_1 = arith.constant 0 : i32
    %c0_i32_2 = arith.constant 0 : i32
    return %arg0, %2, %c0_i32_0, %c0_i32_1 : i32, i32, i32, i32
  }
  func.func @transform_2(%arg0: i32, %arg1: i32) -> (i32, i32, i32, i32) {
    %c1_i32 = arith.constant 1 : i32
    %0 = arith.addi %arg1, %c1_i32 : i32
    %c8_i32 = arith.constant 8 : i32
    %1 = arith.muli %0, %c8_i32 : i32
    %c15_i32 = arith.constant 15 : i32
    %2 = arith.minsi %1, %c15_i32 : i32
    %c0_i32 = arith.constant 0 : i32
    %c0_i32_0 = arith.constant 0 : i32
    %c0_i32_1 = arith.constant 0 : i32
    return %arg0, %2, %c0_i32, %c0_i32_0 : i32, i32, i32, i32
  }
  func.func @transform_3(%arg0: i32, %arg1: i32) -> (i32, i32) {
    %c0_i32 = arith.constant 0 : i32
    %c0_i32_0 = arith.constant 0 : i32
    %c0_i32_1 = arith.constant 0 : i32
    return %c0_i32, %c0_i32_0 : i32, i32
  }
  func.func @transform_4(%arg0: i32, %arg1: i32) -> (i32, i32) {
    %c0_i32 = arith.constant 0 : i32
    %c0_i32_0 = arith.constant 0 : i32
    %c0_i32_1 = arith.constant 0 : i32
    return %c0_i32, %c0_i32_0 : i32, i32
  }
  func.func @transform_5(%arg0: i32, %arg1: i32) -> (i32, i32, i32) {
    %c0_i32 = arith.constant 0 : i32
    %c0_i32_0 = arith.constant 0 : i32
    %c0_i32_1 = arith.constant 0 : i32
    %c0_i32_2 = arith.constant 0 : i32
    return %c0_i32, %c0_i32_0, %c0_i32_1 : i32, i32, i32
  }
  func.func @transform_6(%arg0: i32, %arg1: i32) -> (i32, i32, i32, i32) {
    %c0_i32 = arith.constant 0 : i32
    %c0_i32_0 = arith.constant 0 : i32
    %c0_i32_1 = arith.constant 0 : i32
    return %arg0, %arg1, %c0_i32, %c0_i32_0 : i32, i32, i32, i32
  }
  func.func @transform_7(%arg0: i32, %arg1: i32) -> (i32, i32, i32, i32) {
    %c0_i32 = arith.constant 0 : i32
    %c0_i32_0 = arith.constant 0 : i32
    %c0_i32_1 = arith.constant 0 : i32
    return %arg0, %arg1, %c0_i32, %c0_i32_0 : i32, i32, i32, i32
  }
}

module attributes {stable_mosaic.version = 11 : i64} {
  func.func @_bn3_residual_kernel(%arg0: i32, %arg1: i32, %arg2: memref<1x8x16x16xf32, #tpu.memory_space<vmem>>, %arg3: memref<1x8x16x16xf32, #tpu.memory_space<vmem>>, %arg4: memref<1x16xf32, #tpu.memory_space<vmem>>, %arg5: memref<1x16xf32, #tpu.memory_space<vmem>>, %arg6: memref<1x8x16x16xf32, #tpu.memory_space<vmem>>) attributes {dimension_semantics = [#tpu.dimension_semantics<parallel>, #tpu.dimension_semantics<parallel>], iteration_bounds = array<i64: 2, 2>, scalar_prefetch = 0 : i64, scratch_operands = 0 : i64, tpu.core_type = #tpu.core_type<tc>, window_params = [{transform_indices = @transform_0, window_bounds = array<i64: 1, 8, 16, 16>}, {transform_indices = @transform_1, window_bounds = array<i64: 1, 8, 16, 16>}, {pipeline_mode = #tpu.pipeline_mode<synchronous>, transform_indices = @transform_2, window_bounds = array<i64: 1, 16>}, {pipeline_mode = #tpu.pipeline_mode<synchronous>, transform_indices = @transform_3, window_bounds = array<i64: 1, 16>}, {transform_indices = @transform_4, window_bounds = array<i64: 1, 8, 16, 16>}]} {
    %c0 = arith.constant 0 : index
    %c0_0 = arith.constant 0 : index
    %c0_1 = arith.constant 0 : index
    %c0_2 = arith.constant 0 : index
    %0 = vector.load %arg2[%c0, %c0_0, %c0_1, %c0_2] : memref<1x8x16x16xf32, #tpu.memory_space<vmem>>, vector<1x8x16x16xf32>
    %1 = vector.shape_cast %0 : vector<1x8x16x16xf32> to vector<128x16xf32>
    %c0_3 = arith.constant 0 : index
    %c0_4 = arith.constant 0 : index
    %c0_5 = arith.constant 0 : index
    %c0_6 = arith.constant 0 : index
    %2 = vector.load %arg3[%c0_3, %c0_4, %c0_5, %c0_6] : memref<1x8x16x16xf32, #tpu.memory_space<vmem>>, vector<1x8x16x16xf32>
    %3 = vector.shape_cast %2 : vector<1x8x16x16xf32> to vector<128x16xf32>
    %c0_7 = arith.constant 0 : index
    %c0_8 = arith.constant 0 : index
    %4 = vector.load %arg4[%c0_7, %c0_8] : memref<1x16xf32, #tpu.memory_space<vmem>>, vector<1x16xf32>
    %5 = vector.broadcast %4 : vector<1x16xf32> to vector<128x16xf32>
    %6 = arith.mulf %1, %5 : vector<128x16xf32>
    %c0_9 = arith.constant 0 : index
    %c0_10 = arith.constant 0 : index
    %7 = vector.load %arg5[%c0_9, %c0_10] : memref<1x16xf32, #tpu.memory_space<vmem>>, vector<1x16xf32>
    %8 = vector.broadcast %7 : vector<1x16xf32> to vector<128x16xf32>
    %9 = arith.addf %6, %8 : vector<128x16xf32>
    %10 = arith.addf %9, %3 : vector<128x16xf32>
    %cst = arith.constant 0.000000e+00 : f32
    %11 = vector.broadcast %cst : f32 to vector<128x16xf32>
    %12 = arith.maximumf %10, %11 : vector<128x16xf32>
    %13 = vector.shape_cast %12 : vector<128x16xf32> to vector<1x8x16x16xf32>
    %c0_11 = arith.constant 0 : index
    %c0_12 = arith.constant 0 : index
    %c0_13 = arith.constant 0 : index
    %c0_14 = arith.constant 0 : index
    %14 = vector.load %arg6[%c0_11, %c0_12, %c0_13, %c0_14] : memref<1x8x16x16xf32, #tpu.memory_space<vmem>>, vector<1x8x16x16xf32>
    tpu.vector_store %arg6[%c0_11, %c0_12, %c0_13, %c0_14], %13 {strides = array<i32>} : memref<1x8x16x16xf32, #tpu.memory_space<vmem>>, vector<1x8x16x16xf32>,
    return
  }
  func.func @transform_0(%arg0: i32, %arg1: i32) -> (i32, i32, i32, i32) {
    %c0_i32 = arith.constant 0 : i32
    %c0_i32_0 = arith.constant 0 : i32
    %c0_i32_1 = arith.constant 0 : i32
    return %arg0, %arg1, %c0_i32, %c0_i32_0 : i32, i32, i32, i32
  }
  func.func @transform_1(%arg0: i32, %arg1: i32) -> (i32, i32, i32, i32) {
    %c0_i32 = arith.constant 0 : i32
    %c0_i32_0 = arith.constant 0 : i32
    %c0_i32_1 = arith.constant 0 : i32
    return %arg0, %arg1, %c0_i32, %c0_i32_0 : i32, i32, i32, i32
  }
  func.func @transform_2(%arg0: i32, %arg1: i32) -> (i32, i32) {
    %c0_i32 = arith.constant 0 : i32
    %c0_i32_0 = arith.constant 0 : i32
    %c0_i32_1 = arith.constant 0 : i32
    return %c0_i32, %c0_i32_0 : i32, i32
  }
  func.func @transform_3(%arg0: i32, %arg1: i32) -> (i32, i32) {
    %c0_i32 = arith.constant 0 : i32
    %c0_i32_0 = arith.constant 0 : i32
    %c0_i32_1 = arith.constant 0 : i32
    return %c0_i32, %c0_i32_0 : i32, i32
  }
  func.func @transform_4(%arg0: i32, %arg1: i32) -> (i32, i32, i32, i32) {
    %c0_i32 = arith.constant 0 : i32
    %c0_i32_0 = arith.constant 0 : i32
    %c0_i32_1 = arith.constant 0 : i32
    return %arg0, %arg1, %c0_i32, %c0_i32_0 : i32, i32, i32, i32
  }
}

</mosaic_0001>

<llo_original>
// kernel: bottleneck_forward_nhwc.4
$region0: #{bottleneck_forward_nhwc.4}
  #allocation0 [shape = 'u32[]', space=smem, size = 0x4, offset = 0x4, fixed_abs, tag = 'smem constant byte address 0x4 - core index']
  #allocation1 [shape = 'u32[144,128]{1,0:T(1,128)}', space=vmem, size = 0x12000, scoped, tag = 'internal scratch']
  %s0 = inlined_call_operand.hbm [shape: f32[2,16,16,16], index: 0, kind: input, shape index: {}]
  %s1 = inlined_call_operand.vmem [shape: f32[16,4], index: 1, kind: input, shape index: {}]
  %s2 = inlined_call_operand.vmem [shape: f32[2,16,16,4], index: 2, kind: output, shape index: {0}]
  %s3 = inlined_call_operand.vmem [shape: f32[2,2,2,4], index: 3, kind: output, shape index: {1}]
  %4 = xla_tuple %s2, %s3
  %s5 = sld [smem:[#allocation0]]
  $region53: #{bottleneck_forward_nhwc.4} parent=0
    _
  %s7 = ssub.s32 1, %s5
  %s8 = scalar_select 0, %s7, %s5
  $region1: #{bottleneck_forward_nhwc.4} parent=0
    #allocation2 [shape = 'u8[131072]{0}', space=vmem, size = 0x20000, scoped, tag = 'input window, operand 0']
    #allocation3 [shape = 's32[2]{0}', space=sflag, size = 0x8, scoped, tag = 'scoped memory for bottleneck_forward_nhwc.4']
    %9 = vsyncpa [#allocation3], 0
    %s10 = scalar_lea.sflag [#allocation3], 1
    %11 = vsyncpa %s10, 0
    loop: start=0, step=1, limit=6
    $region2: #{bottleneck_forward_nhwc.4} parent=1 // loop_pre_header
      _
    $region3: #{bottleneck_forward_nhwc.4} parent=1 // loop_header
      %s13 = sphi 0, %s17
      %p14 = scmp.ge.s32.totalorder %s13, 6
      %s20 = sphi 0, %s32
      %s21 = sphi 0, %s28
      %s22 = sphi 0, %s20
      %s23 = sphi 0, %s21
      %s24 = sphi 0, %s22
      %s25 = sphi 0, %s23
      %s37 = sphi 0, %s39
      %s40 = sphi 0, %s37
      %s41 = sphi 0, %s40
      %s57 = sphi 0, %s41
      %s61 = sphi 0, %s61
      %s63 = sphi 0, %s61
      %s64 = sphi 0, %s63
      %s78 = sphi 0, %s64
      %s86 = sphi 0, %s88
      %s89 = sphi 0, %s86
      %s90 = sphi 0, %s89
      %s106 = sphi 0, %s90
      %s114 = sphi 0, %s116
      %s117 = sphi 0, %s114
      %s118 = sphi 0, %s117
      %s134 = sphi 0, %s118
    $region4: #{bottleneck_forward_nhwc.4} parent=1 // loop_header_branch
      %16 = sbr.rel (%p14) target = $region8
    $region5: #{bottleneck_forward_nhwc.4} parent=1 // loop_body
      %s18 = ssub.s32 %s13, 1
      %s19 = ssub.s32 %s13, 2
      %s26 = sadd.s32 1, %s21
      %p27 = scmp.ge.s32.totalorder %s26, 2
      %s28 = scalar_select %p27, 0, %s26
      %s29 = sadd.s32 1, %s20
      %s30 = scalar_select %p27, %s29, %s20
      %p31 = scmp.ge.s32.totalorder %s30, 2
      %s32 = scalar_select %p31, 0, %s30
      %s33 = ssub.s32 %s20, %s32
      %s34 = ssub.s32 %s21, %s28
      %s35 = sor.u32 %s33, %s34
      %p36 = scmp.eq.s32.totalorder %s35, 0
      %s38 = sadd.s32 %s37, 1
      %s39 = scalar_select %p36, %s37, %s38
      %p42 = pneg %p36
      %p43 = scmp.eq.s32.totalorder %s13, 3
      %p44 = por %p42, %p43
      %p45 = scmp.ne.s32.totalorder %s37, %s40
      %p46 = scmp.eq.s32.totalorder %s13, 0
      %p47 = por %p45, %p46
      %p48 = scmp.ne.s32.totalorder %s37, %s40
      %p49 = scmp.eq.s32.totalorder %s18, 3
      %p50 = por %p48, %p49
      %p51 = scmp.ne.s32.totalorder %s40, %s41
      %p52 = scmp.eq.s32.totalorder %s18, 0
      %p53 = por %p51, %p52
      %p54 = scmp.ne.s32.totalorder %s40, %s41
      %p55 = scmp.eq.s32.totalorder %s19, 3
      %p56 = por %p54, %p55
      %p58 = scmp.ne.s32.totalorder %s41, %s57
      %p59 = scmp.eq.s32.totalorder %s19, 0
      %p60 = por %p58, %p59
      %s62 = sadd.s32 %s61, 1
      %p65 = scmp.eq.s32.totalorder %s13, 3
      %p66 = scmp.ne.s32.totalorder %s61, %s63
      %p67 = scmp.eq.s32.totalorder %s13, 0
      %p68 = por %p66, %p67
      %p69 = scmp.ne.s32.totalorder %s61, %s63
      %p70 = scmp.eq.s32.totalorder %s18, 3
      %p71 = por %p69, %p70
      %p72 = scmp.ne.s32.totalorder %s63, %s64
      %p73 = scmp.eq.s32.totalorder %s18, 0
      %p74 = por %p72, %p73
      %p75 = scmp.ne.s32.totalorder %s63, %s64
      %p76 = scmp.eq.s32.totalorder %s19, 3
      %p77 = por %p75, %p76
      %p79 = scmp.ne.s32.totalorder %s64, %s78
      %p80 = scmp.eq.s32.totalorder %s19, 0
      %p81 = por %p79, %p80
      %s82 = ssub.s32 %s20, %s32
      %s83 = ssub.s32 %s21, %s28
      %s84 = sor.u32 %s82, %s83
      %p85 = scmp.eq.s32.totalorder %s84, 0
      %s87 = sadd.s32 %s86, 1
      %s88 = scalar_select %p85, %s86, %s87
      %p91 = pneg %p85
      %p92 = scmp.eq.s32.totalorder %s13, 3
      %p93 = por %p91, %p92
      %p94 = scmp.ne.s32.totalorder %s86, %s89
      %p95 = scmp.eq.s32.totalorder %s13, 0
      %p96 = por %p94, %p95
      %p97 = scmp.ne.s32.totalorder %s86, %s89
      %p98 = scmp.eq.s32.totalorder %s18, 3
      %p99 = por %p97, %p98
      %p100 = scmp.ne.s32.totalorder %s89, %s90
      %p101 = scmp.eq.s32.totalorder %s18, 0
      %p102 = por %p100, %p101
      %p103 = scmp.ne.s32.totalorder %s89, %s90
      %p104 = scmp.eq.s32.totalorder %s19, 3
      %p105 = por %p103, %p104
      %p107 = scmp.ne.s32.totalorder %s90, %s106
      %p108 = scmp.eq.s32.totalorder %s19, 0
      %p109 = por %p107, %p108
      %s110 = ssub.s32 %s20, %s32
      %s111 = ssub.s32 %s21, %s28
      %s112 = sor.u32 %s110, %s111
      %p113 = scmp.eq.s32.totalorder %s112, 0
      %s115 = sadd.s32 %s114, 1
      %s116 = scalar_select %p113, %s114, %s115
      %p119 = pneg %p113
      %p120 = scmp.eq.s32.totalorder %s13, 3
      %p121 = por %p119, %p120
      %p122 = scmp.ne.s32.totalorder %s114, %s117
      %p123 = scmp.eq.s32.totalorder %s13, 0
      %p124 = por %p122, %p123
      %p125 = scmp.ne.s32.totalorder %s114, %s117
      %p126 = scmp.eq.s32.totalorder %s18, 3
      %p127 = por %p125, %p126
      %p128 = scmp.ne.s32.totalorder %s117, %s118
      %p129 = scmp.eq.s32.totalorder %s18, 0
      %p130 = por %p128, %p129
      %p131 = scmp.ne.s32.totalorder %s117, %s118
      %p132 = scmp.eq.s32.totalorder %s19, 3
      %p133 = por %p131, %p132
      %p135 = scmp.ne.s32.totalorder %s118, %s134
      %p136 = scmp.eq.s32.totalorder %s19, 0
      %p137 = por %p135, %p136
      %p138 = scmp.le.s32.totalorder 1, %s13
      %p139 = scmp.lt.s32.totalorder %s13, 5
      %p140 = pnand %p138, %p139
      %p141 = pneg %p140
      // Predicated region
      $region9: #{bottleneck_forward_nhwc.4} parent=5 // pred_check
        _
      $region10: #{bottleneck_forward_nhwc.4} parent=5 // pred_check_branch
        %143 = sbr.rel (%p140) target = $region12
      $region11: #{bottleneck_forward_nhwc.4} parent=5 // pred_region
        %s144 = ssub.s32 %s13, 1
        // Predicated region
        $region13: #{bottleneck_forward_nhwc.4} parent=11 // pred_check
          %p145 = pneg %p74
        $region14: #{bottleneck_forward_nhwc.4} parent=11 // pred_check_branch
          %147 = sbr.rel (%p145) target = $region16
        $region15: #{bottleneck_forward_nhwc.4} parent=11 // pred_region
          _
        $region16: #{bottleneck_forward_nhwc.4} parent=11 // pred_fallthru
          _
      $region12: #{bottleneck_forward_nhwc.4} parent=5 // pred_fallthru
        _
      %p148 = scmp.lt.s32.totalorder %s13, 4
      // Predicated region
      $region17: #{bottleneck_forward_nhwc.4} parent=5 // pred_check
        %p149 = pneg %p148
      $region18: #{bottleneck_forward_nhwc.4} parent=5 // pred_check_branch
        %151 = sbr.rel (%p149) target = $region20
      $region19: #{bottleneck_forward_nhwc.4} parent=5 // pred_region
        // Predicated region
        $region21: #{bottleneck_forward_nhwc.4} parent=19 // pred_check
          %p152 = pneg %p47
        $region22: #{bottleneck_forward_nhwc.4} parent=19 // pred_check_branch
          %154 = sbr.rel (%p152) target = $region24
        $region23: #{bottleneck_forward_nhwc.4} parent=19 // pred_region
          %s155 = sand.u32 %s37, 1
          %s156 = scalar_lea.sflag [#allocation3], %s155
          %s157 = sand.u32 %s37, 1
          %s158 = smul.addr %s157, 128
          %s159 = scalar_lea.vmem [#allocation2], %s158
          %s160 = smul.u32 8, %s21
          %s162 = ssub.s32 2048, 2048
          %163 = vsyncadd %s156, %s162
          %s164 = smul.addr %s160, 2
          %s165 = smul.addr %s20, 32
          %s166 = sadd.s32 %s164, %s165
          %s167 = smul.addr %s166, 128
          %s168 = scalar_lea.hbm %s0, %s167
          %s169 = sshll.u32 %s159, 4
          %s170 = int_to_ptr.vmem [resolvable:$true] %s169
          %175 = dma.hbm_to_vmem [thread:$0]  %s168, 2048, %s170, %s156, 128, 128, 8
        $region24: #{bottleneck_forward_nhwc.4} parent=19 // pred_fallthru
          _
      $region20: #{bottleneck_forward_nhwc.4} parent=5 // pred_fallthru
        _
      %p176 = scmp.le.s32.totalorder 1, %s13
      %p177 = scmp.lt.s32.totalorder %s13, 5
      %p178 = pnand %p176, %p177
      %p179 = pneg %p178
      // Predicated region
      $region25: #{bottleneck_forward_nhwc.4} parent=5 // pred_check
        _
      $region26: #{bottleneck_forward_nhwc.4} parent=5 // pred_check_branch
        %181 = sbr.rel (%p178) target = $region28
      $region27: #{bottleneck_forward_nhwc.4} parent=5 // pred_region
        %s182 = ssub.s32 %s13, 1
        %s183 = sand.u32 %s40, 1
        %s184 = scalar_lea.sflag [#allocation3], %s183
        %s185 = sand.u32 %s40, 1
        %s186 = smul.addr %s185, 128
        %s187 = scalar_lea.vmem [#allocation2], %s186
        // Predicated region
        $region29: #{bottleneck_forward_nhwc.4} parent=27 // pred_check
          %p188 = pneg %p53
        $region30: #{bottleneck_forward_nhwc.4} parent=27 // pred_check_branch
          %190 = sbr.rel (%p188) target = $region32
        $region31: #{bottleneck_forward_nhwc.4} parent=27 // pred_region
          %191 = dma.done %s184, 2048
        $region32: #{bottleneck_forward_nhwc.4} parent=27 // pred_fallthru
          _
        %s192 = sand.u32 %s40, 1
        %s193 = scalar_lea.sflag [#allocation3], %s192
        %s194 = sand.u32 %s40, 1
        %s195 = smul.addr %s194, 128
        %s196 = scalar_lea.vmem [#allocation2], %s195
        %p197 = pneg %p53
        %p198 = pneg %p50
        %p199 = pneg %p74
        %p200 = pneg %p71
        %p201 = pneg %p102
        %p202 = pneg %p99
        %s203 = smul.u32 8, %s23
        %p204 = scmp.lt.s32.totalorder %s22, 1
        %s205 = scalar_select %p204, %s22, 1
        %p206 = scmp.lt.s32.totalorder %s203, 15
        %s207 = scalar_select %p206, %s203, 15
        %s208 = smul.addr %s207, 2
        %s209 = smul.addr %s205, 32
        %s210 = sadd.s32 %s208, %s209
        %s211 = smul.addr %s210, 8
        %s212 = scalar_lea.vmem %s2, %s211
        %p213 = pneg %p130
        %p214 = pneg %p127
        %p215 = scmp.lt.s32.totalorder %s22, 1
        %s216 = scalar_select %p215, %s22, 1
        %p217 = scmp.lt.s32.totalorder %s23, 1
        %s218 = scalar_select %p217, %s23, 1
        %s219 = smul.addr %s216, 2
        %s220 = sadd.s32 %s218, %s219
        %s221 = smul.addr %s220, 2
        %s222 = scalar_lea.vmem %s3, %s221
        %s223 = smul.u32 8, %s23
        %s224 = smul.u32 8, %s23
        %p225 = scmp.lt.s32.totalorder %s22, 1
        %s226 = scalar_select %p225, %s22, 1
        %p227 = scmp.lt.s32.totalorder %s224, 15
        %s228 = scalar_select %p227, %s224, 15
        %s229 = smul.addr %s228, 2
        %s230 = smul.addr %s226, 32
        %s231 = sadd.s32 %s229, %s230
        %s232 = smul.addr %s231, 8
        %s233 = scalar_lea.vmem %s2, %s232
        %s234 = smul.u32 8, %s23
        %p235 = scmp.lt.s32.totalorder %s22, 1
        %s236 = scalar_select %p235, %s22, 1
        %p237 = scmp.lt.s32.totalorder %s23, 1
        %s238 = scalar_select %p237, %s23, 1
        %s239 = smul.addr %s236, 2
        %s240 = sadd.s32 %s238, %s239
        %s241 = smul.addr %s240, 2
        %s242 = scalar_lea.vmem %s3, %s241
        %v243 = vld [vmem:[%s187] sm:$0xff]
        %v244 = vld [vmem:[%s187 + $0x8] sm:$0xff]
        %v245 = vld [vmem:[%s187 + $0x10] sm:$0xff]
        %v246 = vld [vmem:[%s187 + $0x18] sm:$0xff]
        %v247 = vld [vmem:[%s187 + $0x20] sm:$0xff]
        %v248 = vld [vmem:[%s187 + $0x28] sm:$0xff]
        %v249 = vld [vmem:[%s187 + $0x30] sm:$0xff]
        %v250 = vld [vmem:[%s187 + $0x38] sm:$0xff]
        %v251 = vld [vmem:[%s187 + $0x40] sm:$0xff]
        %v252 = vld [vmem:[%s187 + $0x48] sm:$0xff]
        %v253 = vld [vmem:[%s187 + $0x50] sm:$0xff]
        %v254 = vld [vmem:[%s187 + $0x58] sm:$0xff]
        %v255 = vld [vmem:[%s187 + $0x60] sm:$0xff]
        %v256 = vld [vmem:[%s187 + $0x68] sm:$0xff]
        %v257 = vld [vmem:[%s187 + $0x70] sm:$0xff]
        %v258 = vld [vmem:[%s187 + $0x78] sm:$0xff]
        %v259 = vld [vmem:[%s1] sm:$0xff]
        %v260 = vld [vmem:[%s1 + $0x8] sm:$0xff]
        %vm261 = vcmask 130048
        %v263 = vsel %vm261, %v243, 0
        %v266 = vsel %vm261, %v244, 0
        %v269 = vsel %vm261, %v245, 0
        %v272 = vsel %vm261, %v246, 0
        %v275 = vsel %vm261, %v247, 0
        %v278 = vsel %vm261, %v248, 0
        %v281 = vsel %vm261, %v249, 0
        %v284 = vsel %vm261, %v250, 0
        %v287 = vsel %vm261, %v251, 0
        %v290 = vsel %vm261, %v252, 0
        %v293 = vsel %vm261, %v253, 0
        %v296 = vsel %vm261, %v254, 0
        %v299 = vsel %vm261, %v255, 0
        %v302 = vsel %vm261, %v256, 0
        %v305 = vsel %vm261, %v257, 0
        %v308 = vsel %vm261, %v258, 0
        %310 = vmatprep.subr.mxu0 0.0
        %311 = vmatpush1.msra.mxu0 %v259
        %312 = vmatprep.subr.mxu0 0.0
        %313 = vmatpush1.msra.mxu0 %v260
        %314 = vmatprep.subr.mxu0 0.0
        %315 = vmatpush1.msra.mxu0 0.0
        %316 = vmatprep.subr.mxu0 0.0
        %317 = vmatpush1.msra.mxu0 0.0
        %318 = vmatprep.subr.mxu0 0.0
        %319 = vmatpush1.msra.mxu0 0.0
        %320 = vmatprep.subr.mxu0 0.0
        %321 = vmatpush1.msra.mxu0 0.0
        %322 = vmatprep.subr.mxu0 0.0
        %323 = vmatpush1.msra.mxu0 0.0
        %324 = vmatprep.subr.mxu0 0.0
        %325 = vmatpush1.msra.mxu0 0.0
        %326 = vmatprep.subr.mxu0 0.0
        %327 = vmatpush1.msra.mxu0 0.0
        %328 = vmatprep.subr.mxu0 0.0
        %329 = vmatpush1.msra.mxu0 0.0
        %330 = vmatprep.subr.mxu0 0.0
        %331 = vmatpush1.msra.mxu0 0.0
        %332 = vmatprep.subr.mxu0 0.0
        %333 = vmatpush1.msra.mxu0 0.0
        %334 = vmatprep.subr.mxu0 0.0
        %335 = vmatpush1.msra.mxu0 0.0
        %336 = vmatprep.subr.mxu0 0.0
        %337 = vmatpush1.msra.mxu0 0.0
        %338 = vmatprep.subr.mxu0 0.0
        %339 = vmatpush1.msra.mxu0 0.0
        %340 = vmatprep.subr.mxu0 0.0
        %341 = vmatpush1.msra.mxu0 0.0
        %342 = vmatprep.subr.mxu0 0.0
        %343 = vmatpush1.msra.mxu0 0.0
        %344 = vmatprep.subr.mxu0 0.0
        %345 = vmatpush1.msra.mxu0 0.0
        %346 = vmatprep.subr.mxu0 0.0
        %347 = vmatpush1.msra.mxu0 0.0
        %348 = vmatprep.subr.mxu0 0.0
        %349 = vmatpush1.msra.mxu0 0.0
        %350 = vmatprep.subr.mxu0 0.0
        %351 = vmatpush1.msra.mxu0 0.0
        %352 = vmatprep.subr.mxu0 0.0
        %353 = vmatpush1.msra.mxu0 0.0
        %354 = vmatprep.subr.mxu0 0.0
        %355 = vmatpush1.msra.mxu0 0.0
        %356 = vmatprep.subr.mxu0 0.0
        %357 = vmatpush1.msra.mxu0 0.0
        %358 = vmatprep.subr.mxu0 0.0
        %359 = vmatpush1.msra.mxu0 0.0
        %360 = vmatprep.subr.mxu0 0.0
        %361 = vmatpush1.msra.mxu0 0.0
        %362 = vmatprep.subr.mxu0 0.0
        %363 = vmatpush1.msra.mxu0 0.0
        %364 = vmatprep.subr.mxu0 0.0
        %365 = vmatpush1.msra.mxu0 0.0
        %366 = vmatprep.subr.mxu0 0.0
        %367 = vmatpush1.msra.mxu0 0.0
        %368 = vmatprep.subr.mxu0 0.0
        %369 = vmatpush1.msra.mxu0 0.0
        %370 = vmatprep.subr.mxu0 0.0
        %371 = vmatpush1.msra.mxu0 0.0
        %372 = vmatprep.subr.mxu0 0.0
        %373 = vmatpush1.msra.mxu0 0.0
        %374 = vmatprep.mubr.f32.mxu0 0.0
        %375 = vmatmul.mubr.f32.gmra.mrb[0].mxu0 %v263
        %v376 = vpop.f32.mrb[0].mxu0
        %v377 = vadd.f32 0.0, %v376
        %v378 = vpop.f32.mrb[0].mxu0
        %379 = vmatprep.mubr.f32.mxu0 0.0
        %380 = vmatmul.mubr.f32.gmra.mrb[0].mxu0 %v266
        %v381 = vpop.f32.mrb[0].mxu0
        %v382 = vadd.f32 0.0, %v381
        %v383 = vpop.f32.mrb[0].mxu0
        %384 = vmatprep.mubr.f32.mxu0 0.0
        %385 = vmatmul.mubr.f32.gmra.mrb[0].mxu0 %v269
        %v386 = vpop.f32.mrb[0].mxu0
        %v387 = vadd.f32 0.0, %v386
        %v388 = vpop.f32.mrb[0].mxu0
        %389 = vmatprep.mubr.f32.mxu0 0.0
        %390 = vmatmul.mubr.f32.gmra.mrb[0].mxu0 %v272
        %v391 = vpop.f32.mrb[0].mxu0
        %v392 = vadd.f32 0.0, %v391
        %v393 = vpop.f32.mrb[0].mxu0
        %394 = vmatprep.mubr.f32.mxu0 0.0
        %395 = vmatmul.mubr.f32.gmra.mrb[0].mxu0 %v275
        %v396 = vpop.f32.mrb[0].mxu0
        %v397 = vadd.f32 0.0, %v396
        %v398 = vpop.f32.mrb[0].mxu0
        %399 = vmatprep.mubr.f32.mxu0 0.0
        %400 = vmatmul.mubr.f32.gmra.mrb[0].mxu0 %v278
        %v401 = vpop.f32.mrb[0].mxu0
        %v402 = vadd.f32 0.0, %v401
        %v403 = vpop.f32.mrb[0].mxu0
        %404 = vmatprep.mubr.f32.mxu0 0.0
        %405 = vmatmul.mubr.f32.gmra.mrb[0].mxu0 %v281
        %v406 = vpop.f32.mrb[0].mxu0
        %v407 = vadd.f32 0.0, %v406
        %v408 = vpop.f32.mrb[0].mxu0
        %409 = vmatprep.mubr.f32.mxu0 0.0
        %410 = vmatmul.mubr.f32.gmra.mrb[0].mxu0 %v284
        %v411 = vpop.f32.mrb[0].mxu0
        %v412 = vadd.f32 0.0, %v411
        %v413 = vpop.f32.mrb[0].mxu0
        %414 = vmatprep.mubr.f32.mxu0 0.0
        %415 = vmatmul.mubr.f32.gmra.mrb[0].mxu0 %v287
        %v416 = vpop.f32.mrb[0].mxu0
        %v417 = vadd.f32 0.0, %v416
        %v418 = vpop.f32.mrb[0].mxu0
        %419 = vmatprep.mubr.f32.mxu0 0.0
        %420 = vmatmul.mubr.f32.gmra.mrb[0].mxu0 %v290
        %v421 = vpop.f32.mrb[0].mxu0
        %v422 = vadd.f32 0.0, %v421
        %v423 = vpop.f32.mrb[0].mxu0
        %424 = vmatprep.mubr.f32.mxu0 0.0
        %425 = vmatmul.mubr.f32.gmra.mrb[0].mxu0 %v293
        %v426 = vpop.f32.mrb[0].mxu0
        %v427 = vadd.f32 0.0, %v426
        %v428 = vpop.f32.mrb[0].mxu0
        %429 = vmatprep.mubr.f32.mxu0 0.0
        %430 = vmatmul.mubr.f32.gmra.mrb[0].mxu0 %v296
        %v431 = vpop.f32.mrb[0].mxu0
        %v432 = vadd.f32 0.0, %v431
        %v433 = vpop.f32.mrb[0].mxu0
        %434 = vmatprep.mubr.f32.mxu0 0.0
        %435 = vmatmul.mubr.f32.gmra.mrb[0].mxu0 %v299
        %v436 = vpop.f32.mrb[0].mxu0
        %v437 = vadd.f32 0.0, %v436
        %v438 = vpop.f32.mrb[0].mxu0
        %439 = vmatprep.mubr.f32.mxu0 0.0
        %440 = vmatmul.mubr.f32.gmra.mrb[0].mxu0 %v302
        %v441 = vpop.f32.mrb[0].mxu0
        %v442 = vadd.f32 0.0, %v441
        %v443 = vpop.f32.mrb[0].mxu0
        %444 = vmatprep.mubr.f32.mxu0 0.0
        %445 = vmatmul.mubr.f32.gmra.mrb[0].mxu0 %v305
        %v446 = vpop.f32.mrb[0].mxu0
        %v447 = vadd.f32 0.0, %v446
        %v448 = vpop.f32.mrb[0].mxu0
        %449 = vmatprep.mubr.f32.mxu0 0.0
        %450 = vmatmul.mubr.f32.gmra.mrb[0].mxu0 %v308
        %v451 = vpop.f32.mrb[0].mxu0
        %v452 = vadd.f32 0.0, %v451
        %v453 = vpop.f32.mrb[0].mxu0
        %454 = vdwg.mxu0
        %vm455 = vcmask 31744
        %456 = vst.msk [vmem:[%s233] sm:$0xff] %vm455, %v377
        %457 = vst.msk [vmem:[%s233 + $0x8] sm:$0xff] %vm455, %v382
        %458 = vst.msk [vmem:[%s233 + $0x10] sm:$0xff] %vm455, %v387
        %459 = vst.msk [vmem:[%s233 + $0x18] sm:$0xff] %vm455, %v392
        %460 = vst.msk [vmem:[%s233 + $0x20] sm:$0xff] %vm455, %v397
        %461 = vst.msk [vmem:[%s233 + $0x28] sm:$0xff] %vm455, %v402
        %462 = vst.msk [vmem:[%s233 + $0x30] sm:$0xff] %vm455, %v407
        %463 = vst.msk [vmem:[%s233 + $0x38] sm:$0xff] %vm455, %v412
        %464 = vst.msk [vmem:[%s233 + $0x40] sm:$0xff] %vm455, %v417
        %465 = vst.msk [vmem:[%s233 + $0x48] sm:$0xff] %vm455, %v422
        %466 = vst.msk [vmem:[%s233 + $0x50] sm:$0xff] %vm455, %v427
        %467 = vst.msk [vmem:[%s233 + $0x58] sm:$0xff] %vm455, %v432
        %468 = vst.msk [vmem:[%s233 + $0x60] sm:$0xff] %vm455, %v437
        %469 = vst.msk [vmem:[%s233 + $0x68] sm:$0xff] %vm455, %v442
        %470 = vst.msk [vmem:[%s233 + $0x70] sm:$0xff] %vm455, %v447
        %471 = vst.msk [vmem:[%s233 + $0x78] sm:$0xff] %vm455, %v452
        %v472 = vsel %vm455, %v377, 0.0
        %v473 = vsel %vm455, %v382, 0.0
        %v474 = vadd.f32 %v472, %v473
        %v475 = vsel %vm455, %v387, 0.0
        %v476 = vadd.f32 %v474, %v475
        %v477 = vsel %vm455, %v392, 0.0
        %v478 = vadd.f32 %v476, %v477
        %v479 = vsel %vm455, %v397, 0.0
        %v480 = vadd.f32 %v478, %v479
        %v481 = vsel %vm455, %v402, 0.0
        %v482 = vadd.f32 %v480, %v481
        %v483 = vsel %vm455, %v407, 0.0
        %v484 = vadd.f32 %v482, %v483
        %v485 = vsel %vm455, %v412, 0.0
        %v486 = vadd.f32 %v484, %v485
        %v487 = vsel %vm455, %v417, 0.0
        %v488 = vadd.f32 %v486, %v487
        %v489 = vsel %vm455, %v422, 0.0
        %v490 = vadd.f32 %v488, %v489
        %v491 = vsel %vm455, %v427, 0.0
        %v492 = vadd.f32 %v490, %v491
        %v493 = vsel %vm455, %v432, 0.0
        %v494 = vadd.f32 %v492, %v493
        %v495 = vsel %vm455, %v437, 0.0
        %v496 = vadd.f32 %v494, %v495
        %v497 = vsel %vm455, %v442, 0.0
        %v498 = vadd.f32 %v496, %v497
        %v499 = vsel %vm455, %v447, 0.0
        %v500 = vadd.f32 %v498, %v499
        %v501 = vsel %vm455, %v452, 0.0
        %v502 = vadd.f32 %v500, %v501
        %v503 = vrot.slane %v502, 4
        %v504 = vadd.f32 %v502, %v503
        %v505 = vrot.slane %v504, 2
        %v506 = vadd.f32 %v504, %v505
        %v507 = vrot.slane %v506, 1
        %v508 = vadd.f32 %v506, %v507
        %v509 = vmul.f32 %v377, %v377
        %v510 = vmul.f32 %v382, %v382
        %v511 = vmul.f32 %v387, %v387
        %v512 = vmul.f32 %v392, %v392
        %v513 = vmul.f32 %v397, %v397
        %v514 = vmul.f32 %v402, %v402
        %v515 = vmul.f32 %v407, %v407
        %v516 = vmul.f32 %v412, %v412
        %v517 = vmul.f32 %v417, %v417
        %v518 = vmul.f32 %v422, %v422
        %v519 = vmul.f32 %v427, %v427
        %v520 = vmul.f32 %v432, %v432
        %v521 = vmul.f32 %v437, %v437
        %v522 = vmul.f32 %v442, %v442
        %v523 = vmul.f32 %v447, %v447
        %v524 = vmul.f32 %v452, %v452
        %v525 = vsel %vm455, %v509, 0.0
        %v526 = vsel %vm455, %v510, 0.0
        %v527 = vadd.f32 %v525, %v526
        %v528 = vsel %vm455, %v511, 0.0
        %v529 = vadd.f32 %v527, %v528
        %v530 = vsel %vm455, %v512, 0.0
        %v531 = vadd.f32 %v529, %v530
        %v532 = vsel %vm455, %v513, 0.0
        %v533 = vadd.f32 %v531, %v532
        %v534 = vsel %vm455, %v514, 0.0
        %v535 = vadd.f32 %v533, %v534
        %v536 = vsel %vm455, %v515, 0.0
        %v537 = vadd.f32 %v535, %v536
        %v538 = vsel %vm455, %v516, 0.0
        %v539 = vadd.f32 %v537, %v538
        %v540 = vsel %vm455, %v517, 0.0
        %v541 = vadd.f32 %v539, %v540
        %v542 = vsel %vm455, %v518, 0.0
        %v543 = vadd.f32 %v541, %v542
        %v544 = vsel %vm455, %v519, 0.0
        %v545 = vadd.f32 %v543, %v544
        %v546 = vsel %vm455, %v520, 0.0
        %v547 = vadd.f32 %v545, %v546
        %v548 = vsel %vm455, %v521, 0.0
        %v549 = vadd.f32 %v547, %v548
        %v550 = vsel %vm455, %v522, 0.0
        %v551 = vadd.f32 %v549, %v550
        %v552 = vsel %vm455, %v523, 0.0
        %v553 = vadd.f32 %v551, %v552
        %v554 = vsel %vm455, %v524, 0.0
        %v555 = vadd.f32 %v553, %v554
        %v556 = vrot.slane %v555, 4
        %v557 = vadd.f32 %v555, %v556
        %v558 = vrot.slane %v557, 2
        %v559 = vadd.f32 %v557, %v558
        %v560 = vrot.slane %v559, 1
        %v561 = vadd.f32 %v559, %v560
        %vm562 = vcmask 1040384
        %v563 = vsel %vm562, %v508, %v561
        %vm564 = vcmask 25600
        %565 = vst.msk [vmem:[%s242] sm:$0x3] %vm564, %v563
        %s566 = smul.u32 8, %s23
        %p567 = scmp.lt.s32.totalorder %s22, 1
        %s568 = scalar_select %p567, %s22, 1
        %p569 = scmp.lt.s32.totalorder %s566, 15
        %s570 = scalar_select %p569, %s566, 15
        %s571 = smul.addr %s570, 2
        %s572 = smul.addr %s568, 32
        %s573 = sadd.s32 %s571, %s572
        %s574 = smul.addr %s573, 8
        %s575 = scalar_lea.vmem %s2, %s574
        %p576 = scmp.lt.s32.totalorder %s22, 1
        %s577 = scalar_select %p576, %s22, 1
        %p578 = scmp.lt.s32.totalorder %s23, 1
        %s579 = scalar_select %p578, %s23, 1
        %s580 = smul.addr %s577, 2
        %s581 = sadd.s32 %s579, %s580
        %s582 = smul.addr %s581, 2
        %s583 = scalar_lea.vmem %s3, %s582
        // Predicated region
        $region33: #{bottleneck_forward_nhwc.4} parent=27 // pred_check
          %p584 = pneg %p99
        $region34: #{bottleneck_forward_nhwc.4} parent=27 // pred_check_branch
          %586 = sbr.rel (%p584) target = $region36
        $region35: #{bottleneck_forward_nhwc.4} parent=27 // pred_region
          %s587 = smul.u32 8, %s23
        $region36: #{bottleneck_forward_nhwc.4} parent=27 // pred_fallthru
          _
        // Predicated region
        $region37: #{bottleneck_forward_nhwc.4} parent=27 // pred_check
          %p588 = pneg %p127
        $region38: #{bottleneck_forward_nhwc.4} parent=27 // pred_check_branch
          %590 = sbr.rel (%p588) target = $region40
        $region39: #{bottleneck_forward_nhwc.4} parent=27 // pred_region
          _
        $region40: #{bottleneck_forward_nhwc.4} parent=27 // pred_fallthru
          _
      $region28: #{bottleneck_forward_nhwc.4} parent=5 // pred_fallthru
        _
      %p591 = scmp.le.s32.totalorder 2, %s13
      // Predicated region
      $region41: #{bottleneck_forward_nhwc.4} parent=5 // pred_check
        %p592 = pneg %p591
      $region42: #{bottleneck_forward_nhwc.4} parent=5 // pred_check_branch
        %594 = sbr.rel (%p592) target = $region44
      $region43: #{bottleneck_forward_nhwc.4} parent=5 // pred_region
        %s595 = ssub.s32 %s13, 2
        // Predicated region
        $region45: #{bottleneck_forward_nhwc.4} parent=43 // pred_check
          %p596 = pneg %p105
        $region46: #{bottleneck_forward_nhwc.4} parent=43 // pred_check_branch
          %598 = sbr.rel (%p596) target = $region48
        $region47: #{bottleneck_forward_nhwc.4} parent=43 // pred_region
          %s599 = smul.u32 8, %s25
          %p600 = scmp.lt.s32.totalorder %s24, 1
          %s601 = scalar_select %p600, %s24, 1
          %p602 = scmp.lt.s32.totalorder %s599, 15
          %s603 = scalar_select %p602, %s599, 15
          %s604 = smul.addr %s603, 2
          %s605 = smul.addr %s601, 32
          %s606 = sadd.s32 %s604, %s605
          %s607 = smul.addr %s606, 8
          %s608 = scalar_lea.vmem %s2, %s607
        $region48: #{bottleneck_forward_nhwc.4} parent=43 // pred_fallthru
          _
        // Predicated region
        $region49: #{bottleneck_forward_nhwc.4} parent=43 // pred_check
          %p609 = pneg %p133
        $region50: #{bottleneck_forward_nhwc.4} parent=43 // pred_check_branch
          %611 = sbr.rel (%p609) target = $region52
        $region51: #{bottleneck_forward_nhwc.4} parent=43 // pred_region
          %p612 = scmp.lt.s32.totalorder %s24, 1
          %s613 = scalar_select %p612, %s24, 1
          %p614 = scmp.lt.s32.totalorder %s25, 1
          %s615 = scalar_select %p614, %s25, 1
          %s616 = smul.addr %s613, 2
          %s617 = sadd.s32 %s615, %s616
          %s618 = smul.addr %s617, 2
          %s619 = scalar_lea.vmem %s3, %s618
        $region52: #{bottleneck_forward_nhwc.4} parent=43 // pred_fallthru
          _
      $region44: #{bottleneck_forward_nhwc.4} parent=5 // pred_fallthru
        _
    $region6: #{bottleneck_forward_nhwc.4} parent=1 // loop_footer
      %s17 = sadd.s32 1, %s13
    $region7: #{bottleneck_forward_nhwc.4} parent=1 // loop_footer_branch
      %12 = sbr.rel target = $region3
    $region8: #{bottleneck_forward_nhwc.4} parent=1 // loop_exit
      _
    %620 = vsyncpa [#allocation3], 1
    %s621 = scalar_lea.sflag [#allocation3], 1
    %622 = vsyncpa %s621, 1

// kernel: bottleneck_forward_nhwc.7
$region0: #{bottleneck_forward_nhwc.7}
  #allocation0 [shape = 'u32[]', space=smem, size = 0x4, offset = 0x4, fixed_abs, tag = 'smem constant byte address 0x4 - core index']
  #allocation1 [shape = 'u32[144,128]{1,0:T(1,128)}', space=vmem, size = 0x12000, scoped, tag = 'internal scratch']
  %s0 = inlined_call_operand.vmem [shape: f32[2,16,16,16], index: 0, kind: input, shape index: {}]
  %s1 = inlined_call_operand.vmem [shape: f32[2,16,16,16], index: 1, kind: input, shape index: {}]
  %s2 = inlined_call_operand.vmem [shape: f32[1,16], index: 2, kind: input, shape index: {}]
  %s3 = inlined_call_operand.vmem [shape: f32[1,16], index: 3, kind: input, shape index: {}]
  %s4 = inlined_call_operand.hbm [shape: f32[2,16,16,16], index: 4, kind: output, shape index: {}]
  %s5 = sld [smem:[#allocation0]]
  $region49: #{bottleneck_forward_nhwc.7} parent=0
    _
  %s7 = ssub.s32 1, %s5
  %s8 = scalar_select 0, %s7, %s5
  $region1: #{bottleneck_forward_nhwc.7} parent=0
    #allocation2 [shape = 'u8[131072]{0}', space=vmem, size = 0x20000, scoped, tag = 'output window, operand 0']
    #allocation3 [shape = 's32[2]{0}', space=sflag, size = 0x8, scoped, tag = 'scoped memory for bottleneck_forward_nhwc.7']
    %9 = vsyncpa [#allocation3], 0
    %s10 = scalar_lea.sflag [#allocation3], 1
    %11 = vsyncpa %s10, 0
    loop: start=0, step=1, limit=6
    $region2: #{bottleneck_forward_nhwc.7} parent=1 // loop_pre_header
      _
    $region3: #{bottleneck_forward_nhwc.7} parent=1 // loop_header
      %s13 = sphi 0, %s17
      %p14 = scmp.ge.s32.totalorder %s13, 6
      %s20 = sphi 0, %s32
      %s21 = sphi 0, %s28
      %s22 = sphi 0, %s20
      %s23 = sphi 0, %s21
      %s24 = sphi 0, %s22
      %s25 = sphi 0, %s23
      %s37 = sphi 0, %s39
      %s40 = sphi 0, %s37
      %s41 = sphi 0, %s40
      %s57 = sphi 0, %s41
      %s65 = sphi 0, %s67
      %s68 = sphi 0, %s65
      %s69 = sphi 0, %s68
      %s85 = sphi 0, %s69
      %s89 = sphi 0, %s89
      %s91 = sphi 0, %s89
      %s92 = sphi 0, %s91
      %s106 = sphi 0, %s92
      %s110 = sphi 0, %s110
      %s112 = sphi 0, %s110
      %s113 = sphi 0, %s112
      %s127 = sphi 0, %s113
      %s135 = sphi 0, %s137
      %s138 = sphi 0, %s135
      %s139 = sphi 0, %s138
      %s155 = sphi 0, %s139
    $region4: #{bottleneck_forward_nhwc.7} parent=1 // loop_header_branch
      %16 = sbr.rel (%p14) target = $region8
    $region5: #{bottleneck_forward_nhwc.7} parent=1 // loop_body
      %s18 = ssub.s32 %s13, 1
      %s19 = ssub.s32 %s13, 2
      %s26 = sadd.s32 1, %s21
      %p27 = scmp.ge.s32.totalorder %s26, 2
      %s28 = scalar_select %p27, 0, %s26
      %s29 = sadd.s32 1, %s20
      %s30 = scalar_select %p27, %s29, %s20
      %p31 = scmp.ge.s32.totalorder %s30, 2
      %s32 = scalar_select %p31, 0, %s30
      %s33 = ssub.s32 %s20, %s32
      %s34 = ssub.s32 %s21, %s28
      %s35 = sor.u32 %s33, %s34
      %p36 = scmp.eq.s32.totalorder %s35, 0
      %s38 = sadd.s32 %s37, 1
      %s39 = scalar_select %p36, %s37, %s38
      %p42 = pneg %p36
      %p43 = scmp.eq.s32.totalorder %s13, 3
      %p44 = por %p42, %p43
      %p45 = scmp.ne.s32.totalorder %s37, %s40
      %p46 = scmp.eq.s32.totalorder %s13, 0
      %p47 = por %p45, %p46
      %p48 = scmp.ne.s32.totalorder %s37, %s40
      %p49 = scmp.eq.s32.totalorder %s18, 3
      %p50 = por %p48, %p49
      %p51 = scmp.ne.s32.totalorder %s40, %s41
      %p52 = scmp.eq.s32.totalorder %s18, 0
      %p53 = por %p51, %p52
      %p54 = scmp.ne.s32.totalorder %s40, %s41
      %p55 = scmp.eq.s32.totalorder %s19, 3
      %p56 = por %p54, %p55
      %p58 = scmp.ne.s32.totalorder %s41, %s57
      %p59 = scmp.eq.s32.totalorder %s19, 0
      %p60 = por %p58, %p59
      %s61 = ssub.s32 %s20, %s32
      %s62 = ssub.s32 %s21, %s28
      %s63 = sor.u32 %s61, %s62
      %p64 = scmp.eq.s32.totalorder %s63, 0
      %s66 = sadd.s32 %s65, 1
      %s67 = scalar_select %p64, %s65, %s66
      %p70 = pneg %p64
      %p71 = scmp.eq.s32.totalorder %s13, 3
      %p72 = por %p70, %p71
      %p73 = scmp.ne.s32.totalorder %s65, %s68
      %p74 = scmp.eq.s32.totalorder %s13, 0
      %p75 = por %p73, %p74
      %p76 = scmp.ne.s32.totalorder %s65, %s68
      %p77 = scmp.eq.s32.totalorder %s18, 3
      %p78 = por %p76, %p77
      %p79 = scmp.ne.s32.totalorder %s68, %s69
      %p80 = scmp.eq.s32.totalorder %s18, 0
      %p81 = por %p79, %p80
      %p82 = scmp.ne.s32.totalorder %s68, %s69
      %p83 = scmp.eq.s32.totalorder %s19, 3
      %p84 = por %p82, %p83
      %p86 = scmp.ne.s32.totalorder %s69, %s85
      %p87 = scmp.eq.s32.totalorder %s19, 0
      %p88 = por %p86, %p87
      %s90 = sadd.s32 %s89, 1
      %p93 = scmp.eq.s32.totalorder %s13, 3
      %p94 = scmp.ne.s32.totalorder %s89, %s91
      %p95 = scmp.eq.s32.totalorder %s13, 0
      %p96 = por %p94, %p95
      %p97 = scmp.ne.s32.totalorder %s89, %s91
      %p98 = scmp.eq.s32.totalorder %s18, 3
      %p99 = por %p97, %p98
      %p100 = scmp.ne.s32.totalorder %s91, %s92
      %p101 = scmp.eq.s32.totalorder %s18, 0
      %p102 = por %p100, %p101
      %p103 = scmp.ne.s32.totalorder %s91, %s92
      %p104 = scmp.eq.s32.totalorder %s19, 3
      %p105 = por %p103, %p104
      %p107 = scmp.ne.s32.totalorder %s92, %s106
      %p108 = scmp.eq.s32.totalorder %s19, 0
      %p109 = por %p107, %p108
      %s111 = sadd.s32 %s110, 1
      %p114 = scmp.eq.s32.totalorder %s13, 3
      %p115 = scmp.ne.s32.totalorder %s110, %s112
      %p116 = scmp.eq.s32.totalorder %s13, 0
      %p117 = por %p115, %p116
      %p118 = scmp.ne.s32.totalorder %s110, %s112
      %p119 = scmp.eq.s32.totalorder %s18, 3
      %p120 = por %p118, %p119
      %p121 = scmp.ne.s32.totalorder %s112, %s113
      %p122 = scmp.eq.s32.totalorder %s18, 0
      %p123 = por %p121, %p122
      %p124 = scmp.ne.s32.totalorder %s112, %s113
      %p125 = scmp.eq.s32.totalorder %s19, 3
      %p126 = por %p124, %p125
      %p128 = scmp.ne.s32.totalorder %s113, %s127
      %p129 = scmp.eq.s32.totalorder %s19, 0
      %p130 = por %p128, %p129
      %s131 = ssub.s32 %s20, %s32
      %s132 = ssub.s32 %s21, %s28
      %s133 = sor.u32 %s131, %s132
      %p134 = scmp.eq.s32.totalorder %s133, 0
      %s136 = sadd.s32 %s135, 1
      %s137 = scalar_select %p134, %s135, %s136
      %p140 = pneg %p134
      %p141 = scmp.eq.s32.totalorder %s13, 3
      %p142 = por %p140, %p141
      %p143 = scmp.ne.s32.totalorder %s135, %s138
      %p144 = scmp.eq.s32.totalorder %s13, 0
      %p145 = por %p143, %p144
      %p146 = scmp.ne.s32.totalorder %s135, %s138
      %p147 = scmp.eq.s32.totalorder %s18, 3
      %p148 = por %p146, %p147
      %p149 = scmp.ne.s32.totalorder %s138, %s139
      %p150 = scmp.eq.s32.totalorder %s18, 0
      %p151 = por %p149, %p150
      %p152 = scmp.ne.s32.totalorder %s138, %s139
      %p153 = scmp.eq.s32.totalorder %s19, 3
      %p154 = por %p152, %p153
      %p156 = scmp.ne.s32.totalorder %s139, %s155
      %p157 = scmp.eq.s32.totalorder %s19, 0
      %p158 = por %p156, %p157
      %p159 = scmp.le.s32.totalorder 1, %s13
      %p160 = scmp.lt.s32.totalorder %s13, 5
      %p161 = pnand %p159, %p160
      %p162 = pneg %p161
      // Predicated region
      $region9: #{bottleneck_forward_nhwc.7} parent=5 // pred_check
        _
      $region10: #{bottleneck_forward_nhwc.7} parent=5 // pred_check_branch
        %164 = sbr.rel (%p161) target = $region12
      $region11: #{bottleneck_forward_nhwc.7} parent=5 // pred_region
        %s165 = ssub.s32 %s13, 1
        // Predicated region
        $region13: #{bottleneck_forward_nhwc.7} parent=11 // pred_check
          %p166 = pneg %p102
        $region14: #{bottleneck_forward_nhwc.7} parent=11 // pred_check_branch
          %168 = sbr.rel (%p166) target = $region16
        $region15: #{bottleneck_forward_nhwc.7} parent=11 // pred_region
          _
        $region16: #{bottleneck_forward_nhwc.7} parent=11 // pred_fallthru
          _
        // Predicated region
        $region17: #{bottleneck_forward_nhwc.7} parent=11 // pred_check
          %p169 = pneg %p123
        $region18: #{bottleneck_forward_nhwc.7} parent=11 // pred_check_branch
          %171 = sbr.rel (%p169) target = $region20
        $region19: #{bottleneck_forward_nhwc.7} parent=11 // pred_region
          _
        $region20: #{bottleneck_forward_nhwc.7} parent=11 // pred_fallthru
          _
      $region12: #{bottleneck_forward_nhwc.7} parent=5 // pred_fallthru
        _
      %p172 = scmp.lt.s32.totalorder %s13, 4
      // Predicated region
      $region21: #{bottleneck_forward_nhwc.7} parent=5 // pred_check
        %p173 = pneg %p172
      $region22: #{bottleneck_forward_nhwc.7} parent=5 // pred_check_branch
        %175 = sbr.rel (%p173) target = $region24
      $region23: #{bottleneck_forward_nhwc.7} parent=5 // pred_region
        // Predicated region
        $region25: #{bottleneck_forward_nhwc.7} parent=23 // pred_check
          %p176 = pneg %p47
        $region26: #{bottleneck_forward_nhwc.7} parent=23 // pred_check_branch
          %178 = sbr.rel (%p176) target = $region28
        $region27: #{bottleneck_forward_nhwc.7} parent=23 // pred_region
          %s179 = smul.u32 8, %s21
          %p180 = scmp.lt.s32.totalorder %s20, 1
          %s181 = scalar_select %p180, %s20, 1
          %p182 = scmp.lt.s32.totalorder %s179, 15
          %s183 = scalar_select %p182, %s179, 15
          %s184 = smul.addr %s183, 2
          %s185 = smul.addr %s181, 32
          %s186 = sadd.s32 %s184, %s185
          %s187 = smul.addr %s186, 8
          %s188 = scalar_lea.vmem %s0, %s187
          %s189 = smul.u32 8, %s21
        $region28: #{bottleneck_forward_nhwc.7} parent=23 // pred_fallthru
          _
        // Predicated region
        $region29: #{bottleneck_forward_nhwc.7} parent=23 // pred_check
          %p190 = pneg %p75
        $region30: #{bottleneck_forward_nhwc.7} parent=23 // pred_check_branch
          %192 = sbr.rel (%p190) target = $region32
        $region31: #{bottleneck_forward_nhwc.7} parent=23 // pred_region
          %s193 = smul.u32 8, %s21
          %p194 = scmp.lt.s32.totalorder %s20, 1
          %s195 = scalar_select %p194, %s20, 1
          %p196 = scmp.lt.s32.totalorder %s193, 15
          %s197 = scalar_select %p196, %s193, 15
          %s198 = smul.addr %s197, 2
          %s199 = smul.addr %s195, 32
          %s200 = sadd.s32 %s198, %s199
          %s201 = smul.addr %s200, 8
          %s202 = scalar_lea.vmem %s1, %s201
          %s203 = smul.u32 8, %s21
        $region32: #{bottleneck_forward_nhwc.7} parent=23 // pred_fallthru
          _
      $region24: #{bottleneck_forward_nhwc.7} parent=5 // pred_fallthru
        _
      %p204 = scmp.le.s32.totalorder 1, %s13
      %p205 = scmp.lt.s32.totalorder %s13, 5
      %p206 = pnand %p204, %p205
      %p207 = pneg %p206
      // Predicated region
      $region33: #{bottleneck_forward_nhwc.7} parent=5 // pred_check
        _
      $region34: #{bottleneck_forward_nhwc.7} parent=5 // pred_check_branch
        %209 = sbr.rel (%p206) target = $region36
      $region35: #{bottleneck_forward_nhwc.7} parent=5 // pred_region
        %s210 = ssub.s32 %s13, 1
        %s211 = smul.u32 8, %s23
        %p212 = scmp.lt.s32.totalorder %s22, 1
        %s213 = scalar_select %p212, %s22, 1
        %p214 = scmp.lt.s32.totalorder %s211, 15
        %s215 = scalar_select %p214, %s211, 15
        %s216 = smul.addr %s215, 2
        %s217 = smul.addr %s213, 32
        %s218 = sadd.s32 %s216, %s217
        %s219 = smul.addr %s218, 8
        %s220 = scalar_lea.vmem %s0, %s219
        %p221 = pneg %p53
        %p222 = pneg %p50
        %s223 = smul.u32 8, %s23
        %p224 = scmp.lt.s32.totalorder %s22, 1
        %s225 = scalar_select %p224, %s22, 1
        %p226 = scmp.lt.s32.totalorder %s223, 15
        %s227 = scalar_select %p226, %s223, 15
        %s228 = smul.addr %s227, 2
        %s229 = smul.addr %s225, 32
        %s230 = sadd.s32 %s228, %s229
        %s231 = smul.addr %s230, 8
        %s232 = scalar_lea.vmem %s1, %s231
        %p233 = pneg %p81
        %p234 = pneg %p78
        %p235 = pneg %p102
        %p236 = pneg %p99
        %p237 = pneg %p123
        %p238 = pneg %p120
        %p239 = pneg %p151
        %p240 = pneg %p148
        %s241 = sand.u32 %s138, 1
        %s242 = scalar_lea.sflag [#allocation3], %s241
        %s243 = sand.u32 %s138, 1
        %s244 = smul.addr %s243, 128
        %s245 = scalar_lea.vmem [#allocation2], %s244
        %s246 = smul.u32 8, %s23
        %p247 = scmp.lt.s32.totalorder %s22, 1
        %s248 = scalar_select %p247, %s22, 1
        %p249 = scmp.lt.s32.totalorder %s246, 15
        %s250 = scalar_select %p249, %s246, 15
        %s251 = smul.addr %s250, 2
        %s252 = smul.addr %s248, 32
        %s253 = sadd.s32 %s251, %s252
        %s254 = smul.addr %s253, 8
        %s255 = scalar_lea.vmem %s0, %s254
        %s256 = smul.u32 8, %s23
        %s257 = smul.u32 8, %s23
        %p258 = scmp.lt.s32.totalorder %s22, 1
        %s259 = scalar_select %p258, %s22, 1
        %p260 = scmp.lt.s32.totalorder %s257, 15
        %s261 = scalar_select %p260, %s257, 15
        %s262 = smul.addr %s261, 2
        %s263 = smul.addr %s259, 32
        %s264 = sadd.s32 %s262, %s263
        %s265 = smul.addr %s264, 8
        %s266 = scalar_lea.vmem %s1, %s265
        %s267 = smul.u32 8, %s23
        %s268 = smul.u32 8, %s23
        %v269 = vld [vmem:[%s255] sm:$0xff]
        %v270 = vld [vmem:[%s255 + $0x8] sm:$0xff]
        %v271 = vld [vmem:[%s255 + $0x10] sm:$0xff]
        %v272 = vld [vmem:[%s255 + $0x18] sm:$0xff]
        %v273 = vld [vmem:[%s255 + $0x20] sm:$0xff]
        %v274 = vld [vmem:[%s255 + $0x28] sm:$0xff]
        %v275 = vld [vmem:[%s255 + $0x30] sm:$0xff]
        %v276 = vld [vmem:[%s255 + $0x38] sm:$0xff]
        %v277 = vld [vmem:[%s255 + $0x40] sm:$0xff]
        %v278 = vld [vmem:[%s255 + $0x48] sm:$0xff]
        %v279 = vld [vmem:[%s255 + $0x50] sm:$0xff]
        %v280 = vld [vmem:[%s255 + $0x58] sm:$0xff]
        %v281 = vld [vmem:[%s255 + $0x60] sm:$0xff]
        %v282 = vld [vmem:[%s255 + $0x68] sm:$0xff]
        %v283 = vld [vmem:[%s255 + $0x70] sm:$0xff]
        %v284 = vld [vmem:[%s255 + $0x78] sm:$0xff]
        %v285 = vld [vmem:[%s266] sm:$0xff]
        %v286 = vld [vmem:[%s266 + $0x8] sm:$0xff]
        %v287 = vld [vmem:[%s266 + $0x10] sm:$0xff]
        %v288 = vld [vmem:[%s266 + $0x18] sm:$0xff]
        %v289 = vld [vmem:[%s266 + $0x20] sm:$0xff]
        %v290 = vld [vmem:[%s266 + $0x28] sm:$0xff]
        %v291 = vld [vmem:[%s266 + $0x30] sm:$0xff]
        %v292 = vld [vmem:[%s266 + $0x38] sm:$0xff]
        %v293 = vld [vmem:[%s266 + $0x40] sm:$0xff]
        %v294 = vld [vmem:[%s266 + $0x48] sm:$0xff]
        %v295 = vld [vmem:[%s266 + $0x50] sm:$0xff]
        %v296 = vld [vmem:[%s266 + $0x58] sm:$0xff]
        %v297 = vld [vmem:[%s266 + $0x60] sm:$0xff]
        %v298 = vld [vmem:[%s266 + $0x68] sm:$0xff]
        %v299 = vld [vmem:[%s266 + $0x70] sm:$0xff]
        %v300 = vld [vmem:[%s266 + $0x78] sm:$0xff]
        %v301 = vld [vmem:[%s2] sm:$0x1]
        %v303 = vlaneseq
        %v304 = vshrl.u32 %v303, 7
        %v305 = vsub.s32 0, %v304
        %v306 = vrot.slane %v301, %v305
        %v308 = vmul.f32 %v269, %v306
        %v309 = vmul.f32 %v270, %v306
        %v310 = vmul.f32 %v271, %v306
        %v311 = vmul.f32 %v272, %v306
        %v312 = vmul.f32 %v273, %v306
        %v313 = vmul.f32 %v274, %v306
        %v314 = vmul.f32 %v275, %v306
        %v315 = vmul.f32 %v276, %v306
        %v316 = vmul.f32 %v277, %v306
        %v317 = vmul.f32 %v278, %v306
        %v318 = vmul.f32 %v279, %v306
        %v319 = vmul.f32 %v280, %v306
        %v320 = vmul.f32 %v281, %v306
        %v321 = vmul.f32 %v282, %v306
        %v322 = vmul.f32 %v283, %v306
        %v323 = vmul.f32 %v284, %v306
        %v324 = vld [vmem:[%s3] sm:$0x1]
        %v326 = vlaneseq
        %v327 = vshrl.u32 %v326, 7
        %v328 = vsub.s32 0, %v327
        %v329 = vrot.slane %v324, %v328
        %v331 = vadd.f32 %v308, %v329
        %v332 = vadd.f32 %v309, %v329
        %v333 = vadd.f32 %v310, %v329
        %v334 = vadd.f32 %v311, %v329
        %v335 = vadd.f32 %v312, %v329
        %v336 = vadd.f32 %v313, %v329
        %v337 = vadd.f32 %v314, %v329
        %v338 = vadd.f32 %v315, %v329
        %v339 = vadd.f32 %v316, %v329
        %v340 = vadd.f32 %v317, %v329
        %v341 = vadd.f32 %v318, %v329
        %v342 = vadd.f32 %v319, %v329
        %v343 = vadd.f32 %v320, %v329
        %v344 = vadd.f32 %v321, %v329
        %v345 = vadd.f32 %v322, %v329
        %v346 = vadd.f32 %v323, %v329
        %v347 = vadd.f32 %v331, %v285
        %v348 = vadd.f32 %v332, %v286
        %v349 = vadd.f32 %v333, %v287
        %v350 = vadd.f32 %v334, %v288
        %v351 = vadd.f32 %v335, %v289
        %v352 = vadd.f32 %v336, %v290
        %v353 = vadd.f32 %v337, %v291
        %v354 = vadd.f32 %v338, %v292
        %v355 = vadd.f32 %v339, %v293
        %v356 = vadd.f32 %v340, %v294
        %v357 = vadd.f32 %v341, %v295
        %v358 = vadd.f32 %v342, %v296
        %v359 = vadd.f32 %v343, %v297
        %v360 = vadd.f32 %v344, %v298
        %v361 = vadd.f32 %v345, %v299
        %v362 = vadd.f32 %v346, %v300
        %v363 = vmax.f32 %v347, 0.0
        %v364 = vmax.f32 %v348, 0.0
        %v365 = vmax.f32 %v349, 0.0
        %v366 = vmax.f32 %v350, 0.0
        %v367 = vmax.f32 %v351, 0.0
        %v368 = vmax.f32 %v352, 0.0
        %v369 = vmax.f32 %v353, 0.0
        %v370 = vmax.f32 %v354, 0.0
        %v371 = vmax.f32 %v355, 0.0
        %v372 = vmax.f32 %v356, 0.0
        %v373 = vmax.f32 %v357, 0.0
        %v374 = vmax.f32 %v358, 0.0
        %v375 = vmax.f32 %v359, 0.0
        %v376 = vmax.f32 %v360, 0.0
        %v377 = vmax.f32 %v361, 0.0
        %v378 = vmax.f32 %v362, 0.0
        %vm379 = vcmask 130048
        %380 = vst.msk [vmem:[%s245] sm:$0xff] %vm379, %v363
        %381 = vst.msk [vmem:[%s245 + $0x8] sm:$0xff] %vm379, %v364
        %382 = vst.msk [vmem:[%s245 + $0x10] sm:$0xff] %vm379, %v365
        %383 = vst.msk [vmem:[%s245 + $0x18] sm:$0xff] %vm379, %v366
        %384 = vst.msk [vmem:[%s245 + $0x20] sm:$0xff] %vm379, %v367
        %385 = vst.msk [vmem:[%s245 + $0x28] sm:$0xff] %vm379, %v368
        %386 = vst.msk [vmem:[%s245 + $0x30] sm:$0xff] %vm379, %v369
        %387 = vst.msk [vmem:[%s245 + $0x38] sm:$0xff] %vm379, %v370
        %388 = vst.msk [vmem:[%s245 + $0x40] sm:$0xff] %vm379, %v371
        %389 = vst.msk [vmem:[%s245 + $0x48] sm:$0xff] %vm379, %v372
        %390 = vst.msk [vmem:[%s245 + $0x50] sm:$0xff] %vm379, %v373
        %391 = vst.msk [vmem:[%s245 + $0x58] sm:$0xff] %vm379, %v374
        %392 = vst.msk [vmem:[%s245 + $0x60] sm:$0xff] %vm379, %v375
        %393 = vst.msk [vmem:[%s245 + $0x68] sm:$0xff] %vm379, %v376
        %394 = vst.msk [vmem:[%s245 + $0x70] sm:$0xff] %vm379, %v377
        %395 = vst.msk [vmem:[%s245 + $0x78] sm:$0xff] %vm379, %v378
        %s396 = sand.u32 %s138, 1
        %s397 = scalar_lea.sflag [#allocation3], %s396
        %s398 = sand.u32 %s138, 1
        %s399 = smul.addr %s398, 128
        %s400 = scalar_lea.vmem [#allocation2], %s399
        // Predicated region
        $region37: #{bottleneck_forward_nhwc.7} parent=35 // pred_check
          %p401 = pneg %p148
        $region38: #{bottleneck_forward_nhwc.7} parent=35 // pred_check_branch
          %403 = sbr.rel (%p401) target = $region40
        $region39: #{bottleneck_forward_nhwc.7} parent=35 // pred_region
          %s404 = smul.u32 8, %s23
          %s406 = ssub.s32 2048, 2048
          %407 = vsyncadd %s397, %s406
          %s408 = smul.addr %s404, 2
          %s409 = smul.addr %s22, 32
          %s410 = sadd.s32 %s408, %s409
          %s411 = smul.addr %s410, 128
          %s412 = scalar_lea.hbm %s4, %s411
          %s413 = sshll.u32 %s400, 4
          %s414 = int_to_ptr.vmem [resolvable:$true] %s413
          %419 = dma.vmem_to_hbm [thread:$0]  %s414, 2048, %s412, %s397, 128, 128, 8
        $region40: #{bottleneck_forward_nhwc.7} parent=35 // pred_fallthru
          _
      $region36: #{bottleneck_forward_nhwc.7} parent=5 // pred_fallthru
        _
      %p420 = scmp.le.s32.totalorder 2, %s13
      // Predicated region
      $region41: #{bottleneck_forward_nhwc.7} parent=5 // pred_check
        %p421 = pneg %p420
      $region42: #{bottleneck_forward_nhwc.7} parent=5 // pred_check_branch
        %423 = sbr.rel (%p421) target = $region44
      $region43: #{bottleneck_forward_nhwc.7} parent=5 // pred_region
        %s424 = ssub.s32 %s13, 2
        // Predicated region
        $region45: #{bottleneck_forward_nhwc.7} parent=43 // pred_check
          %p425 = pneg %p154
        $region46: #{bottleneck_forward_nhwc.7} parent=43 // pred_check_branch
          %427 = sbr.rel (%p425) target = $region48
        $region47: #{bottleneck_forward_nhwc.7} parent=43 // pred_region
          %s428 = sand.u32 %s139, 1
          %s429 = scalar_lea.sflag [#allocation3], %s428
          %s430 = sand.u32 %s139, 1
          %s431 = smul.addr %s430, 128
          %s432 = scalar_lea.vmem [#allocation2], %s431
          %433 = dma.done %s429, 2048
        $region48: #{bottleneck_forward_nhwc.7} parent=43 // pred_fallthru
          _
      $region44: #{bottleneck_forward_nhwc.7} parent=5 // pred_fallthru
        _
    $region6: #{bottleneck_forward_nhwc.7} parent=1 // loop_footer
      %s17 = sadd.s32 1, %s13
    $region7: #{bottleneck_forward_nhwc.7} parent=1 // loop_footer_branch
      %12 = sbr.rel target = $region3
    $region8: #{bottleneck_forward_nhwc.7} parent=1 // loop_exit
      _
    %434 = vsyncpa [#allocation3], 1
    %s435 = scalar_lea.sflag [#allocation3], 1
    %436 = vsyncpa %s435, 1

// kernel: bottleneck_forward_nhwc.6
$region0: #{bottleneck_forward_nhwc.6}
  #allocation0 [shape = 'u32[]', space=smem, size = 0x4, offset = 0x4, fixed_abs, tag = 'smem constant byte address 0x4 - core index']
  #allocation1 [shape = 'u32[144,128]{1,0:T(1,128)}', space=vmem, size = 0x12000, scoped, tag = 'internal scratch']
  %s0 = inlined_call_operand.vmem [shape: f32[2,16,16,4], index: 0, kind: input, shape index: {}]
  %s1 = inlined_call_operand.vmem [shape: f32[1,4], index: 1, kind: input, shape index: {}]
  %s2 = inlined_call_operand.vmem [shape: f32[1,4], index: 2, kind: input, shape index: {}]
  %s3 = inlined_call_operand.vmem [shape: f32[4,16], index: 3, kind: input, shape index: {}]
  %s4 = inlined_call_operand.vmem [shape: f32[2,16,16,16], index: 4, kind: output, shape index: {0}]
  %s5 = inlined_call_operand.vmem [shape: f32[2,2,2,16], index: 5, kind: output, shape index: {1}]
  %6 = xla_tuple %s4, %s5
  %s7 = sld [smem:[#allocation0]]
  $region57: #{bottleneck_forward_nhwc.6} parent=0
    _
  %s9 = ssub.s32 1, %s7
  %s10 = scalar_select 0, %s9, %s7
  loop: start=0, step=1, limit=6
  $region2: #{bottleneck_forward_nhwc.6} parent=0 // loop_pre_header
    _
  $region3: #{bottleneck_forward_nhwc.6} parent=0 // loop_header
    %s12 = sphi 0, %s16
    %p13 = scmp.ge.s32.totalorder %s12, 6
    %s19 = sphi 0, %s31
    %s20 = sphi 0, %s27
    %s21 = sphi 0, %s19
    %s22 = sphi 0, %s20
    %s23 = sphi 0, %s21
    %s24 = sphi 0, %s22
    %s36 = sphi 0, %s38
    %s39 = sphi 0, %s36
    %s40 = sphi 0, %s39
    %s56 = sphi 0, %s40
    %s60 = sphi 0, %s60
    %s62 = sphi 0, %s60
    %s63 = sphi 0, %s62
    %s77 = sphi 0, %s63
    %s81 = sphi 0, %s81
    %s83 = sphi 0, %s81
    %s84 = sphi 0, %s83
    %s98 = sphi 0, %s84
    %s102 = sphi 0, %s102
    %s104 = sphi 0, %s102
    %s105 = sphi 0, %s104
    %s119 = sphi 0, %s105
    %s127 = sphi 0, %s129
    %s130 = sphi 0, %s127
    %s131 = sphi 0, %s130
    %s147 = sphi 0, %s131
    %s155 = sphi 0, %s157
    %s158 = sphi 0, %s155
    %s159 = sphi 0, %s158
    %s175 = sphi 0, %s159
  $region4: #{bottleneck_forward_nhwc.6} parent=0 // loop_header_branch
    %15 = sbr.rel (%p13) target = $region8
  $region5: #{bottleneck_forward_nhwc.6} parent=0 // loop_body
    %s17 = ssub.s32 %s12, 1
    %s18 = ssub.s32 %s12, 2
    %s25 = sadd.s32 1, %s20
    %p26 = scmp.ge.s32.totalorder %s25, 2
    %s27 = scalar_select %p26, 0, %s25
    %s28 = sadd.s32 1, %s19
    %s29 = scalar_select %p26, %s28, %s19
    %p30 = scmp.ge.s32.totalorder %s29, 2
    %s31 = scalar_select %p30, 0, %s29
    %s32 = ssub.s32 %s19, %s31
    %s33 = ssub.s32 %s20, %s27
    %s34 = sor.u32 %s32, %s33
    %p35 = scmp.eq.s32.totalorder %s34, 0
    %s37 = sadd.s32 %s36, 1
    %s38 = scalar_select %p35, %s36, %s37
    %p41 = pneg %p35
    %p42 = scmp.eq.s32.totalorder %s12, 3
    %p43 = por %p41, %p42
    %p44 = scmp.ne.s32.totalorder %s36, %s39
    %p45 = scmp.eq.s32.totalorder %s12, 0
    %p46 = por %p44, %p45
    %p47 = scmp.ne.s32.totalorder %s36, %s39
    %p48 = scmp.eq.s32.totalorder %s17, 3
    %p49 = por %p47, %p48
    %p50 = scmp.ne.s32.totalorder %s39, %s40
    %p51 = scmp.eq.s32.totalorder %s17, 0
    %p52 = por %p50, %p51
    %p53 = scmp.ne.s32.totalorder %s39, %s40
    %p54 = scmp.eq.s32.totalorder %s18, 3
    %p55 = por %p53, %p54
    %p57 = scmp.ne.s32.totalorder %s40, %s56
    %p58 = scmp.eq.s32.totalorder %s18, 0
    %p59 = por %p57, %p58
    %s61 = sadd.s32 %s60, 1
    %p64 = scmp.eq.s32.totalorder %s12, 3
    %p65 = scmp.ne.s32.totalorder %s60, %s62
    %p66 = scmp.eq.s32.totalorder %s12, 0
    %p67 = por %p65, %p66
    %p68 = scmp.ne.s32.totalorder %s60, %s62
    %p69 = scmp.eq.s32.totalorder %s17, 3
    %p70 = por %p68, %p69
    %p71 = scmp.ne.s32.totalorder %s62, %s63
    %p72 = scmp.eq.s32.totalorder %s17, 0
    %p73 = por %p71, %p72
    %p74 = scmp.ne.s32.totalorder %s62, %s63
    %p75 = scmp.eq.s32.totalorder %s18, 3
    %p76 = por %p74, %p75
    %p78 = scmp.ne.s32.totalorder %s63, %s77
    %p79 = scmp.eq.s32.totalorder %s18, 0
    %p80 = por %p78, %p79
    %s82 = sadd.s32 %s81, 1
    %p85 = scmp.eq.s32.totalorder %s12, 3
    %p86 = scmp.ne.s32.totalorder %s81, %s83
    %p87 = scmp.eq.s32.totalorder %s12, 0
    %p88 = por %p86, %p87
    %p89 = scmp.ne.s32.totalorder %s81, %s83
    %p90 = scmp.eq.s32.totalorder %s17, 3
    %p91 = por %p89, %p90
    %p92 = scmp.ne.s32.totalorder %s83, %s84
    %p93 = scmp.eq.s32.totalorder %s17, 0
    %p94 = por %p92, %p93
    %p95 = scmp.ne.s32.totalorder %s83, %s84
    %p96 = scmp.eq.s32.totalorder %s18, 3
    %p97 = por %p95, %p96
    %p99 = scmp.ne.s32.totalorder %s84, %s98
    %p100 = scmp.eq.s32.totalorder %s18, 0
    %p101 = por %p99, %p100
    %s103 = sadd.s32 %s102, 1
    %p106 = scmp.eq.s32.totalorder %s12, 3
    %p107 = scmp.ne.s32.totalorder %s102, %s104
    %p108 = scmp.eq.s32.totalorder %s12, 0
    %p109 = por %p107, %p108
    %p110 = scmp.ne.s32.totalorder %s102, %s104
    %p111 = scmp.eq.s32.totalorder %s17, 3
    %p112 = por %p110, %p111
    %p113 = scmp.ne.s32.totalorder %s104, %s105
    %p114 = scmp.eq.s32.totalorder %s17, 0
    %p115 = por %p113, %p114
    %p116 = scmp.ne.s32.totalorder %s104, %s105
    %p117 = scmp.eq.s32.totalorder %s18, 3
    %p118 = por %p116, %p117
    %p120 = scmp.ne.s32.totalorder %s105, %s119
    %p121 = scmp.eq.s32.totalorder %s18, 0
    %p122 = por %p120, %p121
    %s123 = ssub.s32 %s19, %s31
    %s124 = ssub.s32 %s20, %s27
    %s125 = sor.u32 %s123, %s124
    %p126 = scmp.eq.s32.totalorder %s125, 0
    %s128 = sadd.s32 %s127, 1
    %s129 = scalar_select %p126, %s127, %s128
    %p132 = pneg %p126
    %p133 = scmp.eq.s32.totalorder %s12, 3
    %p134 = por %p132, %p133
    %p135 = scmp.ne.s32.totalorder %s127, %s130
    %p136 = scmp.eq.s32.totalorder %s12, 0
    %p137 = por %p135, %p136
    %p138 = scmp.ne.s32.totalorder %s127, %s130
    %p139 = scmp.eq.s32.totalorder %s17, 3
    %p140 = por %p138, %p139
    %p141 = scmp.ne.s32.totalorder %s130, %s131
    %p142 = scmp.eq.s32.totalorder %s17, 0
    %p143 = por %p141, %p142
    %p144 = scmp.ne.s32.totalorder %s130, %s131
    %p145 = scmp.eq.s32.totalorder %s18, 3
    %p146 = por %p144, %p145
    %p148 = scmp.ne.s32.totalorder %s131, %s147
    %p149 = scmp.eq.s32.totalorder %s18, 0
    %p150 = por %p148, %p149
    %s151 = ssub.s32 %s19, %s31
    %s152 = ssub.s32 %s20, %s27
    %s153 = sor.u32 %s151, %s152
    %p154 = scmp.eq.s32.totalorder %s153, 0
    %s156 = sadd.s32 %s155, 1
    %s157 = scalar_select %p154, %s155, %s156
    %p160 = pneg %p154
    %p161 = scmp.eq.s32.totalorder %s12, 3
    %p162 = por %p160, %p161
    %p163 = scmp.ne.s32.totalorder %s155, %s158
    %p164 = scmp.eq.s32.totalorder %s12, 0
    %p165 = por %p163, %p164
    %p166 = scmp.ne.s32.totalorder %s155, %s158
    %p167 = scmp.eq.s32.totalorder %s17, 3
    %p168 = por %p166, %p167
    %p169 = scmp.ne.s32.totalorder %s158, %s159
    %p170 = scmp.eq.s32.totalorder %s17, 0
    %p171 = por %p169, %p170
    %p172 = scmp.ne.s32.totalorder %s158, %s159
    %p173 = scmp.eq.s32.totalorder %s18, 3
    %p174 = por %p172, %p173
    %p176 = scmp.ne.s32.totalorder %s159, %s175
    %p177 = scmp.eq.s32.totalorder %s18, 0
    %p178 = por %p176, %p177
    %p179 = scmp.le.s32.totalorder 1, %s12
    %p180 = scmp.lt.s32.totalorder %s12, 5
    %p181 = pnand %p179, %p180
    %p182 = pneg %p181
    // Predicated region
    $region9: #{bottleneck_forward_nhwc.6} parent=5 // pred_check
      _
    $region10: #{bottleneck_forward_nhwc.6} parent=5 // pred_check_branch
      %184 = sbr.rel (%p181) target = $region12
    $region11: #{bottleneck_forward_nhwc.6} parent=5 // pred_region
      %s185 = ssub.s32 %s12, 1
      // Predicated region
      $region13: #{bottleneck_forward_nhwc.6} parent=11 // pred_check
        %p186 = pneg %p73
      $region14: #{bottleneck_forward_nhwc.6} parent=11 // pred_check_branch
        %188 = sbr.rel (%p186) target = $region16
      $region15: #{bottleneck_forward_nhwc.6} parent=11 // pred_region
        _
      $region16: #{bottleneck_forward_nhwc.6} parent=11 // pred_fallthru
        _
      // Predicated region
      $region17: #{bottleneck_forward_nhwc.6} parent=11 // pred_check
        %p189 = pneg %p94
      $region18: #{bottleneck_forward_nhwc.6} parent=11 // pred_check_branch
        %191 = sbr.rel (%p189) target = $region20
      $region19: #{bottleneck_forward_nhwc.6} parent=11 // pred_region
        _
      $region20: #{bottleneck_forward_nhwc.6} parent=11 // pred_fallthru
        _
      // Predicated region
      $region21: #{bottleneck_forward_nhwc.6} parent=11 // pred_check
        %p192 = pneg %p115
      $region22: #{bottleneck_forward_nhwc.6} parent=11 // pred_check_branch
        %194 = sbr.rel (%p192) target = $region24
      $region23: #{bottleneck_forward_nhwc.6} parent=11 // pred_region
        _
      $region24: #{bottleneck_forward_nhwc.6} parent=11 // pred_fallthru
        _
    $region12: #{bottleneck_forward_nhwc.6} parent=5 // pred_fallthru
      _
    %p195 = scmp.lt.s32.totalorder %s12, 4
    // Predicated region
    $region25: #{bottleneck_forward_nhwc.6} parent=5 // pred_check
      %p196 = pneg %p195
    $region26: #{bottleneck_forward_nhwc.6} parent=5 // pred_check_branch
      %198 = sbr.rel (%p196) target = $region28
    $region27: #{bottleneck_forward_nhwc.6} parent=5 // pred_region
      // Predicated region
      $region29: #{bottleneck_forward_nhwc.6} parent=27 // pred_check
        %p199 = pneg %p46
      $region30: #{bottleneck_forward_nhwc.6} parent=27 // pred_check_branch
        %201 = sbr.rel (%p199) target = $region32
      $region31: #{bottleneck_forward_nhwc.6} parent=27 // pred_region
        %s202 = smul.u32 8, %s20
        %p203 = scmp.lt.s32.totalorder %s19, 1
        %s204 = scalar_select %p203, %s19, 1
        %p205 = scmp.lt.s32.totalorder %s202, 15
        %s206 = scalar_select %p205, %s202, 15
        %s207 = smul.addr %s206, 2
        %s208 = smul.addr %s204, 32
        %s209 = sadd.s32 %s207, %s208
        %s210 = smul.addr %s209, 8
        %s211 = scalar_lea.vmem %s0, %s210
        %s212 = smul.u32 8, %s20
      $region32: #{bottleneck_forward_nhwc.6} parent=27 // pred_fallthru
        _
    $region28: #{bottleneck_forward_nhwc.6} parent=5 // pred_fallthru
      _
    %p213 = scmp.le.s32.totalorder 1, %s12
    %p214 = scmp.lt.s32.totalorder %s12, 5
    %p215 = pnand %p213, %p214
    %p216 = pneg %p215
    // Predicated region
    $region33: #{bottleneck_forward_nhwc.6} parent=5 // pred_check
      _
    $region34: #{bottleneck_forward_nhwc.6} parent=5 // pred_check_branch
      %218 = sbr.rel (%p215) target = $region36
    $region35: #{bottleneck_forward_nhwc.6} parent=5 // pred_region
      %s219 = ssub.s32 %s12, 1
      %s220 = smul.u32 8, %s22
      %p221 = scmp.lt.s32.totalorder %s21, 1
      %s222 = scalar_select %p221, %s21, 1
      %p223 = scmp.lt.s32.totalorder %s220, 15
      %s224 = scalar_select %p223, %s220, 15
      %s225 = smul.addr %s224, 2
      %s226 = smul.addr %s222, 32
      %s227 = sadd.s32 %s225, %s226
      %s228 = smul.addr %s227, 8
      %s229 = scalar_lea.vmem %s0, %s228
      %p230 = pneg %p52
      %p231 = pneg %p49
      %p232 = pneg %p73
      %p233 = pneg %p70
      %p234 = pneg %p94
      %p235 = pneg %p91
      %p236 = pneg %p115
      %p237 = pneg %p112
      %p238 = pneg %p143
      %p239 = pneg %p140
      %s240 = smul.u32 8, %s22
      %p241 = scmp.lt.s32.totalorder %s21, 1
      %s242 = scalar_select %p241, %s21, 1
      %p243 = scmp.lt.s32.totalorder %s240, 15
      %s244 = scalar_select %p243, %s240, 15
      %s245 = smul.addr %s244, 2
      %s246 = smul.addr %s242, 32
      %s247 = sadd.s32 %s245, %s246
      %s248 = smul.addr %s247, 8
      %s249 = scalar_lea.vmem %s4, %s248
      %p250 = pneg %p171
      %p251 = pneg %p168
      %p252 = scmp.lt.s32.totalorder %s21, 1
      %s253 = scalar_select %p252, %s21, 1
      %p254 = scmp.lt.s32.totalorder %s22, 1
      %s255 = scalar_select %p254, %s22, 1
      %s256 = smul.addr %s253, 2
      %s257 = sadd.s32 %s255, %s256
      %s258 = smul.addr %s257, 2
      %s259 = scalar_lea.vmem %s5, %s258
      %s260 = smul.u32 8, %s22
      %p261 = scmp.lt.s32.totalorder %s21, 1
      %s262 = scalar_select %p261, %s21, 1
      %p263 = scmp.lt.s32.totalorder %s260, 15
      %s264 = scalar_select %p263, %s260, 15
      %s265 = smul.addr %s264, 2
      %s266 = smul.addr %s262, 32
      %s267 = sadd.s32 %s265, %s266
      %s268 = smul.addr %s267, 8
      %s269 = scalar_lea.vmem %s0, %s268
      %s270 = smul.u32 8, %s22
      %s271 = smul.u32 8, %s22
      %p272 = scmp.lt.s32.totalorder %s21, 1
      %s273 = scalar_select %p272, %s21, 1
      %p274 = scmp.lt.s32.totalorder %s271, 15
      %s275 = scalar_select %p274, %s271, 15
      %s276 = smul.addr %s275, 2
      %s277 = smul.addr %s273, 32
      %s278 = sadd.s32 %s276, %s277
      %s279 = smul.addr %s278, 8
      %s280 = scalar_lea.vmem %s4, %s279
      %s281 = smul.u32 8, %s22
      %p282 = scmp.lt.s32.totalorder %s21, 1
      %s283 = scalar_select %p282, %s21, 1
      %p284 = scmp.lt.s32.totalorder %s22, 1
      %s285 = scalar_select %p284, %s22, 1
      %s286 = smul.addr %s283, 2
      %s287 = sadd.s32 %s285, %s286
      %s288 = smul.addr %s287, 2
      %s289 = scalar_lea.vmem %s5, %s288
      %v290 = vld [vmem:[%s269] sm:$0xff]
      %v291 = vld [vmem:[%s269 + $0x8] sm:$0xff]
      %v292 = vld [vmem:[%s269 + $0x10] sm:$0xff]
      %v293 = vld [vmem:[%s269 + $0x18] sm:$0xff]
      %v294 = vld [vmem:[%s269 + $0x20] sm:$0xff]
      %v295 = vld [vmem:[%s269 + $0x28] sm:$0xff]
      %v296 = vld [vmem:[%s269 + $0x30] sm:$0xff]
      %v297 = vld [vmem:[%s269 + $0x38] sm:$0xff]
      %v298 = vld [vmem:[%s269 + $0x40] sm:$0xff]
      %v299 = vld [vmem:[%s269 + $0x48] sm:$0xff]
      %v300 = vld [vmem:[%s269 + $0x50] sm:$0xff]
      %v301 = vld [vmem:[%s269 + $0x58] sm:$0xff]
      %v302 = vld [vmem:[%s269 + $0x60] sm:$0xff]
      %v303 = vld [vmem:[%s269 + $0x68] sm:$0xff]
      %v304 = vld [vmem:[%s269 + $0x70] sm:$0xff]
      %v305 = vld [vmem:[%s269 + $0x78] sm:$0xff]
      %v306 = vld [vmem:[%s1] sm:$0x1]
      %v308 = vlaneseq
      %v309 = vshrl.u32 %v308, 7
      %v310 = vsub.s32 0, %v309
      %v311 = vrot.slane %v306, %v310
      %v313 = vmul.f32 %v290, %v311
      %v314 = vmul.f32 %v291, %v311
      %v315 = vmul.f32 %v292, %v311
      %v316 = vmul.f32 %v293, %v311
      %v317 = vmul.f32 %v294, %v311
      %v318 = vmul.f32 %v295, %v311
      %v319 = vmul.f32 %v296, %v311
      %v320 = vmul.f32 %v297, %v311
      %v321 = vmul.f32 %v298, %v311
      %v322 = vmul.f32 %v299, %v311
      %v323 = vmul.f32 %v300, %v311
      %v324 = vmul.f32 %v301, %v311
      %v325 = vmul.f32 %v302, %v311
      %v326 = vmul.f32 %v303, %v311
      %v327 = vmul.f32 %v304, %v311
      %v328 = vmul.f32 %v305, %v311
      %v329 = vld [vmem:[%s2] sm:$0x1]
      %v331 = vlaneseq
      %v332 = vshrl.u32 %v331, 7
      %v333 = vsub.s32 0, %v332
      %v334 = vrot.slane %v329, %v333
      %v336 = vadd.f32 %v313, %v334
      %v337 = vadd.f32 %v314, %v334
      %v338 = vadd.f32 %v315, %v334
      %v339 = vadd.f32 %v316, %v334
      %v340 = vadd.f32 %v317, %v334
      %v341 = vadd.f32 %v318, %v334
      %v342 = vadd.f32 %v319, %v334
      %v343 = vadd.f32 %v320, %v334
      %v344 = vadd.f32 %v321, %v334
      %v345 = vadd.f32 %v322, %v334
      %v346 = vadd.f32 %v323, %v334
      %v347 = vadd.f32 %v324, %v334
      %v348 = vadd.f32 %v325, %v334
      %v349 = vadd.f32 %v326, %v334
      %v350 = vadd.f32 %v327, %v334
      %v351 = vadd.f32 %v328, %v334
      %v352 = vmax.f32 %v336, 0.0
      %v353 = vmax.f32 %v337, 0.0
      %v354 = vmax.f32 %v338, 0.0
      %v355 = vmax.f32 %v339, 0.0
      %v356 = vmax.f32 %v340, 0.0
      %v357 = vmax.f32 %v341, 0.0
      %v358 = vmax.f32 %v342, 0.0
      %v359 = vmax.f32 %v343, 0.0
      %v360 = vmax.f32 %v344, 0.0
      %v361 = vmax.f32 %v345, 0.0
      %v362 = vmax.f32 %v346, 0.0
      %v363 = vmax.f32 %v347, 0.0
      %v364 = vmax.f32 %v348, 0.0
      %v365 = vmax.f32 %v349, 0.0
      %v366 = vmax.f32 %v350, 0.0
      %v367 = vmax.f32 %v351, 0.0
      %v368 = vld [vmem:[%s3] sm:$0xf]
      %vm369 = vcmask 31744
      %v371 = vsel %vm369, %v352, 0
      %v374 = vsel %vm369, %v353, 0
      %v377 = vsel %vm369, %v354, 0
      %v380 = vsel %vm369, %v355, 0
      %v383 = vsel %vm369, %v356, 0
      %v386 = vsel %vm369, %v357, 0
      %v389 = vsel %vm369, %v358, 0
      %v392 = vsel %vm369, %v359, 0
      %v395 = vsel %vm369, %v360, 0
      %v398 = vsel %vm369, %v361, 0
      %v401 = vsel %vm369, %v362, 0
      %v404 = vsel %vm369, %v363, 0
      %v407 = vsel %vm369, %v364, 0
      %v410 = vsel %vm369, %v365, 0
      %v413 = vsel %vm369, %v366, 0
      %v416 = vsel %vm369, %v367, 0
      %vm418 = vcmask 1043456
      %v420 = vsel %vm418, %v368, 0
      %422 = vmatprep.subr.mxu0 0.0
      %423 = vmatpush1.msra.mxu0 %v420
      %424 = vmatprep.subr.mxu0 0.0
      %425 = vmatpush1.msra.mxu0 0.0
      %426 = vmatprep.subr.mxu0 0.0
      %427 = vmatpush1.msra.mxu0 0.0
      %428 = vmatprep.subr.mxu0 0.0
      %429 = vmatpush1.msra.mxu0 0.0
      %430 = vmatprep.subr.mxu0 0.0
      %431 = vmatpush1.msra.mxu0 0.0
      %432 = vmatprep.subr.mxu0 0.0
      %433 = vmatpush1.msra.mxu0 0.0
      %434 = vmatprep.subr.mxu0 0.0
      %435 = vmatpush1.msra.mxu0 0.0
      %436 = vmatprep.subr.mxu0 0.0
      %437 = vmatpush1.msra.mxu0 0.0
      %438 = vmatprep.subr.mxu0 0.0
      %439 = vmatpush1.msra.mxu0 0.0
      %440 = vmatprep.subr.mxu0 0.0
      %441 = vmatpush1.msra.mxu0 0.0
      %442 = vmatprep.subr.mxu0 0.0
      %443 = vmatpush1.msra.mxu0 0.0
      %444 = vmatprep.subr.mxu0 0.0
      %445 = vmatpush1.msra.mxu0 0.0
      %446 = vmatprep.subr.mxu0 0.0
      %447 = vmatpush1.msra.mxu0 0.0
      %448 = vmatprep.subr.mxu0 0.0
      %449 = vmatpush1.msra.mxu0 0.0
      %450 = vmatprep.subr.mxu0 0.0
      %451 = vmatpush1.msra.mxu0 0.0
      %452 = vmatprep.subr.mxu0 0.0
      %453 = vmatpush1.msra.mxu0 0.0
      %454 = vmatprep.subr.mxu0 0.0
      %455 = vmatpush1.msra.mxu0 0.0
      %456 = vmatprep.subr.mxu0 0.0
      %457 = vmatpush1.msra.mxu0 0.0
      %458 = vmatprep.subr.mxu0 0.0
      %459 = vmatpush1.msra.mxu0 0.0
      %460 = vmatprep.subr.mxu0 0.0
      %461 = vmatpush1.msra.mxu0 0.0
      %462 = vmatprep.subr.mxu0 0.0
      %463 = vmatpush1.msra.mxu0 0.0
      %464 = vmatprep.subr.mxu0 0.0
      %465 = vmatpush1.msra.mxu0 0.0
      %466 = vmatprep.subr.mxu0 0.0
      %467 = vmatpush1.msra.mxu0 0.0
      %468 = vmatprep.subr.mxu0 0.0
      %469 = vmatpush1.msra.mxu0 0.0
      %470 = vmatprep.subr.mxu0 0.0
      %471 = vmatpush1.msra.mxu0 0.0
      %472 = vmatprep.subr.mxu0 0.0
      %473 = vmatpush1.msra.mxu0 0.0
      %474 = vmatprep.subr.mxu0 0.0
      %475 = vmatpush1.msra.mxu0 0.0
      %476 = vmatprep.subr.mxu0 0.0
      %477 = vmatpush1.msra.mxu0 0.0
      %478 = vmatprep.subr.mxu0 0.0
      %479 = vmatpush1.msra.mxu0 0.0
      %480 = vmatprep.subr.mxu0 0.0
      %481 = vmatpush1.msra.mxu0 0.0
      %482 = vmatprep.subr.mxu0 0.0
      %483 = vmatpush1.msra.mxu0 0.0
      %484 = vmatprep.subr.mxu0 0.0
      %485 = vmatpush1.msra.mxu0 0.0
      %486 = vmatprep.mubr.f32.mxu0 0.0
      %487 = vmatmul.mubr.f32.gmra.mrb[0].mxu0 %v371
      %v488 = vpop.f32.mrb[0].mxu0
      %v489 = vadd.f32 0.0, %v488
      %v490 = vpop.f32.mrb[0].mxu0
      %491 = vmatprep.mubr.f32.mxu0 0.0
      %492 = vmatmul.mubr.f32.gmra.mrb[0].mxu0 %v374
      %v493 = vpop.f32.mrb[0].mxu0
      %v494 = vadd.f32 0.0, %v493
      %v495 = vpop.f32.mrb[0].mxu0
      %496 = vmatprep.mubr.f32.mxu0 0.0
      %497 = vmatmul.mubr.f32.gmra.mrb[0].mxu0 %v377
      %v498 = vpop.f32.mrb[0].mxu0
      %v499 = vadd.f32 0.0, %v498
      %v500 = vpop.f32.mrb[0].mxu0
      %501 = vmatprep.mubr.f32.mxu0 0.0
      %502 = vmatmul.mubr.f32.gmra.mrb[0].mxu0 %v380
      %v503 = vpop.f32.mrb[0].mxu0
      %v504 = vadd.f32 0.0, %v503
      %v505 = vpop.f32.mrb[0].mxu0
      %506 = vmatprep.mubr.f32.mxu0 0.0
      %507 = vmatmul.mubr.f32.gmra.mrb[0].mxu0 %v383
      %v508 = vpop.f32.mrb[0].mxu0
      %v509 = vadd.f32 0.0, %v508
      %v510 = vpop.f32.mrb[0].mxu0
      %511 = vmatprep.mubr.f32.mxu0 0.0
      %512 = vmatmul.mubr.f32.gmra.mrb[0].mxu0 %v386
      %v513 = vpop.f32.mrb[0].mxu0
      %v514 = vadd.f32 0.0, %v513
      %v515 = vpop.f32.mrb[0].mxu0
      %516 = vmatprep.mubr.f32.mxu0 0.0
      %517 = vmatmul.mubr.f32.gmra.mrb[0].mxu0 %v389
      %v518 = vpop.f32.mrb[0].mxu0
      %v519 = vadd.f32 0.0, %v518
      %v520 = vpop.f32.mrb[0].mxu0
      %521 = vmatprep.mubr.f32.mxu0 0.0
      %522 = vmatmul.mubr.f32.gmra.mrb[0].mxu0 %v392
      %v523 = vpop.f32.mrb[0].mxu0
      %v524 = vadd.f32 0.0, %v523
      %v525 = vpop.f32.mrb[0].mxu0
      %526 = vmatprep.mubr.f32.mxu0 0.0
      %527 = vmatmul.mubr.f32.gmra.mrb[0].mxu0 %v395
      %v528 = vpop.f32.mrb[0].mxu0
      %v529 = vadd.f32 0.0, %v528
      %v530 = vpop.f32.mrb[0].mxu0
      %531 = vmatprep.mubr.f32.mxu0 0.0
      %532 = vmatmul.mubr.f32.gmra.mrb[0].mxu0 %v398
      %v533 = vpop.f32.mrb[0].mxu0
      %v534 = vadd.f32 0.0, %v533
      %v535 = vpop.f32.mrb[0].mxu0
      %536 = vmatprep.mubr.f32.mxu0 0.0
      %537 = vmatmul.mubr.f32.gmra.mrb[0].mxu0 %v401
      %v538 = vpop.f32.mrb[0].mxu0
      %v539 = vadd.f32 0.0, %v538
      %v540 = vpop.f32.mrb[0].mxu0
      %541 = vmatprep.mubr.f32.mxu0 0.0
      %542 = vmatmul.mubr.f32.gmra.mrb[0].mxu0 %v404
      %v543 = vpop.f32.mrb[0].mxu0
      %v544 = vadd.f32 0.0, %v543
      %v545 = vpop.f32.mrb[0].mxu0
      %546 = vmatprep.mubr.f32.mxu0 0.0
      %547 = vmatmul.mubr.f32.gmra.mrb[0].mxu0 %v407
      %v548 = vpop.f32.mrb[0].mxu0
      %v549 = vadd.f32 0.0, %v548
      %v550 = vpop.f32.mrb[0].mxu0
      %551 = vmatprep.mubr.f32.mxu0 0.0
      %552 = vmatmul.mubr.f32.gmra.mrb[0].mxu0 %v410
      %v553 = vpop.f32.mrb[0].mxu0
      %v554 = vadd.f32 0.0, %v553
      %v555 = vpop.f32.mrb[0].mxu0
      %556 = vmatprep.mubr.f32.mxu0 0.0
      %557 = vmatmul.mubr.f32.gmra.mrb[0].mxu0 %v413
      %v558 = vpop.f32.mrb[0].mxu0
      %v559 = vadd.f32 0.0, %v558
      %v560 = vpop.f32.mrb[0].mxu0
      %561 = vmatprep.mubr.f32.mxu0 0.0
      %562 = vmatmul.mubr.f32.gmra.mrb[0].mxu0 %v416
      %v563 = vpop.f32.mrb[0].mxu0
      %v564 = vadd.f32 0.0, %v563
      %v565 = vpop.f32.mrb[0].mxu0
      %566 = vdwg.mxu0
      %vm567 = vcmask 130048
      %568 = vst.msk [vmem:[%s280] sm:$0xff] %vm567, %v489
      %569 = vst.msk [vmem:[%s280 + $0x8] sm:$0xff] %vm567, %v494
      %570 = vst.msk [vmem:[%s280 + $0x10] sm:$0xff] %vm567, %v499
      %571 = vst.msk [vmem:[%s280 + $0x18] sm:$0xff] %vm567, %v504
      %572 = vst.msk [vmem:[%s280 + $0x20] sm:$0xff] %vm567, %v509
      %573 = vst.msk [vmem:[%s280 + $0x28] sm:$0xff] %vm567, %v514
      %574 = vst.msk [vmem:[%s280 + $0x30] sm:$0xff] %vm567, %v519
      %575 = vst.msk [vmem:[%s280 + $0x38] sm:$0xff] %vm567, %v524
      %576 = vst.msk [vmem:[%s280 + $0x40] sm:$0xff] %vm567, %v529
      %577 = vst.msk [vmem:[%s280 + $0x48] sm:$0xff] %vm567, %v534
      %578 = vst.msk [vmem:[%s280 + $0x50] sm:$0xff] %vm567, %v539
      %579 = vst.msk [vmem:[%s280 + $0x58] sm:$0xff] %vm567, %v544
      %580 = vst.msk [vmem:[%s280 + $0x60] sm:$0xff] %vm567, %v549
      %581 = vst.msk [vmem:[%s280 + $0x68] sm:$0xff] %vm567, %v554
      %582 = vst.msk [vmem:[%s280 + $0x70] sm:$0xff] %vm567, %v559
      %583 = vst.msk [vmem:[%s280 + $0x78] sm:$0xff] %vm567, %v564
      %v584 = vsel %vm567, %v489, 0.0
      %v585 = vsel %vm567, %v494, 0.0
      %v586 = vadd.f32 %v584, %v585
      %v587 = vsel %vm567, %v499, 0.0
      %v588 = vadd.f32 %v586, %v587
      %v589 = vsel %vm567, %v504, 0.0
      %v590 = vadd.f32 %v588, %v589
      %v591 = vsel %vm567, %v509, 0.0
      %v592 = vadd.f32 %v590, %v591
      %v593 = vsel %vm567, %v514, 0.0
      %v594 = vadd.f32 %v592, %v593
      %v595 = vsel %vm567, %v519, 0.0
      %v596 = vadd.f32 %v594, %v595
      %v597 = vsel %vm567, %v524, 0.0
      %v598 = vadd.f32 %v596, %v597
      %v599 = vsel %vm567, %v529, 0.0
      %v600 = vadd.f32 %v598, %v599
      %v601 = vsel %vm567, %v534, 0.0
      %v602 = vadd.f32 %v600, %v601
      %v603 = vsel %vm567, %v539, 0.0
      %v604 = vadd.f32 %v602, %v603
      %v605 = vsel %vm567, %v544, 0.0
      %v606 = vadd.f32 %v604, %v605
      %v607 = vsel %vm567, %v549, 0.0
      %v608 = vadd.f32 %v606, %v607
      %v609 = vsel %vm567, %v554, 0.0
      %v610 = vadd.f32 %v608, %v609
      %v611 = vsel %vm567, %v559, 0.0
      %v612 = vadd.f32 %v610, %v611
      %v613 = vsel %vm567, %v564, 0.0
      %v614 = vadd.f32 %v612, %v613
      %v615 = vrot.slane %v614, 4
      %v616 = vadd.f32 %v614, %v615
      %v617 = vrot.slane %v616, 2
      %v618 = vadd.f32 %v616, %v617
      %v619 = vrot.slane %v618, 1
      %v620 = vadd.f32 %v618, %v619
      %v621 = vmul.f32 %v489, %v489
      %v622 = vmul.f32 %v494, %v494
      %v623 = vmul.f32 %v499, %v499
      %v624 = vmul.f32 %v504, %v504
      %v625 = vmul.f32 %v509, %v509
      %v626 = vmul.f32 %v514, %v514
      %v627 = vmul.f32 %v519, %v519
      %v628 = vmul.f32 %v524, %v524
      %v629 = vmul.f32 %v529, %v529
      %v630 = vmul.f32 %v534, %v534
      %v631 = vmul.f32 %v539, %v539
      %v632 = vmul.f32 %v544, %v544
      %v633 = vmul.f32 %v549, %v549
      %v634 = vmul.f32 %v554, %v554
      %v635 = vmul.f32 %v559, %v559
      %v636 = vmul.f32 %v564, %v564
      %v637 = vsel %vm567, %v621, 0.0
      %v638 = vsel %vm567, %v622, 0.0
      %v639 = vadd.f32 %v637, %v638
      %v640 = vsel %vm567, %v623, 0.0
      %v641 = vadd.f32 %v639, %v640
      %v642 = vsel %vm567, %v624, 0.0
      %v643 = vadd.f32 %v641, %v642
      %v644 = vsel %vm567, %v625, 0.0
      %v645 = vadd.f32 %v643, %v644
      %v646 = vsel %vm567, %v626, 0.0
      %v647 = vadd.f32 %v645, %v646
      %v648 = vsel %vm567, %v627, 0.0
      %v649 = vadd.f32 %v647, %v648
      %v650 = vsel %vm567, %v628, 0.0
      %v651 = vadd.f32 %v649, %v650
      %v652 = vsel %vm567, %v629, 0.0
      %v653 = vadd.f32 %v651, %v652
      %v654 = vsel %vm567, %v630, 0.0
      %v655 = vadd.f32 %v653, %v654
      %v656 = vsel %vm567, %v631, 0.0
      %v657 = vadd.f32 %v655, %v656
      %v658 = vsel %vm567, %v632, 0.0
      %v659 = vadd.f32 %v657, %v658
      %v660 = vsel %vm567, %v633, 0.0
      %v661 = vadd.f32 %v659, %v660
      %v662 = vsel %vm567, %v634, 0.0
      %v663 = vadd.f32 %v661, %v662
      %v664 = vsel %vm567, %v635, 0.0
      %v665 = vadd.f32 %v663, %v664
      %v666 = vsel %vm567, %v636, 0.0
      %v667 = vadd.f32 %v665, %v666
      %v668 = vrot.slane %v667, 4
      %v669 = vadd.f32 %v667, %v668
      %v670 = vrot.slane %v669, 2
      %v671 = vadd.f32 %v669, %v670
      %v672 = vrot.slane %v671, 1
      %v673 = vadd.f32 %v671, %v672
      %vm674 = vcmask 1040384
      %v675 = vsel %vm674, %v620, %v673
      %vm676 = vcmask 123904
      %677 = vst.msk [vmem:[%s289] sm:$0x3] %vm676, %v675
      %s678 = smul.u32 8, %s22
      %p679 = scmp.lt.s32.totalorder %s21, 1
      %s680 = scalar_select %p679, %s21, 1
      %p681 = scmp.lt.s32.totalorder %s678, 15
      %s682 = scalar_select %p681, %s678, 15
      %s683 = smul.addr %s682, 2
      %s684 = smul.addr %s680, 32
      %s685 = sadd.s32 %s683, %s684
      %s686 = smul.addr %s685, 8
      %s687 = scalar_lea.vmem %s4, %s686
      %p688 = scmp.lt.s32.totalorder %s21, 1
      %s689 = scalar_select %p688, %s21, 1
      %p690 = scmp.lt.s32.totalorder %s22, 1
      %s691 = scalar_select %p690, %s22, 1
      %s692 = smul.addr %s689, 2
      %s693 = sadd.s32 %s691, %s692
      %s694 = smul.addr %s693, 2
      %s695 = scalar_lea.vmem %s5, %s694
      // Predicated region
      $region37: #{bottleneck_forward_nhwc.6} parent=35 // pred_check
        %p696 = pneg %p140
      $region38: #{bottleneck_forward_nhwc.6} parent=35 // pred_check_branch
        %698 = sbr.rel (%p696) target = $region40
      $region39: #{bottleneck_forward_nhwc.6} parent=35 // pred_region
        %s699 = smul.u32 8, %s22
      $region40: #{bottleneck_forward_nhwc.6} parent=35 // pred_fallthru
        _
      // Predicated region
      $region41: #{bottleneck_forward_nhwc.6} parent=35 // pred_check
        %p700 = pneg %p168
      $region42: #{bottleneck_forward_nhwc.6} parent=35 // pred_check_branch
        %702 = sbr.rel (%p700) target = $region44
      $region43: #{bottleneck_forward_nhwc.6} parent=35 // pred_region
        _
      $region44: #{bottleneck_forward_nhwc.6} parent=35 // pred_fallthru
        _
    $region36: #{bottleneck_forward_nhwc.6} parent=5 // pred_fallthru
      _
    %p703 = scmp.le.s32.totalorder 2, %s12
    // Predicated region
    $region45: #{bottleneck_forward_nhwc.6} parent=5 // pred_check
      %p704 = pneg %p703
    $region46: #{bottleneck_forward_nhwc.6} parent=5 // pred_check_branch
      %706 = sbr.rel (%p704) target = $region48
    $region47: #{bottleneck_forward_nhwc.6} parent=5 // pred_region
      %s707 = ssub.s32 %s12, 2
      // Predicated region
      $region49: #{bottleneck_forward_nhwc.6} parent=47 // pred_check
        %p708 = pneg %p146
      $region50: #{bottleneck_forward_nhwc.6} parent=47 // pred_check_branch
        %710 = sbr.rel (%p708) target = $region52
      $region51: #{bottleneck_forward_nhwc.6} parent=47 // pred_region
        %s711 = smul.u32 8, %s24
        %p712 = scmp.lt.s32.totalorder %s23, 1
        %s713 = scalar_select %p712, %s23, 1
        %p714 = scmp.lt.s32.totalorder %s711, 15
        %s715 = scalar_select %p714, %s711, 15
        %s716 = smul.addr %s715, 2
        %s717 = smul.addr %s713, 32
        %s718 = sadd.s32 %s716, %s717
        %s719 = smul.addr %s718, 8
        %s720 = scalar_lea.vmem %s4, %s719
      $region52: #{bottleneck_forward_nhwc.6} parent=47 // pred_fallthru
        _
      // Predicated region
      $region53: #{bottleneck_forward_nhwc.6} parent=47 // pred_check
        %p721 = pneg %p174
      $region54: #{bottleneck_forward_nhwc.6} parent=47 // pred_check_branch
        %723 = sbr.rel (%p721) target = $region56
      $region55: #{bottleneck_forward_nhwc.6} parent=47 // pred_region
        %p724 = scmp.lt.s32.totalorder %s23, 1
        %s725 = scalar_select %p724, %s23, 1
        %p726 = scmp.lt.s32.totalorder %s24, 1
        %s727 = scalar_select %p726, %s24, 1
        %s728 = smul.addr %s725, 2
        %s729 = sadd.s32 %s727, %s728
        %s730 = smul.addr %s729, 2
        %s731 = scalar_lea.vmem %s5, %s730
      $region56: #{bottleneck_forward_nhwc.6} parent=47 // pred_fallthru
        _
    $region48: #{bottleneck_forward_nhwc.6} parent=5 // pred_fallthru
      _
  $region6: #{bottleneck_forward_nhwc.6} parent=0 // loop_footer
    %s16 = sadd.s32 1, %s12
  $region7: #{bottleneck_forward_nhwc.6} parent=0 // loop_footer_branch
    %11 = sbr.rel target = $region3
  $region8: #{bottleneck_forward_nhwc.6} parent=0 // loop_exit
    _

// kernel: bottleneck_forward_nhwc.5
$region0: #{bottleneck_forward_nhwc.5}
  #allocation0 [shape = 'u32[]', space=smem, size = 0x4, offset = 0x4, fixed_abs, tag = 'smem constant byte address 0x4 - core index']
  #allocation1 [shape = 'u32[144,128]{1,0:T(1,128)}', space=vmem, size = 0x12000, scoped, tag = 'internal scratch']
  %s0 = inlined_call_operand.vmem [shape: f32[2,16,16,4], index: 0, kind: input, shape index: {}, may-alias: {0,1,2}]
  %s1 = inlined_call_operand.vmem [shape: f32[2,16,16,4], index: 1, kind: input, shape index: {}, may-alias: {0,1,2}]
  %s2 = inlined_call_operand.vmem [shape: f32[2,16,16,4], index: 2, kind: input, shape index: {}, may-alias: {0,1,2}]
  %s3 = inlined_call_operand.vmem [shape: f32[1,4], index: 3, kind: input, shape index: {}]
  %s4 = inlined_call_operand.vmem [shape: f32[1,4], index: 4, kind: input, shape index: {}]
  %s5 = inlined_call_operand.vmem [shape: f32[3,12,4], index: 5, kind: input, shape index: {}]
  %s6 = inlined_call_operand.vmem [shape: f32[2,16,16,4], index: 6, kind: output, shape index: {0}]
  %s7 = inlined_call_operand.vmem [shape: f32[2,2,2,4], index: 7, kind: output, shape index: {1}]
  %8 = xla_tuple %s6, %s7
  %s9 = sld [smem:[#allocation0]]
  $region65: #{bottleneck_forward_nhwc.5} parent=0
    _
  %s11 = ssub.s32 1, %s9
  %s12 = scalar_select 0, %s11, %s9
  loop: start=0, step=1, limit=6
  $region2: #{bottleneck_forward_nhwc.5} parent=0 // loop_pre_header
    _
  $region3: #{bottleneck_forward_nhwc.5} parent=0 // loop_header
    %s14 = sphi 0, %s18
    %p15 = scmp.ge.s32.totalorder %s14, 6
    %s21 = sphi 0, %s33
    %s22 = sphi 0, %s29
    %s23 = sphi 0, %s21
    %s24 = sphi 0, %s22
    %s25 = sphi 0, %s23
    %s26 = sphi 0, %s24
    %s38 = sphi 0, %s40
    %s41 = sphi 0, %s38
    %s42 = sphi 0, %s41
    %s58 = sphi 0, %s42
    %s74 = sphi 0, %s76
    %s77 = sphi 0, %s74
    %s78 = sphi 0, %s77
    %s94 = sphi 0, %s78
    %s110 = sphi 0, %s112
    %s113 = sphi 0, %s110
    %s114 = sphi 0, %s113
    %s130 = sphi 0, %s114
    %s134 = sphi 0, %s134
    %s136 = sphi 0, %s134
    %s137 = sphi 0, %s136
    %s151 = sphi 0, %s137
    %s155 = sphi 0, %s155
    %s157 = sphi 0, %s155
    %s158 = sphi 0, %s157
    %s172 = sphi 0, %s158
    %s176 = sphi 0, %s176
    %s178 = sphi 0, %s176
    %s179 = sphi 0, %s178
    %s193 = sphi 0, %s179
    %s201 = sphi 0, %s203
    %s204 = sphi 0, %s201
    %s205 = sphi 0, %s204
    %s221 = sphi 0, %s205
    %s229 = sphi 0, %s231
    %s232 = sphi 0, %s229
    %s233 = sphi 0, %s232
    %s249 = sphi 0, %s233
  $region4: #{bottleneck_forward_nhwc.5} parent=0 // loop_header_branch
    %17 = sbr.rel (%p15) target = $region8
  $region5: #{bottleneck_forward_nhwc.5} parent=0 // loop_body
    %s19 = ssub.s32 %s14, 1
    %s20 = ssub.s32 %s14, 2
    %s27 = sadd.s32 1, %s22
    %p28 = scmp.ge.s32.totalorder %s27, 2
    %s29 = scalar_select %p28, 0, %s27
    %s30 = sadd.s32 1, %s21
    %s31 = scalar_select %p28, %s30, %s21
    %p32 = scmp.ge.s32.totalorder %s31, 2
    %s33 = scalar_select %p32, 0, %s31
    %s34 = ssub.s32 %s21, %s33
    %s35 = ssub.s32 %s22, %s29
    %s36 = sor.u32 %s34, %s35
    %p37 = scmp.eq.s32.totalorder %s36, 0
    %s39 = sadd.s32 %s38, 1
    %s40 = scalar_select %p37, %s38, %s39
    %p43 = pneg %p37
    %p44 = scmp.eq.s32.totalorder %s14, 3
    %p45 = por %p43, %p44
    %p46 = scmp.ne.s32.totalorder %s38, %s41
    %p47 = scmp.eq.s32.totalorder %s14, 0
    %p48 = por %p46, %p47
    %p49 = scmp.ne.s32.totalorder %s38, %s41
    %p50 = scmp.eq.s32.totalorder %s19, 3
    %p51 = por %p49, %p50
    %p52 = scmp.ne.s32.totalorder %s41, %s42
    %p53 = scmp.eq.s32.totalorder %s19, 0
    %p54 = por %p52, %p53
    %p55 = scmp.ne.s32.totalorder %s41, %s42
    %p56 = scmp.eq.s32.totalorder %s20, 3
    %p57 = por %p55, %p56
    %p59 = scmp.ne.s32.totalorder %s42, %s58
    %p60 = scmp.eq.s32.totalorder %s20, 0
    %p61 = por %p59, %p60
    %s62 = smul.u32 %s22, 8
    %s63 = ssub.s32 %s62, 1
    %p64 = scmp.gt.s32.totalorder %s63, 0
    %s65 = scalar_select %p64, %s63, 0
    %s66 = smul.u32 %s29, 8
    %s67 = ssub.s32 %s66, 1
    %p68 = scmp.gt.s32.totalorder %s67, 0
    %s69 = scalar_select %p68, %s67, 0
    %s70 = ssub.s32 %s21, %s33
    %s71 = ssub.s32 %s65, %s69
    %s72 = sor.u32 %s70, %s71
    %p73 = scmp.eq.s32.totalorder %s72, 0
    %s75 = sadd.s32 %s74, 1
    %s76 = scalar_select %p73, %s74, %s75
    %p79 = pneg %p73
    %p80 = scmp.eq.s32.totalorder %s14, 3
    %p81 = por %p79, %p80
    %p82 = scmp.ne.s32.totalorder %s74, %s77
    %p83 = scmp.eq.s32.totalorder %s14, 0
    %p84 = por %p82, %p83
    %p85 = scmp.ne.s32.totalorder %s74, %s77
    %p86 = scmp.eq.s32.totalorder %s19, 3
    %p87 = por %p85, %p86
    %p88 = scmp.ne.s32.totalorder %s77, %s78
    %p89 = scmp.eq.s32.totalorder %s19, 0
    %p90 = por %p88, %p89
    %p91 = scmp.ne.s32.totalorder %s77, %s78
    %p92 = scmp.eq.s32.totalorder %s20, 3
    %p93 = por %p91, %p92
    %p95 = scmp.ne.s32.totalorder %s78, %s94
    %p96 = scmp.eq.s32.totalorder %s20, 0
    %p97 = por %p95, %p96
    %s98 = sadd.s32 %s22, 1
    %s99 = smul.u32 %s98, 8
    %p100 = scmp.lt.s32.totalorder %s99, 15
    %s101 = scalar_select %p100, %s99, 15
    %s102 = sadd.s32 %s29, 1
    %s103 = smul.u32 %s102, 8
    %p104 = scmp.lt.s32.totalorder %s103, 15
    %s105 = scalar_select %p104, %s103, 15
    %s106 = ssub.s32 %s21, %s33
    %s107 = ssub.s32 %s101, %s105
    %s108 = sor.u32 %s106, %s107
    %p109 = scmp.eq.s32.totalorder %s108, 0
    %s111 = sadd.s32 %s110, 1
    %s112 = scalar_select %p109, %s110, %s111
    %p115 = pneg %p109
    %p116 = scmp.eq.s32.totalorder %s14, 3
    %p117 = por %p115, %p116
    %p118 = scmp.ne.s32.totalorder %s110, %s113
    %p119 = scmp.eq.s32.totalorder %s14, 0
    %p120 = por %p118, %p119
    %p121 = scmp.ne.s32.totalorder %s110, %s113
    %p122 = scmp.eq.s32.totalorder %s19, 3
    %p123 = por %p121, %p122
    %p124 = scmp.ne.s32.totalorder %s113, %s114
    %p125 = scmp.eq.s32.totalorder %s19, 0
    %p126 = por %p124, %p125
    %p127 = scmp.ne.s32.totalorder %s113, %s114
    %p128 = scmp.eq.s32.totalorder %s20, 3
    %p129 = por %p127, %p128
    %p131 = scmp.ne.s32.totalorder %s114, %s130
    %p132 = scmp.eq.s32.totalorder %s20, 0
    %p133 = por %p131, %p132
    %s135 = sadd.s32 %s134, 1
    %p138 = scmp.eq.s32.totalorder %s14, 3
    %p139 = scmp.ne.s32.totalorder %s134, %s136
    %p140 = scmp.eq.s32.totalorder %s14, 0
    %p141 = por %p139, %p140
    %p142 = scmp.ne.s32.totalorder %s134, %s136
    %p143 = scmp.eq.s32.totalorder %s19, 3
    %p144 = por %p142, %p143
    %p145 = scmp.ne.s32.totalorder %s136, %s137
    %p146 = scmp.eq.s32.totalorder %s19, 0
    %p147 = por %p145, %p146
    %p148 = scmp.ne.s32.totalorder %s136, %s137
    %p149 = scmp.eq.s32.totalorder %s20, 3
    %p150 = por %p148, %p149
    %p152 = scmp.ne.s32.totalorder %s137, %s151
    %p153 = scmp.eq.s32.totalorder %s20, 0
    %p154 = por %p152, %p153
    %s156 = sadd.s32 %s155, 1
    %p159 = scmp.eq.s32.totalorder %s14, 3
    %p160 = scmp.ne.s32.totalorder %s155, %s157
    %p161 = scmp.eq.s32.totalorder %s14, 0
    %p162 = por %p160, %p161
    %p163 = scmp.ne.s32.totalorder %s155, %s157
    %p164 = scmp.eq.s32.totalorder %s19, 3
    %p165 = por %p163, %p164
    %p166 = scmp.ne.s32.totalorder %s157, %s158
    %p167 = scmp.eq.s32.totalorder %s19, 0
    %p168 = por %p166, %p167
    %p169 = scmp.ne.s32.totalorder %s157, %s158
    %p170 = scmp.eq.s32.totalorder %s20, 3
    %p171 = por %p169, %p170
    %p173 = scmp.ne.s32.totalorder %s158, %s172
    %p174 = scmp.eq.s32.totalorder %s20, 0
    %p175 = por %p173, %p174
    %s177 = sadd.s32 %s176, 1
    %p180 = scmp.eq.s32.totalorder %s14, 3
    %p181 = scmp.ne.s32.totalorder %s176, %s178
    %p182 = scmp.eq.s32.totalorder %s14, 0
    %p183 = por %p181, %p182
    %p184 = scmp.ne.s32.totalorder %s176, %s178
    %p185 = scmp.eq.s32.totalorder %s19, 3
    %p186 = por %p184, %p185
    %p187 = scmp.ne.s32.totalorder %s178, %s179
    %p188 = scmp.eq.s32.totalorder %s19, 0
    %p189 = por %p187, %p188
    %p190 = scmp.ne.s32.totalorder %s178, %s179
    %p191 = scmp.eq.s32.totalorder %s20, 3
    %p192 = por %p190, %p191
    %p194 = scmp.ne.s32.totalorder %s179, %s193
    %p195 = scmp.eq.s32.totalorder %s20, 0
    %p196 = por %p194, %p195
    %s197 = ssub.s32 %s21, %s33
    %s198 = ssub.s32 %s22, %s29
    %s199 = sor.u32 %s197, %s198
    %p200 = scmp.eq.s32.totalorder %s199, 0
    %s202 = sadd.s32 %s201, 1
    %s203 = scalar_select %p200, %s201, %s202
    %p206 = pneg %p200
    %p207 = scmp.eq.s32.totalorder %s14, 3
    %p208 = por %p206, %p207
    %p209 = scmp.ne.s32.totalorder %s201, %s204
    %p210 = scmp.eq.s32.totalorder %s14, 0
    %p211 = por %p209, %p210
    %p212 = scmp.ne.s32.totalorder %s201, %s204
    %p213 = scmp.eq.s32.totalorder %s19, 3
    %p214 = por %p212, %p213
    %p215 = scmp.ne.s32.totalorder %s204, %s205
    %p216 = scmp.eq.s32.totalorder %s19, 0
    %p217 = por %p215, %p216
    %p218 = scmp.ne.s32.totalorder %s204, %s205
    %p219 = scmp.eq.s32.totalorder %s20, 3
    %p220 = por %p218, %p219
    %p222 = scmp.ne.s32.totalorder %s205, %s221
    %p223 = scmp.eq.s32.totalorder %s20, 0
    %p224 = por %p222, %p223
    %s225 = ssub.s32 %s21, %s33
    %s226 = ssub.s32 %s22, %s29
    %s227 = sor.u32 %s225, %s226
    %p228 = scmp.eq.s32.totalorder %s227, 0
    %s230 = sadd.s32 %s229, 1
    %s231 = scalar_select %p228, %s229, %s230
    %p234 = pneg %p228
    %p235 = scmp.eq.s32.totalorder %s14, 3
    %p236 = por %p234, %p235
    %p237 = scmp.ne.s32.totalorder %s229, %s232
    %p238 = scmp.eq.s32.totalorder %s14, 0
    %p239 = por %p237, %p238
    %p240 = scmp.ne.s32.totalorder %s229, %s232
    %p241 = scmp.eq.s32.totalorder %s19, 3
    %p242 = por %p240, %p241
    %p243 = scmp.ne.s32.totalorder %s232, %s233
    %p244 = scmp.eq.s32.totalorder %s19, 0
    %p245 = por %p243, %p244
    %p246 = scmp.ne.s32.totalorder %s232, %s233
    %p247 = scmp.eq.s32.totalorder %s20, 3
    %p248 = por %p246, %p247
    %p250 = scmp.ne.s32.totalorder %s233, %s249
    %p251 = scmp.eq.s32.totalorder %s20, 0
    %p252 = por %p250, %p251
    %p253 = scmp.le.s32.totalorder 1, %s14
    %p254 = scmp.lt.s32.totalorder %s14, 5
    %p255 = pnand %p253, %p254
    %p256 = pneg %p255
    // Predicated region
    $region9: #{bottleneck_forward_nhwc.5} parent=5 // pred_check
      _
    $region10: #{bottleneck_forward_nhwc.5} parent=5 // pred_check_branch
      %258 = sbr.rel (%p255) target = $region12
    $region11: #{bottleneck_forward_nhwc.5} parent=5 // pred_region
      %s259 = ssub.s32 %s14, 1
      // Predicated region
      $region13: #{bottleneck_forward_nhwc.5} parent=11 // pred_check
        %p260 = pneg %p147
      $region14: #{bottleneck_forward_nhwc.5} parent=11 // pred_check_branch
        %262 = sbr.rel (%p260) target = $region16
      $region15: #{bottleneck_forward_nhwc.5} parent=11 // pred_region
        _
      $region16: #{bottleneck_forward_nhwc.5} parent=11 // pred_fallthru
        _
      // Predicated region
      $region17: #{bottleneck_forward_nhwc.5} parent=11 // pred_check
        %p263 = pneg %p168
      $region18: #{bottleneck_forward_nhwc.5} parent=11 // pred_check_branch
        %265 = sbr.rel (%p263) target = $region20
      $region19: #{bottleneck_forward_nhwc.5} parent=11 // pred_region
        _
      $region20: #{bottleneck_forward_nhwc.5} parent=11 // pred_fallthru
        _
      // Predicated region
      $region21: #{bottleneck_forward_nhwc.5} parent=11 // pred_check
        %p266 = pneg %p189
      $region22: #{bottleneck_forward_nhwc.5} parent=11 // pred_check_branch
        %268 = sbr.rel (%p266) target = $region24
      $region23: #{bottleneck_forward_nhwc.5} parent=11 // pred_region
        _
      $region24: #{bottleneck_forward_nhwc.5} parent=11 // pred_fallthru
        _
    $region12: #{bottleneck_forward_nhwc.5} parent=5 // pred_fallthru
      _
    %p269 = scmp.lt.s32.totalorder %s14, 4
    // Predicated region
    $region25: #{bottleneck_forward_nhwc.5} parent=5 // pred_check
      %p270 = pneg %p269
    $region26: #{bottleneck_forward_nhwc.5} parent=5 // pred_check_branch
      %272 = sbr.rel (%p270) target = $region28
    $region27: #{bottleneck_forward_nhwc.5} parent=5 // pred_region
      // Predicated region
      $region29: #{bottleneck_forward_nhwc.5} parent=27 // pred_check
        %p273 = pneg %p48
      $region30: #{bottleneck_forward_nhwc.5} parent=27 // pred_check_branch
        %275 = sbr.rel (%p273) target = $region32
      $region31: #{bottleneck_forward_nhwc.5} parent=27 // pred_region
        %s276 = smul.u32 8, %s22
        %p277 = scmp.lt.s32.totalorder %s21, 1
        %s278 = scalar_select %p277, %s21, 1
        %p279 = scmp.lt.s32.totalorder %s276, 15
        %s280 = scalar_select %p279, %s276, 15
        %s281 = smul.addr %s280, 2
        %s282 = smul.addr %s278, 32
        %s283 = sadd.s32 %s281, %s282
        %s284 = smul.addr %s283, 8
        %s285 = scalar_lea.vmem %s0, %s284
        %s286 = smul.u32 8, %s22
      $region32: #{bottleneck_forward_nhwc.5} parent=27 // pred_fallthru
        _
      // Predicated region
      $region33: #{bottleneck_forward_nhwc.5} parent=27 // pred_check
        %p287 = pneg %p84
      $region34: #{bottleneck_forward_nhwc.5} parent=27 // pred_check_branch
        %289 = sbr.rel (%p287) target = $region36
      $region35: #{bottleneck_forward_nhwc.5} parent=27 // pred_region
        %s290 = smul.u32 %s22, 8
        %s291 = ssub.s32 %s290, 1
        %p292 = scmp.gt.s32.totalorder %s291, 0
        %s293 = scalar_select %p292, %s291, 0
        %p294 = scmp.lt.s32.totalorder %s21, 1
        %s295 = scalar_select %p294, %s21, 1
        %p296 = scmp.lt.s32.totalorder %s293, 15
        %s297 = scalar_select %p296, %s293, 15
        %s298 = smul.addr %s297, 2
        %s299 = smul.addr %s295, 32
        %s300 = sadd.s32 %s298, %s299
        %s301 = smul.addr %s300, 8
        %s302 = scalar_lea.vmem %s1, %s301
        %s303 = smul.u32 %s22, 8
        %s304 = ssub.s32 %s303, 1
        %p305 = scmp.gt.s32.totalorder %s304, 0
        %s306 = scalar_select %p305, %s304, 0
      $region36: #{bottleneck_forward_nhwc.5} parent=27 // pred_fallthru
        _
      // Predicated region
      $region37: #{bottleneck_forward_nhwc.5} parent=27 // pred_check
        %p307 = pneg %p120
      $region38: #{bottleneck_forward_nhwc.5} parent=27 // pred_check_branch
        %309 = sbr.rel (%p307) target = $region40
      $region39: #{bottleneck_forward_nhwc.5} parent=27 // pred_region
        %s310 = sadd.s32 %s22, 1
        %s311 = smul.u32 %s310, 8
        %p312 = scmp.lt.s32.totalorder %s311, 15
        %s313 = scalar_select %p312, %s311, 15
        %p314 = scmp.lt.s32.totalorder %s21, 1
        %s315 = scalar_select %p314, %s21, 1
        %p316 = scmp.lt.s32.totalorder %s313, 15
        %s317 = scalar_select %p316, %s313, 15
        %s318 = smul.addr %s317, 2
        %s319 = smul.addr %s315, 32
        %s320 = sadd.s32 %s318, %s319
        %s321 = smul.addr %s320, 8
        %s322 = scalar_lea.vmem %s2, %s321
        %s323 = sadd.s32 %s22, 1
        %s324 = smul.u32 %s323, 8
        %p325 = scmp.lt.s32.totalorder %s324, 15
        %s326 = scalar_select %p325, %s324, 15
      $region40: #{bottleneck_forward_nhwc.5} parent=27 // pred_fallthru
        _
    $region28: #{bottleneck_forward_nhwc.5} parent=5 // pred_fallthru
      _
    %p327 = scmp.le.s32.totalorder 1, %s14
    %p328 = scmp.lt.s32.totalorder %s14, 5
    %p329 = pnand %p327, %p328
    %p330 = pneg %p329
    // Predicated region
    $region41: #{bottleneck_forward_nhwc.5} parent=5 // pred_check
      _
    $region42: #{bottleneck_forward_nhwc.5} parent=5 // pred_check_branch
      %332 = sbr.rel (%p329) target = $region44
    $region43: #{bottleneck_forward_nhwc.5} parent=5 // pred_region
      %s333 = ssub.s32 %s14, 1
      %s334 = smul.u32 8, %s24
      %p335 = scmp.lt.s32.totalorder %s23, 1
      %s336 = scalar_select %p335, %s23, 1
      %p337 = scmp.lt.s32.totalorder %s334, 15
      %s338 = scalar_select %p337, %s334, 15
      %s339 = smul.addr %s338, 2
      %s340 = smul.addr %s336, 32
      %s341 = sadd.s32 %s339, %s340
      %s342 = smul.addr %s341, 8
      %s343 = scalar_lea.vmem %s0, %s342
      %p344 = pneg %p54
      %p345 = pneg %p51
      %s346 = smul.u32 %s24, 8
      %s347 = ssub.s32 %s346, 1
      %p348 = scmp.gt.s32.totalorder %s347, 0
      %s349 = scalar_select %p348, %s347, 0
      %p350 = scmp.lt.s32.totalorder %s23, 1
      %s351 = scalar_select %p350, %s23, 1
      %p352 = scmp.lt.s32.totalorder %s349, 15
      %s353 = scalar_select %p352, %s349, 15
      %s354 = smul.addr %s353, 2
      %s355 = smul.addr %s351, 32
      %s356 = sadd.s32 %s354, %s355
      %s357 = smul.addr %s356, 8
      %s358 = scalar_lea.vmem %s1, %s357
      %p359 = pneg %p90
      %p360 = pneg %p87
      %s361 = sadd.s32 %s24, 1
      %s362 = smul.u32 %s361, 8
      %p363 = scmp.lt.s32.totalorder %s362, 15
      %s364 = scalar_select %p363, %s362, 15
      %p365 = scmp.lt.s32.totalorder %s23, 1
      %s366 = scalar_select %p365, %s23, 1
      %p367 = scmp.lt.s32.totalorder %s364, 15
      %s368 = scalar_select %p367, %s364, 15
      %s369 = smul.addr %s368, 2
      %s370 = smul.addr %s366, 32
      %s371 = sadd.s32 %s369, %s370
      %s372 = smul.addr %s371, 8
      %s373 = scalar_lea.vmem %s2, %s372
      %p374 = pneg %p126
      %p375 = pneg %p123
      %p376 = pneg %p147
      %p377 = pneg %p144
      %p378 = pneg %p168
      %p379 = pneg %p165
      %p380 = pneg %p189
      %p381 = pneg %p186
      %p382 = pneg %p217
      %p383 = pneg %p214
      %s384 = smul.u32 8, %s24
      %p385 = scmp.lt.s32.totalorder %s23, 1
      %s386 = scalar_select %p385, %s23, 1
      %p387 = scmp.lt.s32.totalorder %s384, 15
      %s388 = scalar_select %p387, %s384, 15
      %s389 = smul.addr %s388, 2
      %s390 = smul.addr %s386, 32
      %s391 = sadd.s32 %s389, %s390
      %s392 = smul.addr %s391, 8
      %s393 = scalar_lea.vmem %s6, %s392
      %p394 = pneg %p245
      %p395 = pneg %p242
      %p396 = scmp.lt.s32.totalorder %s23, 1
      %s397 = scalar_select %p396, %s23, 1
      %p398 = scmp.lt.s32.totalorder %s24, 1
      %s399 = scalar_select %p398, %s24, 1
      %s400 = smul.addr %s397, 2
      %s401 = sadd.s32 %s399, %s400
      %s402 = smul.addr %s401, 2
      %s403 = scalar_lea.vmem %s7, %s402
      %s404 = smul.u32 8, %s24
      %p405 = scmp.lt.s32.totalorder %s23, 1
      %s406 = scalar_select %p405, %s23, 1
      %p407 = scmp.lt.s32.totalorder %s404, 15
      %s408 = scalar_select %p407, %s404, 15
      %s409 = smul.addr %s408, 2
      %s410 = smul.addr %s406, 32
      %s411 = sadd.s32 %s409, %s410
      %s412 = smul.addr %s411, 8
      %s413 = scalar_lea.vmem %s0, %s412
      %s414 = smul.u32 8, %s24
      %s415 = smul.u32 %s24, 8
      %s416 = ssub.s32 %s415, 1
      %p417 = scmp.gt.s32.totalorder %s416, 0
      %s418 = scalar_select %p417, %s416, 0
      %p419 = scmp.lt.s32.totalorder %s23, 1
      %s420 = scalar_select %p419, %s23, 1
      %p421 = scmp.lt.s32.totalorder %s418, 15
      %s422 = scalar_select %p421, %s418, 15
      %s423 = smul.addr %s422, 2
      %s424 = smul.addr %s420, 32
      %s425 = sadd.s32 %s423, %s424
      %s426 = smul.addr %s425, 8
      %s427 = scalar_lea.vmem %s1, %s426
      %s428 = smul.u32 %s24, 8
      %s429 = ssub.s32 %s428, 1
      %p430 = scmp.gt.s32.totalorder %s429, 0
      %s431 = scalar_select %p430, %s429, 0
      %s432 = sadd.s32 %s24, 1
      %s433 = smul.u32 %s432, 8
      %p434 = scmp.lt.s32.totalorder %s433, 15
      %s435 = scalar_select %p434, %s433, 15
      %p436 = scmp.lt.s32.totalorder %s23, 1
      %s437 = scalar_select %p436, %s23, 1
      %p438 = scmp.lt.s32.totalorder %s435, 15
      %s439 = scalar_select %p438, %s435, 15
      %s440 = smul.addr %s439, 2
      %s441 = smul.addr %s437, 32
      %s442 = sadd.s32 %s440, %s441
      %s443 = smul.addr %s442, 8
      %s444 = scalar_lea.vmem %s2, %s443
      %s445 = sadd.s32 %s24, 1
      %s446 = smul.u32 %s445, 8
      %p447 = scmp.lt.s32.totalorder %s446, 15
      %s448 = scalar_select %p447, %s446, 15
      %s449 = smul.u32 8, %s24
      %p450 = scmp.lt.s32.totalorder %s23, 1
      %s451 = scalar_select %p450, %s23, 1
      %p452 = scmp.lt.s32.totalorder %s449, 15
      %s453 = scalar_select %p452, %s449, 15
      %s454 = smul.addr %s453, 2
      %s455 = smul.addr %s451, 32
      %s456 = sadd.s32 %s454, %s455
      %s457 = smul.addr %s456, 8
      %s458 = scalar_lea.vmem %s6, %s457
      %s459 = smul.u32 8, %s24
      %p460 = scmp.lt.s32.totalorder %s23, 1
      %s461 = scalar_select %p460, %s23, 1
      %p462 = scmp.lt.s32.totalorder %s24, 1
      %s463 = scalar_select %p462, %s24, 1
      %s464 = smul.addr %s461, 2
      %s465 = sadd.s32 %s463, %s464
      %s466 = smul.addr %s465, 2
      %s467 = scalar_lea.vmem %s7, %s466
      %v468 = vld [vmem:[%s3] sm:$0x1]
      %v469 = vld [vmem:[%s4] sm:$0x1]
      %v470 = vld [vmem:[%s413] sm:$0xff]
      %v471 = vld [vmem:[%s413 + $0x8] sm:$0xff]
      %v472 = vld [vmem:[%s413 + $0x10] sm:$0xff]
      %v473 = vld [vmem:[%s413 + $0x18] sm:$0xff]
      %v474 = vld [vmem:[%s413 + $0x20] sm:$0xff]
      %v475 = vld [vmem:[%s413 + $0x28] sm:$0xff]
      %v476 = vld [vmem:[%s413 + $0x30] sm:$0xff]
      %v477 = vld [vmem:[%s413 + $0x38] sm:$0xff]
      %v478 = vld [vmem:[%s413 + $0x40] sm:$0xff]
      %v479 = vld [vmem:[%s413 + $0x48] sm:$0xff]
      %v480 = vld [vmem:[%s413 + $0x50] sm:$0xff]
      %v481 = vld [vmem:[%s413 + $0x58] sm:$0xff]
      %v482 = vld [vmem:[%s413 + $0x60] sm:$0xff]
      %v483 = vld [vmem:[%s413 + $0x68] sm:$0xff]
      %v484 = vld [vmem:[%s413 + $0x70] sm:$0xff]
      %v485 = vld [vmem:[%s413 + $0x78] sm:$0xff]
      %v487 = vlaneseq
      %v488 = vshrl.u32 %v487, 7
      %v489 = vsub.s32 0, %v488
      %v490 = vrot.slane %v468, %v489
      %v492 = vmul.f32 %v470, %v490
      %v493 = vmul.f32 %v471, %v490
      %v494 = vmul.f32 %v472, %v490
      %v495 = vmul.f32 %v473, %v490
      %v496 = vmul.f32 %v474, %v490
      %v497 = vmul.f32 %v475, %v490
      %v498 = vmul.f32 %v476, %v490
      %v499 = vmul.f32 %v477, %v490
      %v500 = vmul.f32 %v478, %v490
      %v501 = vmul.f32 %v479, %v490
      %v502 = vmul.f32 %v480, %v490
      %v503 = vmul.f32 %v481, %v490
      %v504 = vmul.f32 %v482, %v490
      %v505 = vmul.f32 %v483, %v490
      %v506 = vmul.f32 %v484, %v490
      %v507 = vmul.f32 %v485, %v490
      %v509 = vlaneseq
      %v510 = vshrl.u32 %v509, 7
      %v511 = vsub.s32 0, %v510
      %v512 = vrot.slane %v469, %v511
      %v514 = vadd.f32 %v492, %v512
      %v515 = vadd.f32 %v493, %v512
      %v516 = vadd.f32 %v494, %v512
      %v517 = vadd.f32 %v495, %v512
      %v518 = vadd.f32 %v496, %v512
      %v519 = vadd.f32 %v497, %v512
      %v520 = vadd.f32 %v498, %v512
      %v521 = vadd.f32 %v499, %v512
      %v522 = vadd.f32 %v500, %v512
      %v523 = vadd.f32 %v501, %v512
      %v524 = vadd.f32 %v502, %v512
      %v525 = vadd.f32 %v503, %v512
      %v526 = vadd.f32 %v504, %v512
      %v527 = vadd.f32 %v505, %v512
      %v528 = vadd.f32 %v506, %v512
      %v529 = vadd.f32 %v507, %v512
      %v530 = vmax.f32 %v514, 0.0
      %v531 = vmax.f32 %v515, 0.0
      %v532 = vmax.f32 %v516, 0.0
      %v533 = vmax.f32 %v517, 0.0
      %v534 = vmax.f32 %v518, 0.0
      %v535 = vmax.f32 %v519, 0.0
      %v536 = vmax.f32 %v520, 0.0
      %v537 = vmax.f32 %v521, 0.0
      %v538 = vmax.f32 %v522, 0.0
      %v539 = vmax.f32 %v523, 0.0
      %v540 = vmax.f32 %v524, 0.0
      %v541 = vmax.f32 %v525, 0.0
      %v542 = vmax.f32 %v526, 0.0
      %v543 = vmax.f32 %v527, 0.0
      %v544 = vmax.f32 %v528, 0.0
      %v545 = vmax.f32 %v529, 0.0
      %v546 = vld [vmem:[%s427] sm:$0xff]
      %v547 = vld [vmem:[%s427 + $0x8] sm:$0xff]
      %v548 = vmul.f32 %v546, %v490
      %v549 = vmul.f32 %v547, %v490
      %v550 = vadd.f32 %v548, %v512
      %v551 = vadd.f32 %v549, %v512
      %v552 = vmax.f32 %v550, 0.0
      %v553 = vmax.f32 %v551, 0.0
      %v554 = vld [vmem:[%s444] sm:$0xff]
      %v555 = vld [vmem:[%s444 + $0x8] sm:$0xff]
      %v556 = vmul.f32 %v554, %v490
      %v557 = vmul.f32 %v555, %v490
      %v558 = vadd.f32 %v556, %v512
      %v559 = vadd.f32 %v557, %v512
      %v560 = vmax.f32 %v558, 0.0
      %v561 = vmax.f32 %v559, 0.0
      %p562 = scmp.eq.s32.totalorder %s24, 0
      %s563 = scalar_select %p562, 1, 0
      %v564 = vstv %s563
      %vm565 = vcmp.eq.s32.totalorder %v564, 1
      %v566 = vsel %vm565, 0.0, %v552
      %v567 = vsel %vm565, 0.0, %v553
      %p568 = scmp.eq.s32.totalorder %s24, 1
      %s569 = scalar_select %p568, 1, 0
      %v570 = vstv %s569
      %vm571 = vcmp.eq.s32.totalorder %v570, 1
      %v572 = vsel %vm571, 0.0, %v560
      %v573 = vsel %vm571, 0.0, %v561
      %vm594 = vcmask 1040384
      %v595 = vrot.slane %v566, 7
      %v596 = vrot.slane %v567, 7
      %v597 = vsel %vm594, %v595, %v596
      %v598 = vrot.slane %v530, 7
      %v599 = vrot.slane %v531, 7
      %v600 = vsel %vm594, %v598, %v599
      %v601 = vrot.slane %v532, 7
      %v602 = vrot.slane %v533, 7
      %v603 = vsel %vm594, %v601, %v602
      %v604 = vrot.slane %v534, 7
      %v605 = vrot.slane %v535, 7
      %v606 = vsel %vm594, %v604, %v605
      %v607 = vrot.slane %v536, 7
      %v608 = vrot.slane %v537, 7
      %v609 = vsel %vm594, %v607, %v608
      %v610 = vrot.slane %v538, 7
      %v611 = vrot.slane %v539, 7
      %v612 = vsel %vm594, %v610, %v611
      %v613 = vrot.slane %v540, 7
      %v614 = vrot.slane %v541, 7
      %v615 = vsel %vm594, %v613, %v614
      %v616 = vrot.slane %v542, 7
      %v617 = vrot.slane %v543, 7
      %v618 = vsel %vm594, %v616, %v617
      %v619 = vrot.slane %v544, 7
      %v620 = vrot.slane %v545, 7
      %v621 = vsel %vm594, %v619, %v620
      %v622 = vrot.slane %v572, 7
      %v623 = vrot.slane %v573, 7
      %v624 = vsel %vm594, %v622, %v623
      %v655 = vsel %vm594, 0.0, %v595
      %v656 = vsel %vm594, 0.0, %v598
      %v657 = vsel %vm594, 0.0, %v601
      %v658 = vsel %vm594, 0.0, %v604
      %v659 = vsel %vm594, 0.0, %v607
      %v660 = vsel %vm594, 0.0, %v610
      %v661 = vsel %vm594, 0.0, %v613
      %v662 = vsel %vm594, 0.0, %v616
      %v663 = vsel %vm594, 0.0, %v619
      %v664 = vsel %vm594, 0.0, %v622
      %v665 = vsel %vm594, %v596, 0.0
      %v666 = vsel %vm594, %v599, 0.0
      %v667 = vsel %vm594, %v602, 0.0
      %v668 = vsel %vm594, %v605, 0.0
      %v669 = vsel %vm594, %v608, 0.0
      %v670 = vsel %vm594, %v611, 0.0
      %v671 = vsel %vm594, %v614, 0.0
      %v672 = vsel %vm594, %v617, 0.0
      %v673 = vsel %vm594, %v620, 0.0
      %v674 = vsel %vm594, %v623, 0.0
      %vm691 = vcmask 1046528
      %v692 = vrot.slane %v655, 1
      %v693 = vrot.slane %v597, 1
      %v694 = vsel %vm691, %v692, %v693
      %v695 = vrot.slane %v665, 1
      %v696 = vsel %vm691, %v693, %v695
      %v697 = vrot.slane %v656, 1
      %v698 = vrot.slane %v600, 1
      %v699 = vsel %vm691, %v697, %v698
      %v700 = vrot.slane %v666, 1
      %v701 = vsel %vm691, %v698, %v700
      %v702 = vrot.slane %v657, 1
      %v703 = vrot.slane %v603, 1
      %v704 = vsel %vm691, %v702, %v703
      %v705 = vrot.slane %v667, 1
      %v706 = vsel %vm691, %v703, %v705
      %v707 = vrot.slane %v658, 1
      %v708 = vrot.slane %v606, 1
      %v709 = vsel %vm691, %v707, %v708
      %v710 = vrot.slane %v668, 1
      %v711 = vsel %vm691, %v708, %v710
      %v712 = vrot.slane %v659, 1
      %v713 = vrot.slane %v609, 1
      %v714 = vsel %vm691, %v712, %v713
      %v715 = vrot.slane %v669, 1
      %v716 = vsel %vm691, %v713, %v715
      %v717 = vrot.slane %v660, 1
      %v718 = vrot.slane %v612, 1
      %v719 = vsel %vm691, %v717, %v718
      %v720 = vrot.slane %v670, 1
      %v721 = vsel %vm691, %v718, %v720
      %v722 = vrot.slane %v661, 1
      %v723 = vrot.slane %v615, 1
      %v724 = vsel %vm691, %v722, %v723
      %v725 = vrot.slane %v671, 1
      %v726 = vsel %vm691, %v723, %v725
      %v727 = vrot.slane %v662, 1
      %v728 = vrot.slane %v618, 1
      %v729 = vsel %vm691, %v727, %v728
      %v730 = vrot.slane %v672, 1
      %v731 = vsel %vm691, %v728, %v730
      %732 = vrot.lane.b32.xlu0 %v694, 4
      %v733 = vpop.permute.xlu0 %732
      %734 = vrot.lane.b32.xlu0 %v696, 4
      %v735 = vpop.permute.xlu0 %734
      %736 = vrot.lane.b32.xlu0 %v699, 4
      %v737 = vpop.permute.xlu0 %736
      %738 = vrot.lane.b32.xlu0 %v701, 4
      %v739 = vpop.permute.xlu0 %738
      %740 = vrot.lane.b32.xlu0 %v704, 4
      %v741 = vpop.permute.xlu0 %740
      %742 = vrot.lane.b32.xlu0 %v706, 4
      %v743 = vpop.permute.xlu0 %742
      %744 = vrot.lane.b32.xlu0 %v709, 4
      %v745 = vpop.permute.xlu0 %744
      %746 = vrot.lane.b32.xlu0 %v711, 4
      %v747 = vpop.permute.xlu0 %746
      %748 = vrot.lane.b32.xlu0 %v714, 4
      %v749 = vpop.permute.xlu0 %748
      %750 = vrot.lane.b32.xlu0 %v716, 4
      %v751 = vpop.permute.xlu0 %750
      %752 = vrot.lane.b32.xlu0 %v719, 4
      %v753 = vpop.permute.xlu0 %752
      %754 = vrot.lane.b32.xlu0 %v721, 4
      %v755 = vpop.permute.xlu0 %754
      %756 = vrot.lane.b32.xlu0 %v724, 4
      %v757 = vpop.permute.xlu0 %756
      %758 = vrot.lane.b32.xlu0 %v726, 4
      %v759 = vpop.permute.xlu0 %758
      %760 = vrot.lane.b32.xlu0 %v729, 4
      %v761 = vpop.permute.xlu0 %760
      %762 = vrot.lane.b32.xlu0 %v731, 4
      %v763 = vpop.permute.xlu0 %762
      %vm780 = vcmask 1045504
      %v781 = vrot.slane %v655, 2
      %v782 = vrot.slane %v597, 2
      %v783 = vsel %vm780, %v781, %v782
      %v784 = vrot.slane %v665, 2
      %v785 = vsel %vm780, %v782, %v784
      %v786 = vrot.slane %v656, 2
      %v787 = vrot.slane %v600, 2
      %v788 = vsel %vm780, %v786, %v787
      %v789 = vrot.slane %v666, 2
      %v790 = vsel %vm780, %v787, %v789
      %v791 = vrot.slane %v657, 2
      %v792 = vrot.slane %v603, 2
      %v793 = vsel %vm780, %v791, %v792
      %v794 = vrot.slane %v667, 2
      %v795 = vsel %vm780, %v792, %v794
      %v796 = vrot.slane %v658, 2
      %v797 = vrot.slane %v606, 2
      %v798 = vsel %vm780, %v796, %v797
      %v799 = vrot.slane %v668, 2
      %v800 = vsel %vm780, %v797, %v799
      %v801 = vrot.slane %v659, 2
      %v802 = vrot.slane %v609, 2
      %v803 = vsel %vm780, %v801, %v802
      %v804 = vrot.slane %v669, 2
      %v805 = vsel %vm780, %v802, %v804
      %v806 = vrot.slane %v660, 2
      %v807 = vrot.slane %v612, 2
      %v808 = vsel %vm780, %v806, %v807
      %v809 = vrot.slane %v670, 2
      %v810 = vsel %vm780, %v807, %v809
      %v811 = vrot.slane %v661, 2
      %v812 = vrot.slane %v615, 2
      %v813 = vsel %vm780, %v811, %v812
      %v814 = vrot.slane %v671, 2
      %v815 = vsel %vm780, %v812, %v814
      %v816 = vrot.slane %v662, 2
      %v817 = vrot.slane %v618, 2
      %v818 = vsel %vm780, %v816, %v817
      %v819 = vrot.slane %v672, 2
      %v820 = vsel %vm780, %v817, %v819
      %821 = vrot.lane.b32.xlu0 %v783, 8
      %v822 = vpop.permute.xlu0 %821
      %823 = vrot.lane.b32.xlu0 %v785, 8
      %v824 = vpop.permute.xlu0 %823
      %825 = vrot.lane.b32.xlu0 %v788, 8
      %v826 = vpop.permute.xlu0 %825
      %827 = vrot.lane.b32.xlu0 %v790, 8
      %v828 = vpop.permute.xlu0 %827
      %829 = vrot.lane.b32.xlu0 %v793, 8
      %v830 = vpop.permute.xlu0 %829
      %831 = vrot.lane.b32.xlu0 %v795, 8
      %v832 = vpop.permute.xlu0 %831
      %833 = vrot.lane.b32.xlu0 %v798, 8
      %v834 = vpop.permute.xlu0 %833
      %835 = vrot.lane.b32.xlu0 %v800, 8
      %v836 = vpop.permute.xlu0 %835
      %837 = vrot.lane.b32.xlu0 %v803, 8
      %v838 = vpop.permute.xlu0 %837
      %839 = vrot.lane.b32.xlu0 %v805, 8
      %v840 = vpop.permute.xlu0 %839
      %841 = vrot.lane.b32.xlu0 %v808, 8
      %v842 = vpop.permute.xlu0 %841
      %843 = vrot.lane.b32.xlu0 %v810, 8
      %v844 = vpop.permute.xlu0 %843
      %845 = vrot.lane.b32.xlu0 %v813, 8
      %v846 = vpop.permute.xlu0 %845
      %847 = vrot.lane.b32.xlu0 %v815, 8
      %v848 = vpop.permute.xlu0 %847
      %849 = vrot.lane.b32.xlu0 %v818, 8
      %v850 = vpop.permute.xlu0 %849
      %851 = vrot.lane.b32.xlu0 %v820, 8
      %v852 = vpop.permute.xlu0 %851
      %vm869 = vcmask 31744
      %v870 = vsel %vm869, %v655, %v733
      %v871 = vsel %vm869, %v597, %v735
      %v872 = vsel %vm869, %v656, %v737
      %v873 = vsel %vm869, %v600, %v739
      %v874 = vsel %vm869, %v657, %v741
      %v875 = vsel %vm869, %v603, %v743
      %v876 = vsel %vm869, %v658, %v745
      %v877 = vsel %vm869, %v606, %v747
      %v878 = vsel %vm869, %v659, %v749
      %v879 = vsel %vm869, %v609, %v751
      %v880 = vsel %vm869, %v660, %v753
      %v881 = vsel %vm869, %v612, %v755
      %v882 = vsel %vm869, %v661, %v757
      %v883 = vsel %vm869, %v615, %v759
      %v884 = vsel %vm869, %v662, %v761
      %v885 = vsel %vm869, %v618, %v763
      %vm886 = vcmask 64512
      %v887 = vsel %vm886, %v870, %v822
      %v888 = vsel %vm886, %v871, %v824
      %v889 = vsel %vm886, %v872, %v826
      %v890 = vsel %vm886, %v873, %v828
      %v891 = vsel %vm886, %v874, %v830
      %v892 = vsel %vm886, %v875, %v832
      %v893 = vsel %vm886, %v876, %v834
      %v894 = vsel %vm886, %v877, %v836
      %v895 = vsel %vm886, %v878, %v838
      %v896 = vsel %vm886, %v879, %v840
      %v897 = vsel %vm886, %v880, %v842
      %v898 = vsel %vm886, %v881, %v844
      %v899 = vsel %vm886, %v882, %v846
      %v900 = vsel %vm886, %v883, %v848
      %v901 = vsel %vm886, %v884, %v850
      %v902 = vsel %vm886, %v885, %v852
      %v903 = vld [vmem:[%s5] sm:$0xff]
      %v904 = vld [vmem:[%s5 + $0x8] sm:$0xf]
      %v907 = vrot.slane %v663, 1
      %v908 = vrot.slane %v621, 1
      %v909 = vsel %vm691, %v907, %v908
      %v910 = vrot.slane %v673, 1
      %v911 = vsel %vm691, %v908, %v910
      %912 = vrot.lane.b32.xlu0 %v909, 4
      %v913 = vpop.permute.xlu0 %912
      %914 = vrot.lane.b32.xlu0 %v911, 4
      %v915 = vpop.permute.xlu0 %914
      %v918 = vrot.slane %v663, 2
      %v919 = vrot.slane %v621, 2
      %v920 = vsel %vm780, %v918, %v919
      %v921 = vrot.slane %v673, 2
      %v922 = vsel %vm780, %v919, %v921
      %923 = vrot.lane.b32.xlu0 %v920, 8
      %v924 = vpop.permute.xlu0 %923
      %925 = vrot.lane.b32.xlu0 %v922, 8
      %v926 = vpop.permute.xlu0 %925
      %v929 = vsel %vm869, %v663, %v913
      %v930 = vsel %vm869, %v621, %v915
      %v931 = vsel %vm886, %v929, %v924
      %v932 = vsel %vm886, %v930, %v926
      %s933 = scalar_lea.vmem %s5, 16
      %v934 = vld [vmem:[%s933] sm:$0xff]
      %v935 = vld [vmem:[%s933 + $0x8] sm:$0xf]
      %vm936 = vcmask 97280
      %v938 = vsel %vm936, %v889, 0
      %v941 = vsel %vm936, %v890, 0
      %v944 = vsel %vm936, %v891, 0
      %v947 = vsel %vm936, %v892, 0
      %v950 = vsel %vm936, %v893, 0
      %v953 = vsel %vm936, %v894, 0
      %v956 = vsel %vm936, %v895, 0
      %v959 = vsel %vm936, %v896, 0
      %v962 = vsel %vm936, %v897, 0
      %v965 = vsel %vm936, %v898, 0
      %v968 = vsel %vm936, %v899, 0
      %v971 = vsel %vm936, %v900, 0
      %v974 = vsel %vm936, %v901, 0
      %v977 = vsel %vm936, %v902, 0
      %v980 = vsel %vm936, %v931, 0
      %v983 = vsel %vm936, %v932, 0
      %vm985 = vcmask 1043456
      %v987 = vsel %vm985, %v935, 0
      %989 = vmatprep.subr.mxu0 0.0
      %990 = vmatpush1.msra.mxu0 %v934
      %991 = vmatprep.subr.mxu0 0.0
      %992 = vmatpush1.msra.mxu0 %v987
      %993 = vmatprep.subr.mxu0 0.0
      %994 = vmatpush1.msra.mxu0 0.0
      %995 = vmatprep.subr.mxu0 0.0
      %996 = vmatpush1.msra.mxu0 0.0
      %997 = vmatprep.subr.mxu0 0.0
      %998 = vmatpush1.msra.mxu0 0.0
      %999 = vmatprep.subr.mxu0 0.0
      %1000 = vmatpush1.msra.mxu0 0.0
      %1001 = vmatprep.subr.mxu0 0.0
      %1002 = vmatpush1.msra.mxu0 0.0
      %1003 = vmatprep.subr.mxu0 0.0
      %1004 = vmatpush1.msra.mxu0 0.0
      %1005 = vmatprep.subr.mxu0 0.0
      %1006 = vmatpush1.msra.mxu0 0.0
      %1007 = vmatprep.subr.mxu0 0.0
      %1008 = vmatpush1.msra.mxu0 0.0
      %1009 = vmatprep.subr.mxu0 0.0
      %1010 = vmatpush1.msra.mxu0 0.0
      %1011 = vmatprep.subr.mxu0 0.0
      %1012 = vmatpush1.msra.mxu0 0.0
      %1013 = vmatprep.subr.mxu0 0.0
      %1014 = vmatpush1.msra.mxu0 0.0
      %1015 = vmatprep.subr.mxu0 0.0
      %1016 = vmatpush1.msra.mxu0 0.0
      %1017 = vmatprep.subr.mxu0 0.0
      %1018 = vmatpush1.msra.mxu0 0.0
      %1019 = vmatprep.subr.mxu0 0.0
      %1020 = vmatpush1.msra.mxu0 0.0
      %1021 = vmatprep.subr.mxu0 0.0
      %1022 = vmatpush1.msra.mxu0 0.0
      %1023 = vmatprep.subr.mxu0 0.0
      %1024 = vmatpush1.msra.mxu0 0.0
      %1025 = vmatprep.subr.mxu0 0.0
      %1026 = vmatpush1.msra.mxu0 0.0
      %1027 = vmatprep.subr.mxu0 0.0
      %1028 = vmatpush1.msra.mxu0 0.0
      %1029 = vmatprep.subr.mxu0 0.0
      %1030 = vmatpush1.msra.mxu0 0.0
      %1031 = vmatprep.subr.mxu0 0.0
      %1032 = vmatpush1.msra.mxu0 0.0
      %1033 = vmatprep.subr.mxu0 0.0
      %1034 = vmatpush1.msra.mxu0 0.0
      %1035 = vmatprep.subr.mxu0 0.0
      %1036 = vmatpush1.msra.mxu0 0.0
      %1037 = vmatprep.subr.mxu0 0.0
      %1038 = vmatpush1.msra.mxu0 0.0
      %1039 = vmatprep.subr.mxu0 0.0
      %1040 = vmatpush1.msra.mxu0 0.0
      %1041 = vmatprep.subr.mxu0 0.0
      %1042 = vmatpush1.msra.mxu0 0.0
      %1043 = vmatprep.subr.mxu0 0.0
      %1044 = vmatpush1.msra.mxu0 0.0
      %1045 = vmatprep.subr.mxu0 0.0
      %1046 = vmatpush1.msra.mxu0 0.0
      %1047 = vmatprep.subr.mxu0 0.0
      %1048 = vmatpush1.msra.mxu0 0.0
      %1049 = vmatprep.subr.mxu0 0.0
      %1050 = vmatpush1.msra.mxu0 0.0
      %1051 = vmatprep.subr.mxu0 0.0
      %1052 = vmatpush1.msra.mxu0 0.0
      %1053 = vmatprep.mubr.f32.mxu0 0.0
      %1054 = vmatmul.mubr.f32.gmra.mrb[0].mxu0 %v938
      %v1055 = vpop.f32.mrb[0].mxu0
      %v1056 = vadd.f32 0.0, %v1055
      %v1057 = vpop.f32.mrb[0].mxu0
      %1058 = vmatprep.mubr.f32.mxu0 0.0
      %1059 = vmatmul.mubr.f32.gmra.mrb[0].mxu0 %v941
      %v1060 = vpop.f32.mrb[0].mxu0
      %v1061 = vadd.f32 0.0, %v1060
      %v1062 = vpop.f32.mrb[0].mxu0
      %1063 = vmatprep.mubr.f32.mxu0 0.0
      %1064 = vmatmul.mubr.f32.gmra.mrb[0].mxu0 %v944
      %v1065 = vpop.f32.mrb[0].mxu0
      %v1066 = vadd.f32 0.0, %v1065
      %v1067 = vpop.f32.mrb[0].mxu0
      %1068 = vmatprep.mubr.f32.mxu0 0.0
      %1069 = vmatmul.mubr.f32.gmra.mrb[0].mxu0 %v947
      %v1070 = vpop.f32.mrb[0].mxu0
      %v1071 = vadd.f32 0.0, %v1070
      %v1072 = vpop.f32.mrb[0].mxu0
      %1073 = vmatprep.mubr.f32.mxu0 0.0
      %1074 = vmatmul.mubr.f32.gmra.mrb[0].mxu0 %v950
      %v1075 = vpop.f32.mrb[0].mxu0
      %v1076 = vadd.f32 0.0, %v1075
      %v1077 = vpop.f32.mrb[0].mxu0
      %1078 = vmatprep.mubr.f32.mxu0 0.0
      %1079 = vmatmul.mubr.f32.gmra.mrb[0].mxu0 %v953
      %v1080 = vpop.f32.mrb[0].mxu0
      %v1081 = vadd.f32 0.0, %v1080
      %v1082 = vpop.f32.mrb[0].mxu0
      %1083 = vmatprep.mubr.f32.mxu0 0.0
      %1084 = vmatmul.mubr.f32.gmra.mrb[0].mxu0 %v956
      %v1085 = vpop.f32.mrb[0].mxu0
      %v1086 = vadd.f32 0.0, %v1085
      %v1087 = vpop.f32.mrb[0].mxu0
      %1088 = vmatprep.mubr.f32.mxu0 0.0
      %1089 = vmatmul.mubr.f32.gmra.mrb[0].mxu0 %v959
      %v1090 = vpop.f32.mrb[0].mxu0
      %v1091 = vadd.f32 0.0, %v1090
      %v1092 = vpop.f32.mrb[0].mxu0
      %1093 = vmatprep.mubr.f32.mxu0 0.0
      %1094 = vmatmul.mubr.f32.gmra.mrb[0].mxu0 %v962
      %v1095 = vpop.f32.mrb[0].mxu0
      %v1096 = vadd.f32 0.0, %v1095
      %v1097 = vpop.f32.mrb[0].mxu0
      %1098 = vmatprep.mubr.f32.mxu0 0.0
      %1099 = vmatmul.mubr.f32.gmra.mrb[0].mxu0 %v965
      %v1100 = vpop.f32.mrb[0].mxu0
      %v1101 = vadd.f32 0.0, %v1100
      %v1102 = vpop.f32.mrb[0].mxu0
      %1103 = vmatprep.mubr.f32.mxu0 0.0
      %1104 = vmatmul.mubr.f32.gmra.mrb[0].mxu0 %v968
      %v1105 = vpop.f32.mrb[0].mxu0
      %v1106 = vadd.f32 0.0, %v1105
      %v1107 = vpop.f32.mrb[0].mxu0
      %1108 = vmatprep.mubr.f32.mxu0 0.0
      %1109 = vmatmul.mubr.f32.gmra.mrb[0].mxu0 %v971
      %v1110 = vpop.f32.mrb[0].mxu0
      %v1111 = vadd.f32 0.0, %v1110
      %v1112 = vpop.f32.mrb[0].mxu0
      %1113 = vmatprep.mubr.f32.mxu0 0.0
      %1114 = vmatmul.mubr.f32.gmra.mrb[0].mxu0 %v974
      %v1115 = vpop.f32.mrb[0].mxu0
      %v1116 = vadd.f32 0.0, %v1115
      %v1117 = vpop.f32.mrb[0].mxu0
      %1118 = vmatprep.mubr.f32.mxu0 0.0
      %1119 = vmatmul.mubr.f32.gmra.mrb[0].mxu0 %v977
      %v1120 = vpop.f32.mrb[0].mxu0
      %v1121 = vadd.f32 0.0, %v1120
      %v1122 = vpop.f32.mrb[0].mxu0
      %1123 = vmatprep.mubr.f32.mxu0 0.0
      %1124 = vmatmul.mubr.f32.gmra.mrb[0].mxu0 %v980
      %v1125 = vpop.f32.mrb[0].mxu0
      %v1126 = vadd.f32 0.0, %v1125
      %v1127 = vpop.f32.mrb[0].mxu0
      %1128 = vmatprep.mubr.f32.mxu0 0.0
      %1129 = vmatmul.mubr.f32.gmra.mrb[0].mxu0 %v983
      %v1130 = vpop.f32.mrb[0].mxu0
      %v1131 = vadd.f32 0.0, %v1130
      %v1132 = vpop.f32.mrb[0].mxu0
      %1133 = vdwg.mxu0
      %v1135 = vsel %vm936, %v887, 0
      %v1138 = vsel %vm936, %v888, 0
      %v1141 = vsel %vm985, %v904, 0
      %1143 = vmatprep.subr.mxu0 0.0
      %1144 = vmatpush1.msra.mxu0 %v903
      %1145 = vmatprep.subr.mxu0 0.0
      %1146 = vmatpush1.msra.mxu0 %v1141
      %1147 = vmatprep.subr.mxu0 0.0
      %1148 = vmatpush1.msra.mxu0 0.0
      %1149 = vmatprep.subr.mxu0 0.0
      %1150 = vmatpush1.msra.mxu0 0.0
      %1151 = vmatprep.subr.mxu0 0.0
      %1152 = vmatpush1.msra.mxu0 0.0
      %1153 = vmatprep.subr.mxu0 0.0
      %1154 = vmatpush1.msra.mxu0 0.0
      %1155 = vmatprep.subr.mxu0 0.0
      %1156 = vmatpush1.msra.mxu0 0.0
      %1157 = vmatprep.subr.mxu0 0.0
      %1158 = vmatpush1.msra.mxu0 0.0
      %1159 = vmatprep.subr.mxu0 0.0
      %1160 = vmatpush1.msra.mxu0 0.0
      %1161 = vmatprep.subr.mxu0 0.0
      %1162 = vmatpush1.msra.mxu0 0.0
      %1163 = vmatprep.subr.mxu0 0.0
      %1164 = vmatpush1.msra.mxu0 0.0
      %1165 = vmatprep.subr.mxu0 0.0
      %1166 = vmatpush1.msra.mxu0 0.0
      %1167 = vmatprep.subr.mxu0 0.0
      %1168 = vmatpush1.msra.mxu0 0.0
      %1169 = vmatprep.subr.mxu0 0.0
      %1170 = vmatpush1.msra.mxu0 0.0
      %1171 = vmatprep.subr.mxu0 0.0
      %1172 = vmatpush1.msra.mxu0 0.0
      %1173 = vmatprep.subr.mxu0 0.0
      %1174 = vmatpush1.msra.mxu0 0.0
      %1175 = vmatprep.subr.mxu0 0.0
      %1176 = vmatpush1.msra.mxu0 0.0
      %1177 = vmatprep.subr.mxu0 0.0
      %1178 = vmatpush1.msra.mxu0 0.0
      %1179 = vmatprep.subr.mxu0 0.0
      %1180 = vmatpush1.msra.mxu0 0.0
      %1181 = vmatprep.subr.mxu0 0.0
      %1182 = vmatpush1.msra.mxu0 0.0
      %1183 = vmatprep.subr.mxu0 0.0
      %1184 = vmatpush1.msra.mxu0 0.0
      %1185 = vmatprep.subr.mxu0 0.0
      %1186 = vmatpush1.msra.mxu0 0.0
      %1187 = vmatprep.subr.mxu0 0.0
      %1188 = vmatpush1.msra.mxu0 0.0
      %1189 = vmatprep.subr.mxu0 0.0
      %1190 = vmatpush1.msra.mxu0 0.0
      %1191 = vmatprep.subr.mxu0 0.0
      %1192 = vmatpush1.msra.mxu0 0.0
      %1193 = vmatprep.subr.mxu0 0.0
      %1194 = vmatpush1.msra.mxu0 0.0
      %1195 = vmatprep.subr.mxu0 0.0
      %1196 = vmatpush1.msra.mxu0 0.0
      %1197 = vmatprep.subr.mxu0 0.0
      %1198 = vmatpush1.msra.mxu0 0.0
      %1199 = vmatprep.subr.mxu0 0.0
      %1200 = vmatpush1.msra.mxu0 0.0
      %1201 = vmatprep.subr.mxu0 0.0
      %1202 = vmatpush1.msra.mxu0 0.0
      %1203 = vmatprep.subr.mxu0 0.0
      %1204 = vmatpush1.msra.mxu0 0.0
      %1205 = vmatprep.subr.mxu0 0.0
      %1206 = vmatpush1.msra.mxu0 0.0
      %1207 = vmatprep.mubr.f32.mxu0 0.0
      %1208 = vmatmul.mubr.f32.gmra.mrb[0].mxu0 %v1135
      %v1209 = vpop.f32.mrb[0].mxu0
      %v1210 = vadd.f32 %v1056, %v1209
      %v1211 = vpop.f32.mrb[0].mxu0
      %1212 = vmatprep.mubr.f32.mxu0 0.0
      %1213 = vmatmul.mubr.f32.gmra.mrb[0].mxu0 %v1138
      %v1214 = vpop.f32.mrb[0].mxu0
      %v1215 = vadd.f32 %v1061, %v1214
      %v1216 = vpop.f32.mrb[0].mxu0
      %1217 = vmatprep.mubr.f32.mxu0 0.0
      %1218 = vmatmul.mubr.f32.gmra.mrb[0].mxu0 %v938
      %v1219 = vpop.f32.mrb[0].mxu0
      %v1220 = vadd.f32 %v1066, %v1219
      %v1221 = vpop.f32.mrb[0].mxu0
      %1222 = vmatprep.mubr.f32.mxu0 0.0
      %1223 = vmatmul.mubr.f32.gmra.mrb[0].mxu0 %v941
      %v1224 = vpop.f32.mrb[0].mxu0
      %v1225 = vadd.f32 %v1071, %v1224
      %v1226 = vpop.f32.mrb[0].mxu0
      %1227 = vmatprep.mubr.f32.mxu0 0.0
      %1228 = vmatmul.mubr.f32.gmra.mrb[0].mxu0 %v944
      %v1229 = vpop.f32.mrb[0].mxu0
      %v1230 = vadd.f32 %v1076, %v1229
      %v1231 = vpop.f32.mrb[0].mxu0
      %1232 = vmatprep.mubr.f32.mxu0 0.0
      %1233 = vmatmul.mubr.f32.gmra.mrb[0].mxu0 %v947
      %v1234 = vpop.f32.mrb[0].mxu0
      %v1235 = vadd.f32 %v1081, %v1234
      %v1236 = vpop.f32.mrb[0].mxu0
      %1237 = vmatprep.mubr.f32.mxu0 0.0
      %1238 = vmatmul.mubr.f32.gmra.mrb[0].mxu0 %v950
      %v1239 = vpop.f32.mrb[0].mxu0
      %v1240 = vadd.f32 %v1086, %v1239
      %v1241 = vpop.f32.mrb[0].mxu0
      %1242 = vmatprep.mubr.f32.mxu0 0.0
      %1243 = vmatmul.mubr.f32.gmra.mrb[0].mxu0 %v953
      %v1244 = vpop.f32.mrb[0].mxu0
      %v1245 = vadd.f32 %v1091, %v1244
      %v1246 = vpop.f32.mrb[0].mxu0
      %1247 = vmatprep.mubr.f32.mxu0 0.0
      %1248 = vmatmul.mubr.f32.gmra.mrb[0].mxu0 %v956
      %v1249 = vpop.f32.mrb[0].mxu0
      %v1250 = vadd.f32 %v1096, %v1249
      %v1251 = vpop.f32.mrb[0].mxu0
      %1252 = vmatprep.mubr.f32.mxu0 0.0
      %1253 = vmatmul.mubr.f32.gmra.mrb[0].mxu0 %v959
      %v1254 = vpop.f32.mrb[0].mxu0
      %v1255 = vadd.f32 %v1101, %v1254
      %v1256 = vpop.f32.mrb[0].mxu0
      %1257 = vmatprep.mubr.f32.mxu0 0.0
      %1258 = vmatmul.mubr.f32.gmra.mrb[0].mxu0 %v962
      %v1259 = vpop.f32.mrb[0].mxu0
      %v1260 = vadd.f32 %v1106, %v1259
      %v1261 = vpop.f32.mrb[0].mxu0
      %1262 = vmatprep.mubr.f32.mxu0 0.0
      %1263 = vmatmul.mubr.f32.gmra.mrb[0].mxu0 %v965
      %v1264 = vpop.f32.mrb[0].mxu0
      %v1265 = vadd.f32 %v1111, %v1264
      %v1266 = vpop.f32.mrb[0].mxu0
      %1267 = vmatprep.mubr.f32.mxu0 0.0
      %1268 = vmatmul.mubr.f32.gmra.mrb[0].mxu0 %v968
      %v1269 = vpop.f32.mrb[0].mxu0
      %v1270 = vadd.f32 %v1116, %v1269
      %v1271 = vpop.f32.mrb[0].mxu0
      %1272 = vmatprep.mubr.f32.mxu0 0.0
      %1273 = vmatmul.mubr.f32.gmra.mrb[0].mxu0 %v971
      %v1274 = vpop.f32.mrb[0].mxu0
      %v1275 = vadd.f32 %v1121, %v1274
      %v1276 = vpop.f32.mrb[0].mxu0
      %1277 = vmatprep.mubr.f32.mxu0 0.0
      %1278 = vmatmul.mubr.f32.gmra.mrb[0].mxu0 %v974
      %v1279 = vpop.f32.mrb[0].mxu0
      %v1280 = vadd.f32 %v1126, %v1279
      %v1281 = vpop.f32.mrb[0].mxu0
      %1282 = vmatprep.mubr.f32.mxu0 0.0
      %1283 = vmatmul.mubr.f32.gmra.mrb[0].mxu0 %v977
      %v1284 = vpop.f32.mrb[0].mxu0
      %v1285 = vadd.f32 %v1131, %v1284
      %v1286 = vpop.f32.mrb[0].mxu0
      %1287 = vdwg.mxu0
      %v1290 = vrot.slane %v664, 1
      %v1291 = vrot.slane %v624, 1
      %v1292 = vsel %vm691, %v1290, %v1291
      %v1293 = vrot.slane %v674, 1
      %v1294 = vsel %vm691, %v1291, %v1293
      %1295 = vrot.lane.b32.xlu0 %v1292, 4
      %v1296 = vpop.permute.xlu0 %1295
      %1297 = vrot.lane.b32.xlu0 %v1294, 4
      %v1298 = vpop.permute.xlu0 %1297
      %v1301 = vrot.slane %v664, 2
      %v1302 = vrot.slane %v624, 2
      %v1303 = vsel %vm780, %v1301, %v1302
      %v1304 = vrot.slane %v674, 2
      %v1305 = vsel %vm780, %v1302, %v1304
      %1306 = vrot.lane.b32.xlu0 %v1303, 8
      %v1307 = vpop.permute.xlu0 %1306
      %1308 = vrot.lane.b32.xlu0 %v1305, 8
      %v1309 = vpop.permute.xlu0 %1308
      %v1312 = vsel %vm869, %v664, %v1296
      %v1313 = vsel %vm869, %v624, %v1298
      %v1314 = vsel %vm886, %v1312, %v1307
      %v1315 = vsel %vm886, %v1313, %v1309
      %s1316 = scalar_lea.vmem %s5, 32
      %v1317 = vld [vmem:[%s1316] sm:$0xff]
      %v1318 = vld [vmem:[%s1316 + $0x8] sm:$0xf]
      %v1320 = vsel %vm936, %v1314, 0
      %v1323 = vsel %vm936, %v1315, 0
      %v1326 = vsel %vm985, %v1318, 0
      %1328 = vmatprep.subr.mxu0 0.0
      %1329 = vmatpush1.msra.mxu0 %v1317
      %1330 = vmatprep.subr.mxu0 0.0
      %1331 = vmatpush1.msra.mxu0 %v1326
      %1332 = vmatprep.subr.mxu0 0.0
      %1333 = vmatpush1.msra.mxu0 0.0
      %1334 = vmatprep.subr.mxu0 0.0
      %1335 = vmatpush1.msra.mxu0 0.0
      %1336 = vmatprep.subr.mxu0 0.0
      %1337 = vmatpush1.msra.mxu0 0.0
      %1338 = vmatprep.subr.mxu0 0.0
      %1339 = vmatpush1.msra.mxu0 0.0
      %1340 = vmatprep.subr.mxu0 0.0
      %1341 = vmatpush1.msra.mxu0 0.0
      %1342 = vmatprep.subr.mxu0 0.0
      %1343 = vmatpush1.msra.mxu0 0.0
      %1344 = vmatprep.subr.mxu0 0.0
      %1345 = vmatpush1.msra.mxu0 0.0
      %1346 = vmatprep.subr.mxu0 0.0
      %1347 = vmatpush1.msra.mxu0 0.0
      %1348 = vmatprep.subr.mxu0 0.0
      %1349 = vmatpush1.msra.mxu0 0.0
      %1350 = vmatprep.subr.mxu0 0.0
      %1351 = vmatpush1.msra.mxu0 0.0
      %1352 = vmatprep.subr.mxu0 0.0
      %1353 = vmatpush1.msra.mxu0 0.0
      %1354 = vmatprep.subr.mxu0 0.0
      %1355 = vmatpush1.msra.mxu0 0.0
      %1356 = vmatprep.subr.mxu0 0.0
      %1357 = vmatpush1.msra.mxu0 0.0
      %1358 = vmatprep.subr.mxu0 0.0
      %1359 = vmatpush1.msra.mxu0 0.0
      %1360 = vmatprep.subr.mxu0 0.0
      %1361 = vmatpush1.msra.mxu0 0.0
      %1362 = vmatprep.subr.mxu0 0.0
      %1363 = vmatpush1.msra.mxu0 0.0
      %1364 = vmatprep.subr.mxu0 0.0
      %1365 = vmatpush1.msra.mxu0 0.0
      %1366 = vmatprep.subr.mxu0 0.0
      %1367 = vmatpush1.msra.mxu0 0.0
      %1368 = vmatprep.subr.mxu0 0.0
      %1369 = vmatpush1.msra.mxu0 0.0
      %1370 = vmatprep.subr.mxu0 0.0
      %1371 = vmatpush1.msra.mxu0 0.0
      %1372 = vmatprep.subr.mxu0 0.0
      %1373 = vmatpush1.msra.mxu0 0.0
      %1374 = vmatprep.subr.mxu0 0.0
      %1375 = vmatpush1.msra.mxu0 0.0
      %1376 = vmatprep.subr.mxu0 0.0
      %1377 = vmatpush1.msra.mxu0 0.0
      %1378 = vmatprep.subr.mxu0 0.0
      %1379 = vmatpush1.msra.mxu0 0.0
      %1380 = vmatprep.subr.mxu0 0.0
      %1381 = vmatpush1.msra.mxu0 0.0
      %1382 = vmatprep.subr.mxu0 0.0
      %1383 = vmatpush1.msra.mxu0 0.0
      %1384 = vmatprep.subr.mxu0 0.0
      %1385 = vmatpush1.msra.mxu0 0.0
      %1386 = vmatprep.subr.mxu0 0.0
      %1387 = vmatpush1.msra.mxu0 0.0
      %1388 = vmatprep.subr.mxu0 0.0
      %1389 = vmatpush1.msra.mxu0 0.0
      %1390 = vmatprep.subr.mxu0 0.0
      %1391 = vmatpush1.msra.mxu0 0.0
      %1392 = vmatprep.mubr.f32.mxu0 0.0
      %1393 = vmatmul.mubr.f32.gmra.mrb[0].mxu0 %v944
      %v1394 = vpop.f32.mrb[0].mxu0
      %v1395 = vadd.f32 0.0, %v1394
      %v1396 = vpop.f32.mrb[0].mxu0
      %1397 = vmatprep.mubr.f32.mxu0 0.0
      %1398 = vmatmul.mubr.f32.gmra.mrb[0].mxu0 %v947
      %v1399 = vpop.f32.mrb[0].mxu0
      %v1400 = vadd.f32 0.0, %v1399
      %v1401 = vpop.f32.mrb[0].mxu0
      %1402 = vmatprep.mubr.f32.mxu0 0.0
      %1403 = vmatmul.mubr.f32.gmra.mrb[0].mxu0 %v950
      %v1404 = vpop.f32.mrb[0].mxu0
      %v1405 = vadd.f32 0.0, %v1404
      %v1406 = vpop.f32.mrb[0].mxu0
      %1407 = vmatprep.mubr.f32.mxu0 0.0
      %1408 = vmatmul.mubr.f32.gmra.mrb[0].mxu0 %v953
      %v1409 = vpop.f32.mrb[0].mxu0
      %v1410 = vadd.f32 0.0, %v1409
      %v1411 = vpop.f32.mrb[0].mxu0
      %1412 = vmatprep.mubr.f32.mxu0 0.0
      %1413 = vmatmul.mubr.f32.gmra.mrb[0].mxu0 %v956
      %v1414 = vpop.f32.mrb[0].mxu0
      %v1415 = vadd.f32 0.0, %v1414
      %v1416 = vpop.f32.mrb[0].mxu0
      %1417 = vmatprep.mubr.f32.mxu0 0.0
      %1418 = vmatmul.mubr.f32.gmra.mrb[0].mxu0 %v959
      %v1419 = vpop.f32.mrb[0].mxu0
      %v1420 = vadd.f32 0.0, %v1419
      %v1421 = vpop.f32.mrb[0].mxu0
      %1422 = vmatprep.mubr.f32.mxu0 0.0
      %1423 = vmatmul.mubr.f32.gmra.mrb[0].mxu0 %v962
      %v1424 = vpop.f32.mrb[0].mxu0
      %v1425 = vadd.f32 0.0, %v1424
      %v1426 = vpop.f32.mrb[0].mxu0
      %1427 = vmatprep.mubr.f32.mxu0 0.0
      %1428 = vmatmul.mubr.f32.gmra.mrb[0].mxu0 %v965
      %v1429 = vpop.f32.mrb[0].mxu0
      %v1430 = vadd.f32 0.0, %v1429
      %v1431 = vpop.f32.mrb[0].mxu0
      %1432 = vmatprep.mubr.f32.mxu0 0.0
      %1433 = vmatmul.mubr.f32.gmra.mrb[0].mxu0 %v968
      %v1434 = vpop.f32.mrb[0].mxu0
      %v1435 = vadd.f32 0.0, %v1434
      %v1436 = vpop.f32.mrb[0].mxu0
      %1437 = vmatprep.mubr.f32.mxu0 0.0
      %1438 = vmatmul.mubr.f32.gmra.mrb[0].mxu0 %v971
      %v1439 = vpop.f32.mrb[0].mxu0
      %v1440 = vadd.f32 0.0, %v1439
      %v1441 = vpop.f32.mrb[0].mxu0
      %1442 = vmatprep.mubr.f32.mxu0 0.0
      %1443 = vmatmul.mubr.f32.gmra.mrb[0].mxu0 %v974
      %v1444 = vpop.f32.mrb[0].mxu0
      %v1445 = vadd.f32 0.0, %v1444
      %v1446 = vpop.f32.mrb[0].mxu0
      %1447 = vmatprep.mubr.f32.mxu0 0.0
      %1448 = vmatmul.mubr.f32.gmra.mrb[0].mxu0 %v977
      %v1449 = vpop.f32.mrb[0].mxu0
      %v1450 = vadd.f32 0.0, %v1449
      %v1451 = vpop.f32.mrb[0].mxu0
      %1452 = vmatprep.mubr.f32.mxu0 0.0
      %1453 = vmatmul.mubr.f32.gmra.mrb[0].mxu0 %v980
      %v1454 = vpop.f32.mrb[0].mxu0
      %v1455 = vadd.f32 0.0, %v1454
      %v1456 = vpop.f32.mrb[0].mxu0
      %1457 = vmatprep.mubr.f32.mxu0 0.0
      %1458 = vmatmul.mubr.f32.gmra.mrb[0].mxu0 %v983
      %v1459 = vpop.f32.mrb[0].mxu0
      %v1460 = vadd.f32 0.0, %v1459
      %v1461 = vpop.f32.mrb[0].mxu0
      %1462 = vmatprep.mubr.f32.mxu0 0.0
      %1463 = vmatmul.mubr.f32.gmra.mrb[0].mxu0 %v1320
      %v1464 = vpop.f32.mrb[0].mxu0
      %v1465 = vadd.f32 0.0, %v1464
      %v1466 = vpop.f32.mrb[0].mxu0
      %1467 = vmatprep.mubr.f32.mxu0 0.0
      %1468 = vmatmul.mubr.f32.gmra.mrb[0].mxu0 %v1323
      %v1469 = vpop.f32.mrb[0].mxu0
      %v1470 = vadd.f32 0.0, %v1469
      %v1471 = vpop.f32.mrb[0].mxu0
      %1472 = vdwg.mxu0
      %v1473 = vadd.f32 %v1210, %v1395
      %v1474 = vadd.f32 %v1215, %v1400
      %v1475 = vadd.f32 %v1220, %v1405
      %v1476 = vadd.f32 %v1225, %v1410
      %v1477 = vadd.f32 %v1230, %v1415
      %v1478 = vadd.f32 %v1235, %v1420
      %v1479 = vadd.f32 %v1240, %v1425
      %v1480 = vadd.f32 %v1245, %v1430
      %v1481 = vadd.f32 %v1250, %v1435
      %v1482 = vadd.f32 %v1255, %v1440
      %v1483 = vadd.f32 %v1260, %v1445
      %v1484 = vadd.f32 %v1265, %v1450
      %v1485 = vadd.f32 %v1270, %v1455
      %v1486 = vadd.f32 %v1275, %v1460
      %v1487 = vadd.f32 %v1280, %v1465
      %v1488 = vadd.f32 %v1285, %v1470
      %1489 = vst.msk [vmem:[%s458] sm:$0xff] %vm869, %v1473
      %1490 = vst.msk [vmem:[%s458 + $0x8] sm:$0xff] %vm869, %v1474
      %1491 = vst.msk [vmem:[%s458 + $0x10] sm:$0xff] %vm869, %v1475
      %1492 = vst.msk [vmem:[%s458 + $0x18] sm:$0xff] %vm869, %v1476
      %1493 = vst.msk [vmem:[%s458 + $0x20] sm:$0xff] %vm869, %v1477
      %1494 = vst.msk [vmem:[%s458 + $0x28] sm:$0xff] %vm869, %v1478
      %1495 = vst.msk [vmem:[%s458 + $0x30] sm:$0xff] %vm869, %v1479
      %1496 = vst.msk [vmem:[%s458 + $0x38] sm:$0xff] %vm869, %v1480
      %1497 = vst.msk [vmem:[%s458 + $0x40] sm:$0xff] %vm869, %v1481
      %1498 = vst.msk [vmem:[%s458 + $0x48] sm:$0xff] %vm869, %v1482
      %1499 = vst.msk [vmem:[%s458 + $0x50] sm:$0xff] %vm869, %v1483
      %1500 = vst.msk [vmem:[%s458 + $0x58] sm:$0xff] %vm869, %v1484
      %1501 = vst.msk [vmem:[%s458 + $0x60] sm:$0xff] %vm869, %v1485
      %1502 = vst.msk [vmem:[%s458 + $0x68] sm:$0xff] %vm869, %v1486
      %1503 = vst.msk [vmem:[%s458 + $0x70] sm:$0xff] %vm869, %v1487
      %1504 = vst.msk [vmem:[%s458 + $0x78] sm:$0xff] %vm869, %v1488
      %v1505 = vsel %vm869, %v1473, 0.0
      %v1506 = vsel %vm869, %v1474, 0.0
      %v1507 = vadd.f32 %v1505, %v1506
      %v1508 = vsel %vm869, %v1475, 0.0
      %v1509 = vadd.f32 %v1507, %v1508
      %v1510 = vsel %vm869, %v1476, 0.0
      %v1511 = vadd.f32 %v1509, %v1510
      %v1512 = vsel %vm869, %v1477, 0.0
      %v1513 = vadd.f32 %v1511, %v1512
      %v1514 = vsel %vm869, %v1478, 0.0
      %v1515 = vadd.f32 %v1513, %v1514
      %v1516 = vsel %vm869, %v1479, 0.0
      %v1517 = vadd.f32 %v1515, %v1516
      %v1518 = vsel %vm869, %v1480, 0.0
      %v1519 = vadd.f32 %v1517, %v1518
      %v1520 = vsel %vm869, %v1481, 0.0
      %v1521 = vadd.f32 %v1519, %v1520
      %v1522 = vsel %vm869, %v1482, 0.0
      %v1523 = vadd.f32 %v1521, %v1522
      %v1524 = vsel %vm869, %v1483, 0.0
      %v1525 = vadd.f32 %v1523, %v1524
      %v1526 = vsel %vm869, %v1484, 0.0
      %v1527 = vadd.f32 %v1525, %v1526
      %v1528 = vsel %vm869, %v1485, 0.0
      %v1529 = vadd.f32 %v1527, %v1528
      %v1530 = vsel %vm869, %v1486, 0.0
      %v1531 = vadd.f32 %v1529, %v1530
      %v1532 = vsel %vm869, %v1487, 0.0
      %v1533 = vadd.f32 %v1531, %v1532
      %v1534 = vsel %vm869, %v1488, 0.0
      %v1535 = vadd.f32 %v1533, %v1534
      %v1536 = vrot.slane %v1535, 4
      %v1537 = vadd.f32 %v1535, %v1536
      %v1538 = vrot.slane %v1537, 2
      %v1539 = vadd.f32 %v1537, %v1538
      %v1540 = vrot.slane %v1539, 1
      %v1541 = vadd.f32 %v1539, %v1540
      %v1542 = vmul.f32 %v1473, %v1473
      %v1543 = vmul.f32 %v1474, %v1474
      %v1544 = vmul.f32 %v1475, %v1475
      %v1545 = vmul.f32 %v1476, %v1476
      %v1546 = vmul.f32 %v1477, %v1477
      %v1547 = vmul.f32 %v1478, %v1478
      %v1548 = vmul.f32 %v1479, %v1479
      %v1549 = vmul.f32 %v1480, %v1480
      %v1550 = vmul.f32 %v1481, %v1481
      %v1551 = vmul.f32 %v1482, %v1482
      %v1552 = vmul.f32 %v1483, %v1483
      %v1553 = vmul.f32 %v1484, %v1484
      %v1554 = vmul.f32 %v1485, %v1485
      %v1555 = vmul.f32 %v1486, %v1486
      %v1556 = vmul.f32 %v1487, %v1487
      %v1557 = vmul.f32 %v1488, %v1488
      %v1558 = vsel %vm869, %v1542, 0.0
      %v1559 = vsel %vm869, %v1543, 0.0
      %v1560 = vadd.f32 %v1558, %v1559
      %v1561 = vsel %vm869, %v1544, 0.0
      %v1562 = vadd.f32 %v1560, %v1561
      %v1563 = vsel %vm869, %v1545, 0.0
      %v1564 = vadd.f32 %v1562, %v1563
      %v1565 = vsel %vm869, %v1546, 0.0
      %v1566 = vadd.f32 %v1564, %v1565
      %v1567 = vsel %vm869, %v1547, 0.0
      %v1568 = vadd.f32 %v1566, %v1567
      %v1569 = vsel %vm869, %v1548, 0.0
      %v1570 = vadd.f32 %v1568, %v1569
      %v1571 = vsel %vm869, %v1549, 0.0
      %v1572 = vadd.f32 %v1570, %v1571
      %v1573 = vsel %vm869, %v1550, 0.0
      %v1574 = vadd.f32 %v1572, %v1573
      %v1575 = vsel %vm869, %v1551, 0.0
      %v1576 = vadd.f32 %v1574, %v1575
      %v1577 = vsel %vm869, %v1552, 0.0
      %v1578 = vadd.f32 %v1576, %v1577
      %v1579 = vsel %vm869, %v1553, 0.0
      %v1580 = vadd.f32 %v1578, %v1579
      %v1581 = vsel %vm869, %v1554, 0.0
      %v1582 = vadd.f32 %v1580, %v1581
      %v1583 = vsel %vm869, %v1555, 0.0
      %v1584 = vadd.f32 %v1582, %v1583
      %v1585 = vsel %vm869, %v1556, 0.0
      %v1586 = vadd.f32 %v1584, %v1585
      %v1587 = vsel %vm869, %v1557, 0.0
      %v1588 = vadd.f32 %v1586, %v1587
      %v1589 = vrot.slane %v1588, 4
      %v1590 = vadd.f32 %v1588, %v1589
      %v1591 = vrot.slane %v1590, 2
      %v1592 = vadd.f32 %v1590, %v1591
      %v1593 = vrot.slane %v1592, 1
      %v1594 = vadd.f32 %v1592, %v1593
      %v1595 = vsel %vm594, %v1541, %v1594
      %vm1596 = vcmask 25600
      %1597 = vst.msk [vmem:[%s467] sm:$0x3] %vm1596, %v1595
      %s1598 = smul.u32 8, %s24
      %p1599 = scmp.lt.s32.totalorder %s23, 1
      %s1600 = scalar_select %p1599, %s23, 1
      %p1601 = scmp.lt.s32.totalorder %s1598, 15
      %s1602 = scalar_select %p1601, %s1598, 15
      %s1603 = smul.addr %s1602, 2
      %s1604 = smul.addr %s1600, 32
      %s1605 = sadd.s32 %s1603, %s1604
      %s1606 = smul.addr %s1605, 8
      %s1607 = scalar_lea.vmem %s6, %s1606
      %p1608 = scmp.lt.s32.totalorder %s23, 1
      %s1609 = scalar_select %p1608, %s23, 1
      %p1610 = scmp.lt.s32.totalorder %s24, 1
      %s1611 = scalar_select %p1610, %s24, 1
      %s1612 = smul.addr %s1609, 2
      %s1613 = sadd.s32 %s1611, %s1612
      %s1614 = smul.addr %s1613, 2
      %s1615 = scalar_lea.vmem %s7, %s1614
      // Predicated region
      $region45: #{bottleneck_forward_nhwc.5} parent=43 // pred_check
        %p1616 = pneg %p214
      $region46: #{bottleneck_forward_nhwc.5} parent=43 // pred_check_branch
        %1618 = sbr.rel (%p1616) target = $region48
      $region47: #{bottleneck_forward_nhwc.5} parent=43 // pred_region
        %s1619 = smul.u32 8, %s24
      $region48: #{bottleneck_forward_nhwc.5} parent=43 // pred_fallthru
        _
      // Predicated region
      $region49: #{bottleneck_forward_nhwc.5} parent=43 // pred_check
        %p1620 = pneg %p242
      $region50: #{bottleneck_forward_nhwc.5} parent=43 // pred_check_branch
        %1622 = sbr.rel (%p1620) target = $region52
      $region51: #{bottleneck_forward_nhwc.5} parent=43 // pred_region
        _
      $region52: #{bottleneck_forward_nhwc.5} parent=43 // pred_fallthru
        _
    $region44: #{bottleneck_forward_nhwc.5} parent=5 // pred_fallthru
      _
    %p1623 = scmp.le.s32.totalorder 2, %s14
    // Predicated region
    $region53: #{bottleneck_forward_nhwc.5} parent=5 // pred_check
      %p1624 = pneg %p1623
    $region54: #{bottleneck_forward_nhwc.5} parent=5 // pred_check_branch
      %1626 = sbr.rel (%p1624) target = $region56
    $region55: #{bottleneck_forward_nhwc.5} parent=5 // pred_region
      %s1627 = ssub.s32 %s14, 2
      // Predicated region
      $region57: #{bottleneck_forward_nhwc.5} parent=55 // pred_check
        %p1628 = pneg %p220
      $region58: #{bottleneck_forward_nhwc.5} parent=55 // pred_check_branch
        %1630 = sbr.rel (%p1628) target = $region60
      $region59: #{bottleneck_forward_nhwc.5} parent=55 // pred_region
        %s1631 = smul.u32 8, %s26
        %p1632 = scmp.lt.s32.totalorder %s25, 1
        %s1633 = scalar_select %p1632, %s25, 1
        %p1634 = scmp.lt.s32.totalorder %s1631, 15
        %s1635 = scalar_select %p1634, %s1631, 15
        %s1636 = smul.addr %s1635, 2
        %s1637 = smul.addr %s1633, 32
        %s1638 = sadd.s32 %s1636, %s1637
        %s1639 = smul.addr %s1638, 8
        %s1640 = scalar_lea.vmem %s6, %s1639
      $region60: #{bottleneck_forward_nhwc.5} parent=55 // pred_fallthru
        _
      // Predicated region
      $region61: #{bottleneck_forward_nhwc.5} parent=55 // pred_check
        %p1641 = pneg %p248
      $region62: #{bottleneck_forward_nhwc.5} parent=55 // pred_check_branch
        %1643 = sbr.rel (%p1641) target = $region64
      $region63: #{bottleneck_forward_nhwc.5} parent=55 // pred_region
        %p1644 = scmp.lt.s32.totalorder %s25, 1
        %s1645 = scalar_select %p1644, %s25, 1
        %p1646 = scmp.lt.s32.totalorder %s26, 1
        %s1647 = scalar_select %p1646, %s26, 1
        %s1648 = smul.addr %s1645, 2
        %s1649 = sadd.s32 %s1647, %s1648
        %s1650 = smul.addr %s1649, 2
        %s1651 = scalar_lea.vmem %s7, %s1650
      $region64: #{bottleneck_forward_nhwc.5} parent=55 // pred_fallthru
        _
    $region56: #{bottleneck_forward_nhwc.5} parent=5 // pred_fallthru
      _
  $region6: #{bottleneck_forward_nhwc.5} parent=0 // loop_footer
    %s18 = sadd.s32 1, %s14
  $region7: #{bottleneck_forward_nhwc.5} parent=0 // loop_footer_branch
    %13 = sbr.rel target = $region3
  $region8: #{bottleneck_forward_nhwc.5} parent=0 // loop_exit
    _

</llo_original>
